<compile_context>
chip_gen: v6e
topology: v6e:2x2x1
jax: 0.10.0
libtpu: 0.0.40
codegen_flags: <defaults>
</compile_context>

<pallas_src>
import functools

import jax
import jax.numpy as jnp
from jax import lax
from jax.experimental import pallas as pl
from jax.experimental.pallas import tpu as pltpu


# ----------------------------------------------------------------------------
# Generation-aware VMEM budget (v5e/v6e: 128 MiB physical, v7x: 64 MiB)
# ----------------------------------------------------------------------------
def _vmem_limit_bytes():
    try:
        phys = int(pltpu.get_tpu_info().vmem_capacity_bytes)
    except Exception:
        phys = 64 * 1024 * 1024          # conservative: v7x physical VMEM
    return max(min(phys - 8 * 1024 * 1024, 100 * 1024 * 1024), 32 * 1024 * 1024)


_VMEM_LIMIT = _vmem_limit_bytes()


# ----------------------------------------------------------------------------
# Fused kernel: (conv3x3 + BN(affine) + ReLU) x 2 for one (batch, row-tile, Cout-tile)
# ----------------------------------------------------------------------------
def fused_conv_block_kernel(xprev_ref, xcur_ref, xnext_ref,
                            w1_ref, s1_ref, b1_ref,
                            w2_ref, s2_ref, b2_ref,
                            o_ref, y1_scr):
    # xprev/xnext: (1, 1, 2, W, Cin)   2-row halo above / below the tile (bf16)
    # xcur       : (1, hp, 2, W, Cin)  the tile itself, as row pairs (bf16)
    # w1         : (9, Cin, Cmid) bf16 per-tap weights, tap = dy*3 + dx
    # s1, b1     : (1, Cmid) f32       folded BatchNorm scale / bias
    # w2         : (9, Cmid, tCo) bf16 ; s2/b2: (1, tCo) f32
    # o_ref      : (1, 1, tH, W, tCo)
    # y1_scr     : (tH+2, W+2, Cmid) bf16 VMEM scratch, persists across Cout blocks
    r = pl.program_id(1)
    nr = pl.num_programs(1)
    co = pl.program_id(2)

    hp = xcur_ref.shape[1]
    W, Cin = xcur_ref.shape[3], xcur_ref.shape[4]
    tH = hp * 2                 # output rows of this tile
    H1 = tH + 2                 # conv1 rows needed (1-row halo each side for conv2)
    Cmid = w1_ref.shape[2]
    tCo = w2_ref.shape[2]

    # ---- layer 1: runs once per (batch, row-tile); reused across Cout blocks ----
    @pl.when(co == 0)
    def _conv1():
        x_top = xprev_ref[...].reshape(2, W, Cin)
        x_cur = xcur_ref[...].reshape(tH, W, Cin)
        x_bot = xnext_ref[...].reshape(2, W, Cin)
        zrows = jnp.zeros_like(x_top)
        # image top / bottom border -> the halo rows are SAME-padding zeros
        # (tiny: 2 rows; cheap even on v5e's f32-only VPU)
        x_top = jnp.where(r > 0, x_top, zrows)
        x_bot = jnp.where(r < nr - 1, x_bot, zrows)
        rows = jnp.concatenate([x_top, x_cur, x_bot], axis=0)      # (tH+4, W, Cin)
        zcol = jnp.zeros((tH + 4, 1, Cin), rows.dtype)
        xpad = jnp.concatenate([zcol, rows, zcol], axis=1)         # (tH+4, W+2, Cin)

        # 9 accumulated per-tap matmuls (no 9x im2col copy of the strip)
        acc1 = jnp.zeros((H1 * W, Cmid), jnp.float32)
        for tap in range(9):
            dy, dx = tap // 3, tap % 3
            slab = xpad[dy:dy + H1, dx:dx + W, :].reshape(H1 * W, Cin)
            acc1 = acc1 + jnp.dot(slab, w1_ref[tap],
                                  preferred_element_type=jnp.float32)
        y1 = jnp.maximum(acc1 * s1_ref[...] + b1_ref[...], 0.0)    # BN + ReLU (f32)
        y1 = y1.reshape(H1, W, Cmid)

        # conv1 halo rows that lie outside the image are SAME-padding for conv2
        ridx = lax.broadcasted_iota(jnp.int32, (H1, 1, 1), 0)
        valid = jnp.logical_and(jnp.logical_or(ridx > 0, r > 0),
                                jnp.logical_or(ridx < H1 - 1, r < nr - 1))
        y1 = jnp.where(valid, y1, 0.0).astype(jnp.bfloat16)

        # one aligned full-strip store (kept aligned for lowering robustness;
        # the layer-1 activation never touches HBM)
        zc = jnp.zeros((H1, 1, Cmid), jnp.bfloat16)
        y1_scr[...] = jnp.concatenate([zc, y1, zc], axis=1)        # (H1, W+2, Cmid)

    # ---- layer 2: 9 accumulated per-tap matmuls on the resident scratch --------
    acc2 = jnp.zeros((tH * W, tCo), jnp.float32)
    for tap in range(9):
        dy, dx = tap // 3, tap % 3
        slab = y1_scr[dy:dy + tH, dx:dx + W, :].reshape(tH * W, Cmid)
        acc2 = acc2 + jnp.dot(slab, w2_ref[tap],
                              preferred_element_type=jnp.float32)
    y2 = jnp.maximum(acc2 * s2_ref[...] + b2_ref[...], 0.0)        # BN + ReLU (f32)
    o_ref[...] = y2.reshape(1, 1, tH, W, tCo).astype(o_ref.dtype)


# ----------------------------------------------------------------------------
# NHWC wrapper (native layout): one pallas_call for the whole conv_block
# ----------------------------------------------------------------------------
@functools.partial(jax.jit,
                   static_argnames=("tile_rows", "cout_tile", "out_dtype"))
def conv_block_forward_nhwc(x_nhwc, w1, s1, b1, w2, s2, b2, *,
                            tile_rows=16, cout_tile=512,
                            out_dtype=jnp.bfloat16):
    N, H, W, Cin = x_nhwc.shape
    Cmid = w1.shape[2]
    Cout = w2.shape[2]
    assert H % 2 == 0, "H must be even"

    # largest even divisor of H that is <= tile_rows
    tH = max(t for t in range(2, min(tile_rows, H) + 1, 2) if H % t == 0)
    hp = tH // 2
    RT = H // tH

    tCo = Cout if Cout <= cout_tile else cout_tile
    assert Cout % tCo == 0, "Cout must be divisible by the Cout tile"
    CT = Cout // tCo

    # bf16 activations (halves DMA bytes); row-pair view so the 2-row halos are
    # plain Blocked blocks (no jnp.pad, no overlapping-block trickery).
    x = x_nhwc.astype(jnp.bfloat16)
    xp = x.reshape(N, H // 2, 2, W, Cin)

    # Corrected cost estimate: halo re-fetch, conv1 halo recompute, real out dtype.
    out_bytes = jnp.dtype(out_dtype).itemsize
    flops = int(2 * N * H * W * 9
                * (Cin * Cmid * (tH + 2) / tH + Cmid * Cout))
    bytes_accessed = int(N * H * W * Cin * 2 * (tH + 4) / tH
                         + (w1.size + w2.size) * 2
                         + (s1.size + b1.size + s2.size + b2.size) * 4
                         + N * H * W * Cout * out_bytes)

    out = pl.pallas_call(
        fused_conv_block_kernel,
        out_shape=jax.ShapeDtypeStruct((N, RT, tH, W, Cout), out_dtype),
        grid_spec=pltpu.PrefetchScalarGridSpec(
            num_scalar_prefetch=0,
            grid=(N, RT, CT),
            in_specs=[
                # 2-row halo above / the tile itself / 2-row halo below
                pl.BlockSpec((1, 1, 2, W, Cin),
                             lambda n, r, c: (n, jnp.maximum(r * hp - 1, 0),
                                              0, 0, 0)),
                pl.BlockSpec((1, hp, 2, W, Cin),
                             lambda n, r, c: (n, r, 0, 0, 0)),
                pl.BlockSpec((1, 1, 2, W, Cin),
                             lambda n, r, c: (n, jnp.minimum((r + 1) * hp,
                                                             H // 2 - 1),
                                              0, 0, 0)),
                # per-tap weights + folded-BN affine; constant index -> resident
                pl.BlockSpec((9, Cin, Cmid), lambda n, r, c: (0, 0, 0)),
                pl.BlockSpec((1, Cmid), lambda n, r, c: (0, 0)),
                pl.BlockSpec((1, Cmid), lambda n, r, c: (0, 0)),
                # layer-2 weights tiled over the Cout grid axis
                pl.BlockSpec((9, Cmid, tCo), lambda n, r, c: (0, 0, c)),
                pl.BlockSpec((1, tCo), lambda n, r, c: (0, c)),
                pl.BlockSpec((1, tCo), lambda n, r, c: (0, c)),
            ],
            out_specs=pl.BlockSpec((1, 1, tH, W, tCo),
                                   lambda n, r, c: (n, r, 0, 0, c)),
            scratch_shapes=[pltpu.VMEM((tH + 2, W + 2, Cmid), jnp.bfloat16)],
        ),
        compiler_params=pltpu.CompilerParams(
            # Cout axis is innermost + arbitrary: the conv1 scratch is reused
            # sequentially across Cout blocks on the same core.
            dimension_semantics=("parallel", "parallel", "arbitrary"),
            vmem_limit_bytes=_VMEM_LIMIT,
        ),
        cost_estimate=pl.CostEstimate(flops=flops, transcendentals=0,
                                      bytes_accessed=bytes_accessed),
    )(xp, xp, xp, w1, s1, b1, w2, s2, b2)

    return out.reshape(N, H, W, Cout)


# ----------------------------------------------------------------------------
# NCHW convenience wrapper: layout conversion only at the model boundary.
# Inside a full U-Net, keep activations NHWC and call the NHWC entry directly.
# ----------------------------------------------------------------------------
def conv_block_forward_nchw(x_nchw, w1, s1, b1, w2, s2, b2, **kw):
    x = jnp.transpose(x_nchw, (0, 2, 3, 1))
    y = conv_block_forward_nhwc(x, w1, s1, b1, w2, s2, b2, **kw)
    return jnp.transpose(y, (0, 3, 1, 2))


# ----------------------------------------------------------------------------
# Parameter construction (deterministic) + BN folding into per-tap weights
# ----------------------------------------------------------------------------
def make_layer_params(key, in_ch, out_ch):
    k = jax.random.split(key, 6)
    w_oihw = 0.1 * jax.random.normal(k[0], (out_ch, in_ch, 3, 3), jnp.float32)
    b_conv = 0.1 * jax.random.normal(k[1], (out_ch,), jnp.float32)
    gamma = 1.0 + 0.1 * jax.random.normal(k[2], (out_ch,), jnp.float32)
    beta = 0.1 * jax.random.normal(k[3], (out_ch,), jnp.float32)
    run_mean = 0.1 * jax.random.normal(k[4], (out_ch,), jnp.float32)
    run_var = 0.5 + jax.random.uniform(k[5], (out_ch,), jnp.float32)
    return dict(w=w_oihw, b=b_conv, gamma=gamma, beta=beta,
                mean=run_mean, var=run_var)


def fold_bn(p, eps=1e-5):
    # y = gamma * (conv(x) + b - mean) / sqrt(var+eps) + beta = conv(x)*scale + bias
    scale = p["gamma"] / jnp.sqrt(p["var"] + eps)
    bias = (p["b"] - p["mean"]) * scale + p["beta"]
    w_hwio = jnp.transpose(p["w"], (2, 3, 1, 0))                 # OIHW -> HWIO
    cin, cout = w_hwio.shape[2], w_hwio.shape[3]
    w_taps = w_hwio.reshape(9, cin, cout).astype(jnp.bfloat16)   # tap = dy*3 + dx
    return (w_taps,
            scale.reshape(1, cout).astype(jnp.float32),
            bias.reshape(1, cout).astype(jnp.float32))


# ----------------------------------------------------------------------------
# Pure-JAX reference (eval-mode BN) for the sanity check
# ----------------------------------------------------------------------------
def ref_layer(x_nhwc, p, eps=1e-5):
    w_hwio = jnp.transpose(p["w"], (2, 3, 1, 0))
    y = lax.conv_general_dilated(
        x_nhwc, w_hwio, (1, 1), "SAME",
        dimension_numbers=("NHWC", "HWIO", "NHWC")) + p["b"]
    y = (y - p["mean"]) / jnp.sqrt(p["var"] + eps) * p["gamma"] + p["beta"]
    return jnp.maximum(y, 0.0)


def ref_forward(x_nchw, p1, p2):
    x = jnp.transpose(x_nchw, (0, 2, 3, 1))
    x = ref_layer(x, p1)
    x = ref_layer(x, p2)
    return jnp.transpose(x, (0, 3, 1, 2))


if __name__ == "__main__":
    key = jax.random.PRNGKey(0)
    kx, k1, k2 = jax.random.split(key, 3)

    # conv_block of big_unet at a reduced size (the real stem is n_channels -> 256)
    N, in_ch, out_ch, H, W = 2, 4, 8, 16, 16
    x = jax.random.normal(kx, (N, in_ch, H, W), jnp.float32)     # NCHW input

    p1 = make_layer_params(k1, in_ch, out_ch)
    p2 = make_layer_params(k2, out_ch, out_ch)
    w1, s1, b1 = fold_bn(p1)
    w2, s2, b2 = fold_bn(p2)

    ref = jax.block_until_ready(ref_forward(x, p1, p2))

    # two row-tile configurations: exercises border tiles and interior tiles
    for tr in (8, 4):
        out = conv_block_forward_nchw(x, w1, s1, b1, w2, s2, b2, tile_rows=tr)
        out = jax.block_until_ready(out)
        assert out.shape == (N, out_ch, H, W)
        err = float(jnp.max(jnp.abs(out.astype(jnp.float32) - ref)))
        # bf16 MXU operands / bf16 intermediate / bf16 output vs. pure-f32 ref
        assert err < 0.15, f"mismatch vs JAX reference (tile_rows={tr}): {err}"

    print("KERNEL_OK")
</pallas_src>

<mosaic_0001>
module attributes {stable_mosaic.version = 11 : i64} {
  func.func @fused_conv_block_kernel(%arg0: i32, %arg1: i32, %arg2: i32, %arg3: memref<1x1x2x16x4xbf16, #tpu.memory_space<vmem>>, %arg4: memref<1x4x2x16x4xbf16, #tpu.memory_space<vmem>>, %arg5: memref<1x1x2x16x4xbf16, #tpu.memory_space<vmem>>, %arg6: memref<9x4x8xbf16, #tpu.memory_space<vmem>>, %arg7: memref<1x8xf32, #tpu.memory_space<vmem>>, %arg8: memref<1x8xf32, #tpu.memory_space<vmem>>, %arg9: memref<9x8x8xbf16, #tpu.memory_space<vmem>>, %arg10: memref<1x8xf32, #tpu.memory_space<vmem>>, %arg11: memref<1x8xf32, #tpu.memory_space<vmem>>, %arg12: memref<1x1x8x16x8xbf16, #tpu.memory_space<vmem>>, %arg13: memref<10x18x8xbf16, #tpu.memory_space<vmem>>) attributes {dimension_semantics = [#tpu.dimension_semantics<parallel>, #tpu.dimension_semantics<parallel>, #tpu.dimension_semantics<arbitrary>], iteration_bounds = array<i64: 2, 2, 1>, scalar_prefetch = 0 : i64, scratch_operands = 1 : i64, tpu.core_type = #tpu.core_type<tc>, window_params = [{transform_indices = @transform_0, window_bounds = array<i64: 1, 1, 2, 16, 4>}, {transform_indices = @transform_1, window_bounds = array<i64: 1, 4, 2, 16, 4>}, {transform_indices = @transform_2, window_bounds = array<i64: 1, 1, 2, 16, 4>}, {pipeline_mode = #tpu.pipeline_mode<synchronous>, transform_indices = @transform_3, window_bounds = array<i64: 9, 4, 8>}, {pipeline_mode = #tpu.pipeline_mode<synchronous>, transform_indices = @transform_4, window_bounds = array<i64: 1, 8>}, {pipeline_mode = #tpu.pipeline_mode<synchronous>, transform_indices = @transform_5, window_bounds = array<i64: 1, 8>}, {transform_indices = @transform_6, window_bounds = array<i64: 9, 8, 8>}, {transform_indices = @transform_7, window_bounds = array<i64: 1, 8>}, {transform_indices = @transform_8, window_bounds = array<i64: 1, 8>}, {transform_indices = @transform_9, window_bounds = array<i64: 1, 1, 8, 16, 8>}]} {
    %c0_i32 = arith.constant 0 : i32
    %0 = arith.cmpi eq, %arg2, %c0_i32 : i32
    %1 = arith.extui %0 : i1 to i32
    %c0_i32_0 = arith.constant 0 : i32
    %2 = arith.cmpi ne, %1, %c0_i32_0 : i32
    scf.if %2 {
      %c0_65 = arith.constant 0 : index
      %c0_66 = arith.constant 0 : index
      %c0_67 = arith.constant 0 : index
      %c0_68 = arith.constant 0 : index
      %c0_69 = arith.constant 0 : index
      %69 = vector.load %arg3[%c0_65, %c0_66, %c0_67, %c0_68, %c0_69] : memref<1x1x2x16x4xbf16, #tpu.memory_space<vmem>>, vector<1x1x2x16x4xbf16>
      %70 = vector.shape_cast %69 : vector<1x1x2x16x4xbf16> to vector<2x16x4xbf16>
      %c0_70 = arith.constant 0 : index
      %c0_71 = arith.constant 0 : index
      %c0_72 = arith.constant 0 : index
      %c0_73 = arith.constant 0 : index
      %c0_74 = arith.constant 0 : index
      %71 = vector.load %arg4[%c0_70, %c0_71, %c0_72, %c0_73, %c0_74] : memref<1x4x2x16x4xbf16, #tpu.memory_space<vmem>>, vector<1x4x2x16x4xbf16>
      %72 = vector.shape_cast %71 : vector<1x4x2x16x4xbf16> to vector<8x16x4xbf16>
      %c0_75 = arith.constant 0 : index
      %c0_76 = arith.constant 0 : index
      %c0_77 = arith.constant 0 : index
      %c0_78 = arith.constant 0 : index
      %c0_79 = arith.constant 0 : index
      %73 = vector.load %arg5[%c0_75, %c0_76, %c0_77, %c0_78, %c0_79] : memref<1x1x2x16x4xbf16, #tpu.memory_space<vmem>>, vector<1x1x2x16x4xbf16>
      %74 = vector.shape_cast %73 : vector<1x1x2x16x4xbf16> to vector<2x16x4xbf16>
      %cst_80 = arith.constant 0.000000e+00 : bf16
      %75 = vector.broadcast %cst_80 : bf16 to vector<2x16x4xbf16>
      %c0_i32_81 = arith.constant 0 : i32
      %76 = arith.cmpi sgt, %arg1, %c0_i32_81 : i32
      %77 = arith.select %76, %70, %75 : vector<2x16x4xbf16>
      %c1_i32 = arith.constant 1 : i32
      %78 = arith.cmpi slt, %arg1, %c1_i32 : i32
      %79 = arith.select %78, %74, %75 : vector<2x16x4xbf16>
      %80 = tpu.concatenate %77, %72, %79 in 0 : vector<2x16x4xbf16>, vector<8x16x4xbf16>, vector<2x16x4xbf16> -> vector<12x16x4xbf16>
      %cst_82 = arith.constant 0.000000e+00 : bf16
      %81 = vector.broadcast %cst_82 : bf16 to vector<12x1x4xbf16>
      %82 = tpu.concatenate %81, %80, %81 in 1 : vector<12x1x4xbf16>, vector<12x16x4xbf16>, vector<12x1x4xbf16> -> vector<12x18x4xbf16>
      %cst_83 = arith.constant 0.000000e+00 : f32
      %83 = vector.broadcast %cst_83 : f32 to vector<160x8xf32>
      %84 = vector.extract_strided_slice %82 {offsets = [0, 0, 0], sizes = [10, 16, 4], strides = [1, 1, 1]} : vector<12x18x4xbf16> to vector<10x16x4xbf16>
      %85 = vector.shape_cast %84 : vector<10x16x4xbf16> to vector<160x4xbf16>
      %c0_84 = arith.constant 0 : index
      %c0_85 = arith.constant 0 : index
      %c0_86 = arith.constant 0 : index
      %86 = vector.load %arg6[%c0_84, %c0_85, %c0_86] : memref<9x4x8xbf16, #tpu.memory_space<vmem>>, vector<1x4x8xbf16>
      %87 = vector.shape_cast %86 : vector<1x4x8xbf16> to vector<4x8xbf16>
      %cst_87 = arith.constant dense<0.000000e+00> : vector<160x8xf32>
      %88 = tpu.matmul %85, %87, %cst_87 {dimension_numbers = #tpu.dot_dimension_numbers<[1], [0], [0], [1], [0, 0, 1, 1], [], []>} : vector<160x4xbf16>, vector<4x8xbf16>, vector<160x8xf32> -> vector<160x8xf32>
      %89 = arith.addf %83, %88 : vector<160x8xf32>
      %90 = vector.extract_strided_slice %82 {offsets = [0, 1, 0], sizes = [10, 16, 4], strides = [1, 1, 1]} : vector<12x18x4xbf16> to vector<10x16x4xbf16>
      %91 = vector.shape_cast %90 : vector<10x16x4xbf16> to vector<160x4xbf16>
      %c1_88 = arith.constant 1 : index
      %c0_89 = arith.constant 0 : index
      %c0_90 = arith.constant 0 : index
      %92 = vector.load %arg6[%c1_88, %c0_89, %c0_90] : memref<9x4x8xbf16, #tpu.memory_space<vmem>>, vector<1x4x8xbf16>
      %93 = vector.shape_cast %92 : vector<1x4x8xbf16> to vector<4x8xbf16>
      %cst_91 = arith.constant dense<0.000000e+00> : vector<160x8xf32>
      %94 = tpu.matmul %91, %93, %cst_91 {dimension_numbers = #tpu.dot_dimension_numbers<[1], [0], [0], [1], [0, 0, 1, 1], [], []>} : vector<160x4xbf16>, vector<4x8xbf16>, vector<160x8xf32> -> vector<160x8xf32>
      %95 = arith.addf %89, %94 : vector<160x8xf32>
      %96 = vector.extract_strided_slice %82 {offsets = [0, 2, 0], sizes = [10, 16, 4], strides = [1, 1, 1]} : vector<12x18x4xbf16> to vector<10x16x4xbf16>
      %97 = vector.shape_cast %96 : vector<10x16x4xbf16> to vector<160x4xbf16>
      %c2_92 = arith.constant 2 : index
      %c0_93 = arith.constant 0 : index
      %c0_94 = arith.constant 0 : index
      %98 = vector.load %arg6[%c2_92, %c0_93, %c0_94] : memref<9x4x8xbf16, #tpu.memory_space<vmem>>, vector<1x4x8xbf16>
      %99 = vector.shape_cast %98 : vector<1x4x8xbf16> to vector<4x8xbf16>
      %cst_95 = arith.constant dense<0.000000e+00> : vector<160x8xf32>
      %100 = tpu.matmul %97, %99, %cst_95 {dimension_numbers = #tpu.dot_dimension_numbers<[1], [0], [0], [1], [0, 0, 1, 1], [], []>} : vector<160x4xbf16>, vector<4x8xbf16>, vector<160x8xf32> -> vector<160x8xf32>
      %101 = arith.addf %95, %100 : vector<160x8xf32>
      %102 = vector.extract_strided_slice %82 {offsets = [1, 0, 0], sizes = [10, 16, 4], strides = [1, 1, 1]} : vector<12x18x4xbf16> to vector<10x16x4xbf16>
      %103 = vector.shape_cast %102 : vector<10x16x4xbf16> to vector<160x4xbf16>
      %c3_96 = arith.constant 3 : index
      %c0_97 = arith.constant 0 : index
      %c0_98 = arith.constant 0 : index
      %104 = vector.load %arg6[%c3_96, %c0_97, %c0_98] : memref<9x4x8xbf16, #tpu.memory_space<vmem>>, vector<1x4x8xbf16>
      %105 = vector.shape_cast %104 : vector<1x4x8xbf16> to vector<4x8xbf16>
      %cst_99 = arith.constant dense<0.000000e+00> : vector<160x8xf32>
      %106 = tpu.matmul %103, %105, %cst_99 {dimension_numbers = #tpu.dot_dimension_numbers<[1], [0], [0], [1], [0, 0, 1, 1], [], []>} : vector<160x4xbf16>, vector<4x8xbf16>, vector<160x8xf32> -> vector<160x8xf32>
      %107 = arith.addf %101, %106 : vector<160x8xf32>
      %108 = vector.extract_strided_slice %82 {offsets = [1, 1, 0], sizes = [10, 16, 4], strides = [1, 1, 1]} : vector<12x18x4xbf16> to vector<10x16x4xbf16>
      %109 = vector.shape_cast %108 : vector<10x16x4xbf16> to vector<160x4xbf16>
      %c4_100 = arith.constant 4 : index
      %c0_101 = arith.constant 0 : index
      %c0_102 = arith.constant 0 : index
      %110 = vector.load %arg6[%c4_100, %c0_101, %c0_102] : memref<9x4x8xbf16, #tpu.memory_space<vmem>>, vector<1x4x8xbf16>
      %111 = vector.shape_cast %110 : vector<1x4x8xbf16> to vector<4x8xbf16>
      %cst_103 = arith.constant dense<0.000000e+00> : vector<160x8xf32>
      %112 = tpu.matmul %109, %111, %cst_103 {dimension_numbers = #tpu.dot_dimension_numbers<[1], [0], [0], [1], [0, 0, 1, 1], [], []>} : vector<160x4xbf16>, vector<4x8xbf16>, vector<160x8xf32> -> vector<160x8xf32>
      %113 = arith.addf %107, %112 : vector<160x8xf32>
      %114 = vector.extract_strided_slice %82 {offsets = [1, 2, 0], sizes = [10, 16, 4], strides = [1, 1, 1]} : vector<12x18x4xbf16> to vector<10x16x4xbf16>
      %115 = vector.shape_cast %114 : vector<10x16x4xbf16> to vector<160x4xbf16>
      %c5_104 = arith.constant 5 : index
      %c0_105 = arith.constant 0 : index
      %c0_106 = arith.constant 0 : index
      %116 = vector.load %arg6[%c5_104, %c0_105, %c0_106] : memref<9x4x8xbf16, #tpu.memory_space<vmem>>, vector<1x4x8xbf16>
      %117 = vector.shape_cast %116 : vector<1x4x8xbf16> to vector<4x8xbf16>
      %cst_107 = arith.constant dense<0.000000e+00> : vector<160x8xf32>
      %118 = tpu.matmul %115, %117, %cst_107 {dimension_numbers = #tpu.dot_dimension_numbers<[1], [0], [0], [1], [0, 0, 1, 1], [], []>} : vector<160x4xbf16>, vector<4x8xbf16>, vector<160x8xf32> -> vector<160x8xf32>
      %119 = arith.addf %113, %118 : vector<160x8xf32>
      %120 = vector.extract_strided_slice %82 {offsets = [2, 0, 0], sizes = [10, 16, 4], strides = [1, 1, 1]} : vector<12x18x4xbf16> to vector<10x16x4xbf16>
      %121 = vector.shape_cast %120 : vector<10x16x4xbf16> to vector<160x4xbf16>
      %c6_108 = arith.constant 6 : index
      %c0_109 = arith.constant 0 : index
      %c0_110 = arith.constant 0 : index
      %122 = vector.load %arg6[%c6_108, %c0_109, %c0_110] : memref<9x4x8xbf16, #tpu.memory_space<vmem>>, vector<1x4x8xbf16>
      %123 = vector.shape_cast %122 : vector<1x4x8xbf16> to vector<4x8xbf16>
      %cst_111 = arith.constant dense<0.000000e+00> : vector<160x8xf32>
      %124 = tpu.matmul %121, %123, %cst_111 {dimension_numbers = #tpu.dot_dimension_numbers<[1], [0], [0], [1], [0, 0, 1, 1], [], []>} : vector<160x4xbf16>, vector<4x8xbf16>, vector<160x8xf32> -> vector<160x8xf32>
      %125 = arith.addf %119, %124 : vector<160x8xf32>
      %126 = vector.extract_strided_slice %82 {offsets = [2, 1, 0], sizes = [10, 16, 4], strides = [1, 1, 1]} : vector<12x18x4xbf16> to vector<10x16x4xbf16>
      %127 = vector.shape_cast %126 : vector<10x16x4xbf16> to vector<160x4xbf16>
      %c7_112 = arith.constant 7 : index
      %c0_113 = arith.constant 0 : index
      %c0_114 = arith.constant 0 : index
      %128 = vector.load %arg6[%c7_112, %c0_113, %c0_114] : memref<9x4x8xbf16, #tpu.memory_space<vmem>>, vector<1x4x8xbf16>
      %129 = vector.shape_cast %128 : vector<1x4x8xbf16> to vector<4x8xbf16>
      %cst_115 = arith.constant dense<0.000000e+00> : vector<160x8xf32>
      %130 = tpu.matmul %127, %129, %cst_115 {dimension_numbers = #tpu.dot_dimension_numbers<[1], [0], [0], [1], [0, 0, 1, 1], [], []>} : vector<160x4xbf16>, vector<4x8xbf16>, vector<160x8xf32> -> vector<160x8xf32>
      %131 = arith.addf %125, %130 : vector<160x8xf32>
      %132 = vector.extract_strided_slice %82 {offsets = [2, 2, 0], sizes = [10, 16, 4], strides = [1, 1, 1]} : vector<12x18x4xbf16> to vector<10x16x4xbf16>
      %133 = vector.shape_cast %132 : vector<10x16x4xbf16> to vector<160x4xbf16>
      %c8_116 = arith.constant 8 : index
      %c0_117 = arith.constant 0 : index
      %c0_118 = arith.constant 0 : index
      %134 = vector.load %arg6[%c8_116, %c0_117, %c0_118] : memref<9x4x8xbf16, #tpu.memory_space<vmem>>, vector<1x4x8xbf16>
      %135 = vector.shape_cast %134 : vector<1x4x8xbf16> to vector<4x8xbf16>
      %cst_119 = arith.constant dense<0.000000e+00> : vector<160x8xf32>
      %136 = tpu.matmul %133, %135, %cst_119 {dimension_numbers = #tpu.dot_dimension_numbers<[1], [0], [0], [1], [0, 0, 1, 1], [], []>} : vector<160x4xbf16>, vector<4x8xbf16>, vector<160x8xf32> -> vector<160x8xf32>
      %137 = arith.addf %131, %136 : vector<160x8xf32>
      %c0_120 = arith.constant 0 : index
      %c0_121 = arith.constant 0 : index
      %138 = vector.load %arg7[%c0_120, %c0_121] : memref<1x8xf32, #tpu.memory_space<vmem>>, vector<1x8xf32>
      %139 = vector.broadcast %138 : vector<1x8xf32> to vector<160x8xf32>
      %140 = arith.mulf %137, %139 : vector<160x8xf32>
      %c0_122 = arith.constant 0 : index
      %c0_123 = arith.constant 0 : index
      %141 = vector.load %arg8[%c0_122, %c0_123] : memref<1x8xf32, #tpu.memory_space<vmem>>, vector<1x8xf32>
      %142 = vector.broadcast %141 : vector<1x8xf32> to vector<160x8xf32>
      %143 = arith.addf %140, %142 : vector<160x8xf32>
      %cst_124 = arith.constant 0.000000e+00 : f32
      %144 = vector.broadcast %cst_124 : f32 to vector<160x8xf32>
      %145 = arith.maximumf %143, %144 : vector<160x8xf32>
      %146 = vector.shape_cast %145 : vector<160x8xf32> to vector<10x16x8xf32>
      %147 = tpu.iota {dimensions = array<i32: 0>} : vector<10x1x1xi32>
      %c0_i32_125 = arith.constant 0 : i32
      %148 = vector.broadcast %c0_i32_125 : i32 to vector<10x1x1xi32>
      %149 = arith.cmpi sgt, %147, %148 : vector<10x1x1xi32>
      %c0_i32_126 = arith.constant 0 : i32
      %150 = arith.cmpi sgt, %arg1, %c0_i32_126 : i32
      %151 = vector.broadcast %150 : i1 to vector<10x1x1xi1>
      %152 = arith.ori %149, %151 : vector<10x1x1xi1>
      %c9_i32 = arith.constant 9 : i32
      %153 = vector.broadcast %c9_i32 : i32 to vector<10x1x1xi32>
      %154 = arith.cmpi slt, %147, %153 : vector<10x1x1xi32>
      %c1_i32_127 = arith.constant 1 : i32
      %155 = arith.cmpi slt, %arg1, %c1_i32_127 : i32
      %156 = vector.broadcast %155 : i1 to vector<10x1x1xi1>
      %157 = arith.ori %154, %156 : vector<10x1x1xi1>
      %158 = arith.andi %152, %157 : vector<10x1x1xi1>
      %cst_128 = arith.constant 0.000000e+00 : f32
      %159 = vector.shape_cast %158 : vector<10x1x1xi1> to vector<10x1x1xi1>
      %160 = vector.broadcast %159 : vector<10x1x1xi1> to vector<10x16x8xi1>
      %161 = vector.broadcast %cst_128 : f32 to vector<10x16x8xf32>
      %162 = arith.select %160, %146, %161 : vector<10x16x8xi1>, vector<10x16x8xf32>
      %163 = arith.truncf %162 : vector<10x16x8xf32> to vector<10x16x8xbf16>
      %cst_129 = arith.constant 0.000000e+00 : bf16
      %164 = vector.broadcast %cst_129 : bf16 to vector<10x1x8xbf16>
      %165 = tpu.concatenate %164, %163, %164 in 1 : vector<10x1x8xbf16>, vector<10x16x8xbf16>, vector<10x1x8xbf16> -> vector<10x18x8xbf16>
      %c0_130 = arith.constant 0 : index
      %c0_131 = arith.constant 0 : index
      %c0_132 = arith.constant 0 : index
      %166 = vector.load %arg13[%c0_130, %c0_131, %c0_132] : memref<10x18x8xbf16, #tpu.memory_space<vmem>>, vector<10x18x8xbf16>
      tpu.vector_store %arg13[%c0_130, %c0_131, %c0_132], %165 {strides = array<i32>} : memref<10x18x8xbf16, #tpu.memory_space<vmem>>, vector<10x18x8xbf16>,
    } else {
    }
    %cst = arith.constant 0.000000e+00 : f32
    %3 = vector.broadcast %cst : f32 to vector<128x8xf32>
    %c0 = arith.constant 0 : index
    %c0_1 = arith.constant 0 : index
    %c0_2 = arith.constant 0 : index
    %4 = vector.load %arg13[%c0, %c0_1, %c0_2] : memref<10x18x8xbf16, #tpu.memory_space<vmem>>, vector<8x16x8xbf16>
    %5 = vector.shape_cast %4 : vector<8x16x8xbf16> to vector<128x8xbf16>
    %c0_3 = arith.constant 0 : index
    %c0_4 = arith.constant 0 : index
    %c0_5 = arith.constant 0 : index
    %6 = vector.load %arg9[%c0_3, %c0_4, %c0_5] : memref<9x8x8xbf16, #tpu.memory_space<vmem>>, vector<1x8x8xbf16>
    %7 = vector.shape_cast %6 : vector<1x8x8xbf16> to vector<8x8xbf16>
    %cst_6 = arith.constant dense<0.000000e+00> : vector<128x8xf32>
    %8 = tpu.matmul %5, %7, %cst_6 {dimension_numbers = #tpu.dot_dimension_numbers<[1], [0], [0], [1], [0, 0, 1, 1], [], []>} : vector<128x8xbf16>, vector<8x8xbf16>, vector<128x8xf32> -> vector<128x8xf32>
    %9 = arith.addf %3, %8 : vector<128x8xf32>
    %c0_7 = arith.constant 0 : index
    %c1 = arith.constant 1 : index
    %c0_8 = arith.constant 0 : index
    %10 = vector.load %arg13[%c0_7, %c1, %c0_8] : memref<10x18x8xbf16, #tpu.memory_space<vmem>>, vector<8x16x8xbf16>
    %11 = vector.shape_cast %10 : vector<8x16x8xbf16> to vector<128x8xbf16>
    %c1_9 = arith.constant 1 : index
    %c0_10 = arith.constant 0 : index
    %c0_11 = arith.constant 0 : index
    %12 = vector.load %arg9[%c1_9, %c0_10, %c0_11] : memref<9x8x8xbf16, #tpu.memory_space<vmem>>, vector<1x8x8xbf16>
    %13 = vector.shape_cast %12 : vector<1x8x8xbf16> to vector<8x8xbf16>
    %cst_12 = arith.constant dense<0.000000e+00> : vector<128x8xf32>
    %14 = tpu.matmul %11, %13, %cst_12 {dimension_numbers = #tpu.dot_dimension_numbers<[1], [0], [0], [1], [0, 0, 1, 1], [], []>} : vector<128x8xbf16>, vector<8x8xbf16>, vector<128x8xf32> -> vector<128x8xf32>
    %15 = arith.addf %9, %14 : vector<128x8xf32>
    %c0_13 = arith.constant 0 : index
    %c2 = arith.constant 2 : index
    %c0_14 = arith.constant 0 : index
    %16 = vector.load %arg13[%c0_13, %c2, %c0_14] : memref<10x18x8xbf16, #tpu.memory_space<vmem>>, vector<8x16x8xbf16>
    %17 = vector.shape_cast %16 : vector<8x16x8xbf16> to vector<128x8xbf16>
    %c2_15 = arith.constant 2 : index
    %c0_16 = arith.constant 0 : index
    %c0_17 = arith.constant 0 : index
    %18 = vector.load %arg9[%c2_15, %c0_16, %c0_17] : memref<9x8x8xbf16, #tpu.memory_space<vmem>>, vector<1x8x8xbf16>
    %19 = vector.shape_cast %18 : vector<1x8x8xbf16> to vector<8x8xbf16>
    %cst_18 = arith.constant dense<0.000000e+00> : vector<128x8xf32>
    %20 = tpu.matmul %17, %19, %cst_18 {dimension_numbers = #tpu.dot_dimension_numbers<[1], [0], [0], [1], [0, 0, 1, 1], [], []>} : vector<128x8xbf16>, vector<8x8xbf16>, vector<128x8xf32> -> vector<128x8xf32>
    %21 = arith.addf %15, %20 : vector<128x8xf32>
    %c1_19 = arith.constant 1 : index
    %c0_20 = arith.constant 0 : index
    %c0_21 = arith.constant 0 : index
    %22 = vector.load %arg13[%c1_19, %c0_20, %c0_21] : memref<10x18x8xbf16, #tpu.memory_space<vmem>>, vector<8x16x8xbf16>
    %23 = vector.shape_cast %22 : vector<8x16x8xbf16> to vector<128x8xbf16>
    %c3 = arith.constant 3 : index
    %c0_22 = arith.constant 0 : index
    %c0_23 = arith.constant 0 : index
    %24 = vector.load %arg9[%c3, %c0_22, %c0_23] : memref<9x8x8xbf16, #tpu.memory_space<vmem>>, vector<1x8x8xbf16>
    %25 = vector.shape_cast %24 : vector<1x8x8xbf16> to vector<8x8xbf16>
    %cst_24 = arith.constant dense<0.000000e+00> : vector<128x8xf32>
    %26 = tpu.matmul %23, %25, %cst_24 {dimension_numbers = #tpu.dot_dimension_numbers<[1], [0], [0], [1], [0, 0, 1, 1], [], []>} : vector<128x8xbf16>, vector<8x8xbf16>, vector<128x8xf32> -> vector<128x8xf32>
    %27 = arith.addf %21, %26 : vector<128x8xf32>
    %c1_25 = arith.constant 1 : index
    %c1_26 = arith.constant 1 : index
    %c0_27 = arith.constant 0 : index
    %28 = vector.load %arg13[%c1_25, %c1_26, %c0_27] : memref<10x18x8xbf16, #tpu.memory_space<vmem>>, vector<8x16x8xbf16>
    %29 = vector.shape_cast %28 : vector<8x16x8xbf16> to vector<128x8xbf16>
    %c4 = arith.constant 4 : index
    %c0_28 = arith.constant 0 : index
    %c0_29 = arith.constant 0 : index
    %30 = vector.load %arg9[%c4, %c0_28, %c0_29] : memref<9x8x8xbf16, #tpu.memory_space<vmem>>, vector<1x8x8xbf16>
    %31 = vector.shape_cast %30 : vector<1x8x8xbf16> to vector<8x8xbf16>
    %cst_30 = arith.constant dense<0.000000e+00> : vector<128x8xf32>
    %32 = tpu.matmul %29, %31, %cst_30 {dimension_numbers = #tpu.dot_dimension_numbers<[1], [0], [0], [1], [0, 0, 1, 1], [], []>} : vector<128x8xbf16>, vector<8x8xbf16>, vector<128x8xf32> -> vector<128x8xf32>
    %33 = arith.addf %27, %32 : vector<128x8xf32>
    %c1_31 = arith.constant 1 : index
    %c2_32 = arith.constant 2 : index
    %c0_33 = arith.constant 0 : index
    %34 = vector.load %arg13[%c1_31, %c2_32, %c0_33] : memref<10x18x8xbf16, #tpu.memory_space<vmem>>, vector<8x16x8xbf16>
    %35 = vector.shape_cast %34 : vector<8x16x8xbf16> to vector<128x8xbf16>
    %c5 = arith.constant 5 : index
    %c0_34 = arith.constant 0 : index
    %c0_35 = arith.constant 0 : index
    %36 = vector.load %arg9[%c5, %c0_34, %c0_35] : memref<9x8x8xbf16, #tpu.memory_space<vmem>>, vector<1x8x8xbf16>
    %37 = vector.shape_cast %36 : vector<1x8x8xbf16> to vector<8x8xbf16>
    %cst_36 = arith.constant dense<0.000000e+00> : vector<128x8xf32>
    %38 = tpu.matmul %35, %37, %cst_36 {dimension_numbers = #tpu.dot_dimension_numbers<[1], [0], [0], [1], [0, 0, 1, 1], [], []>} : vector<128x8xbf16>, vector<8x8xbf16>, vector<128x8xf32> -> vector<128x8xf32>
    %39 = arith.addf %33, %38 : vector<128x8xf32>
    %c2_37 = arith.constant 2 : index
    %c0_38 = arith.constant 0 : index
    %c0_39 = arith.constant 0 : index
    %40 = vector.load %arg13[%c2_37, %c0_38, %c0_39] : memref<10x18x8xbf16, #tpu.memory_space<vmem>>, vector<8x16x8xbf16>
    %41 = vector.shape_cast %40 : vector<8x16x8xbf16> to vector<128x8xbf16>
    %c6 = arith.constant 6 : index
    %c0_40 = arith.constant 0 : index
    %c0_41 = arith.constant 0 : index
    %42 = vector.load %arg9[%c6, %c0_40, %c0_41] : memref<9x8x8xbf16, #tpu.memory_space<vmem>>, vector<1x8x8xbf16>
    %43 = vector.shape_cast %42 : vector<1x8x8xbf16> to vector<8x8xbf16>
    %cst_42 = arith.constant dense<0.000000e+00> : vector<128x8xf32>
    %44 = tpu.matmul %41, %43, %cst_42 {dimension_numbers = #tpu.dot_dimension_numbers<[1], [0], [0], [1], [0, 0, 1, 1], [], []>} : vector<128x8xbf16>, vector<8x8xbf16>, vector<128x8xf32> -> vector<128x8xf32>
    %45 = arith.addf %39, %44 : vector<128x8xf32>
    %c2_43 = arith.constant 2 : index
    %c1_44 = arith.constant 1 : index
    %c0_45 = arith.constant 0 : index
    %46 = vector.load %arg13[%c2_43, %c1_44, %c0_45] : memref<10x18x8xbf16, #tpu.memory_space<vmem>>, vector<8x16x8xbf16>
    %47 = vector.shape_cast %46 : vector<8x16x8xbf16> to vector<128x8xbf16>
    %c7 = arith.constant 7 : index
    %c0_46 = arith.constant 0 : index
    %c0_47 = arith.constant 0 : index
    %48 = vector.load %arg9[%c7, %c0_46, %c0_47] : memref<9x8x8xbf16, #tpu.memory_space<vmem>>, vector<1x8x8xbf16>
    %49 = vector.shape_cast %48 : vector<1x8x8xbf16> to vector<8x8xbf16>
    %cst_48 = arith.constant dense<0.000000e+00> : vector<128x8xf32>
    %50 = tpu.matmul %47, %49, %cst_48 {dimension_numbers = #tpu.dot_dimension_numbers<[1], [0], [0], [1], [0, 0, 1, 1], [], []>} : vector<128x8xbf16>, vector<8x8xbf16>, vector<128x8xf32> -> vector<128x8xf32>
    %51 = arith.addf %45, %50 : vector<128x8xf32>
    %c2_49 = arith.constant 2 : index
    %c2_50 = arith.constant 2 : index
    %c0_51 = arith.constant 0 : index
    %52 = vector.load %arg13[%c2_49, %c2_50, %c0_51] : memref<10x18x8xbf16, #tpu.memory_space<vmem>>, vector<8x16x8xbf16>
    %53 = vector.shape_cast %52 : vector<8x16x8xbf16> to vector<128x8xbf16>
    %c8 = arith.constant 8 : index
    %c0_52 = arith.constant 0 : index
    %c0_53 = arith.constant 0 : index
    %54 = vector.load %arg9[%c8, %c0_52, %c0_53] : memref<9x8x8xbf16, #tpu.memory_space<vmem>>, vector<1x8x8xbf16>
    %55 = vector.shape_cast %54 : vector<1x8x8xbf16> to vector<8x8xbf16>
    %cst_54 = arith.constant dense<0.000000e+00> : vector<128x8xf32>
    %56 = tpu.matmul %53, %55, %cst_54 {dimension_numbers = #tpu.dot_dimension_numbers<[1], [0], [0], [1], [0, 0, 1, 1], [], []>} : vector<128x8xbf16>, vector<8x8xbf16>, vector<128x8xf32> -> vector<128x8xf32>
    %57 = arith.addf %51, %56 : vector<128x8xf32>
    %c0_55 = arith.constant 0 : index
    %c0_56 = arith.constant 0 : index
    %58 = vector.load %arg10[%c0_55, %c0_56] : memref<1x8xf32, #tpu.memory_space<vmem>>, vector<1x8xf32>
    %59 = vector.broadcast %58 : vector<1x8xf32> to vector<128x8xf32>
    %60 = arith.mulf %57, %59 : vector<128x8xf32>
    %c0_57 = arith.constant 0 : index
    %c0_58 = arith.constant 0 : index
    %61 = vector.load %arg11[%c0_57, %c0_58] : memref<1x8xf32, #tpu.memory_space<vmem>>, vector<1x8xf32>
    %62 = vector.broadcast %61 : vector<1x8xf32> to vector<128x8xf32>
    %63 = arith.addf %60, %62 : vector<128x8xf32>
    %cst_59 = arith.constant 0.000000e+00 : f32
    %64 = vector.broadcast %cst_59 : f32 to vector<128x8xf32>
    %65 = arith.maximumf %63, %64 : vector<128x8xf32>
    %66 = vector.shape_cast %65 : vector<128x8xf32> to vector<1x1x8x16x8xf32>
    %67 = arith.truncf %66 : vector<1x1x8x16x8xf32> to vector<1x1x8x16x8xbf16>
    %c0_60 = arith.constant 0 : index
    %c0_61 = arith.constant 0 : index
    %c0_62 = arith.constant 0 : index
    %c0_63 = arith.constant 0 : index
    %c0_64 = arith.constant 0 : index
    %68 = vector.load %arg12[%c0_60, %c0_61, %c0_62, %c0_63, %c0_64] : memref<1x1x8x16x8xbf16, #tpu.memory_space<vmem>>, vector<1x1x8x16x8xbf16>
    tpu.vector_store %arg12[%c0_60, %c0_61, %c0_62, %c0_63, %c0_64], %67 {strides = array<i32>} : memref<1x1x8x16x8xbf16, #tpu.memory_space<vmem>>, vector<1x1x8x16x8xbf16>,
    return
  }
  func.func @transform_0(%arg0: i32, %arg1: i32, %arg2: i32) -> (i32, i32, i32, i32, i32) {
    %c4_i32 = arith.constant 4 : i32
    %0 = arith.muli %arg1, %c4_i32 : i32
    %c1_i32 = arith.constant 1 : i32
    %1 = arith.subi %0, %c1_i32 : i32
    %c0_i32 = arith.constant 0 : i32
    %2 = arith.maxsi %1, %c0_i32 : i32
    %c0_i32_0 = arith.constant 0 : i32
    %c0_i32_1 = arith.constant 0 : i32
    %c0_i32_2 = arith.constant 0 : i32
    %c0_i32_3 = arith.constant 0 : i32
    return %arg0, %2, %c0_i32_0, %c0_i32_1, %c0_i32_2 : i32, i32, i32, i32, i32
  }
  func.func @transform_1(%arg0: i32, %arg1: i32, %arg2: i32) -> (i32, i32, i32, i32, i32) {
    %c0_i32 = arith.constant 0 : i32
    %c0_i32_0 = arith.constant 0 : i32
    %c0_i32_1 = arith.constant 0 : i32
    %c0_i32_2 = arith.constant 0 : i32
    return %arg0, %arg1, %c0_i32, %c0_i32_0, %c0_i32_1 : i32, i32, i32, i32, i32
  }
  func.func @transform_2(%arg0: i32, %arg1: i32, %arg2: i32) -> (i32, i32, i32, i32, i32) {
    %c1_i32 = arith.constant 1 : i32
    %0 = arith.addi %arg1, %c1_i32 : i32
    %c4_i32 = arith.constant 4 : i32
    %1 = arith.muli %0, %c4_i32 : i32
    %c7_i32 = arith.constant 7 : i32
    %2 = arith.minsi %1, %c7_i32 : i32
    %c0_i32 = arith.constant 0 : i32
    %c0_i32_0 = arith.constant 0 : i32
    %c0_i32_1 = arith.constant 0 : i32
    %c0_i32_2 = arith.constant 0 : i32
    return %arg0, %2, %c0_i32, %c0_i32_0, %c0_i32_1 : i32, i32, i32, i32, i32
  }
  func.func @transform_3(%arg0: i32, %arg1: i32, %arg2: i32) -> (i32, i32, i32) {
    %c0_i32 = arith.constant 0 : i32
    %c0_i32_0 = arith.constant 0 : i32
    %c0_i32_1 = arith.constant 0 : i32
    %c0_i32_2 = arith.constant 0 : i32
    return %c0_i32, %c0_i32_0, %c0_i32_1 : i32, i32, i32
  }
  func.func @transform_4(%arg0: i32, %arg1: i32, %arg2: i32) -> (i32, i32) {
    %c0_i32 = arith.constant 0 : i32
    %c0_i32_0 = arith.constant 0 : i32
    %c0_i32_1 = arith.constant 0 : i32
    return %c0_i32, %c0_i32_0 : i32, i32
  }
  func.func @transform_5(%arg0: i32, %arg1: i32, %arg2: i32) -> (i32, i32) {
    %c0_i32 = arith.constant 0 : i32
    %c0_i32_0 = arith.constant 0 : i32
    %c0_i32_1 = arith.constant 0 : i32
    return %c0_i32, %c0_i32_0 : i32, i32
  }
  func.func @transform_6(%arg0: i32, %arg1: i32, %arg2: i32) -> (i32, i32, i32) {
    %c0_i32 = arith.constant 0 : i32
    %c0_i32_0 = arith.constant 0 : i32
    %c0_i32_1 = arith.constant 0 : i32
    return %c0_i32, %c0_i32_0, %arg2 : i32, i32, i32
  }
  func.func @transform_7(%arg0: i32, %arg1: i32, %arg2: i32) -> (i32, i32) {
    %c0_i32 = arith.constant 0 : i32
    %c0_i32_0 = arith.constant 0 : i32
    return %c0_i32, %arg2 : i32, i32
  }
  func.func @transform_8(%arg0: i32, %arg1: i32, %arg2: i32) -> (i32, i32) {
    %c0_i32 = arith.constant 0 : i32
    %c0_i32_0 = arith.constant 0 : i32
    return %c0_i32, %arg2 : i32, i32
  }
  func.func @transform_9(%arg0: i32, %arg1: i32, %arg2: i32) -> (i32, i32, i32, i32, i32) {
    %c0_i32 = arith.constant 0 : i32
    %c0_i32_0 = arith.constant 0 : i32
    %c0_i32_1 = arith.constant 0 : i32
    return %arg0, %arg1, %c0_i32, %c0_i32_0, %arg2 : i32, i32, i32, i32, i32
  }
}

</mosaic_0001>

<llo_original>
// kernel: conv_block_forward_nhwc.1
$region0: #{conv_block_forward_nhwc.1}
  #allocation0 [shape = 'u32[]', space=smem, size = 0x4, offset = 0x4, fixed_abs, tag = 'smem constant byte address 0x4 - core index']
  #allocation1 [shape = 'u32[144,128]{1,0:T(1,128)}', space=vmem, size = 0x12000, scoped, tag = 'internal scratch']
  #allocation2 [shape = 'bf16[10,18,8]{2,1,0:T(8,128)(2,1)}', space=vmem, size = 0xf000, scoped, tag = 'scratch operand']
  %s0 = inlined_call_operand.vmem [shape: bf16[2,8,2,16,4], index: 0, kind: input, shape index: {}, may-alias: {0,1,2}]
  %s1 = inlined_call_operand.vmem [shape: bf16[2,8,2,16,4], index: 1, kind: input, shape index: {}, may-alias: {0,1,2}]
  %s2 = inlined_call_operand.vmem [shape: bf16[2,8,2,16,4], index: 2, kind: input, shape index: {}, may-alias: {0,1,2}]
  %s3 = inlined_call_operand.vmem [shape: bf16[9,4,8], index: 3, kind: input, shape index: {}]
  %s4 = inlined_call_operand.vmem [shape: f32[1,8], index: 4, kind: input, shape index: {}]
  %s5 = inlined_call_operand.vmem [shape: f32[1,8], index: 5, kind: input, shape index: {}]
  %s6 = inlined_call_operand.vmem [shape: bf16[9,8,8], index: 6, kind: input, shape index: {}]
  %s7 = inlined_call_operand.vmem [shape: f32[1,8], index: 7, kind: input, shape index: {}]
  %s8 = inlined_call_operand.vmem [shape: f32[1,8], index: 8, kind: input, shape index: {}]
  %s9 = inlined_call_operand.vmem [shape: bf16[2,2,8,16,8], index: 9, kind: output, shape index: {}]
  %s10 = sld [smem:[#allocation0]]
  $region73: #{conv_block_forward_nhwc.1} parent=0
    _
  %s12 = ssub.s32 1, %s10
  %s13 = scalar_select 0, %s12, %s10
  loop: start=0, step=1, limit=6
  $region2: #{conv_block_forward_nhwc.1} parent=0 // loop_pre_header
    _
  $region3: #{conv_block_forward_nhwc.1} parent=0 // loop_header
    %s15 = sphi 0, %s19
    %p16 = scmp.ge.s32.totalorder %s15, 6
    %s22 = sphi 0, %s41
    %s23 = sphi 0, %s37
    %s24 = sphi 0, %s33
    %s25 = sphi 0, %s22
    %s26 = sphi 0, %s23
    %s27 = sphi 0, %s24
    %s28 = sphi 0, %s25
    %s29 = sphi 0, %s26
    %s30 = sphi 0, %s27
    %s54 = sphi 0, %s56
    %s57 = sphi 0, %s54
    %s58 = sphi 0, %s57
    %s74 = sphi 0, %s58
    %s82 = sphi 0, %s84
    %s85 = sphi 0, %s82
    %s86 = sphi 0, %s85
    %s102 = sphi 0, %s86
    %s118 = sphi 0, %s120
    %s121 = sphi 0, %s118
    %s122 = sphi 0, %s121
    %s138 = sphi 0, %s122
    %s142 = sphi 0, %s142
    %s144 = sphi 0, %s142
    %s145 = sphi 0, %s144
    %s159 = sphi 0, %s145
    %s163 = sphi 0, %s163
    %s165 = sphi 0, %s163
    %s166 = sphi 0, %s165
    %s180 = sphi 0, %s166
    %s184 = sphi 0, %s184
    %s186 = sphi 0, %s184
    %s187 = sphi 0, %s186
    %s201 = sphi 0, %s187
    %s207 = sphi 0, %s209
    %s210 = sphi 0, %s207
    %s211 = sphi 0, %s210
    %s227 = sphi 0, %s211
    %s233 = sphi 0, %s235
    %s236 = sphi 0, %s233
    %s237 = sphi 0, %s236
    %s253 = sphi 0, %s237
    %s259 = sphi 0, %s261
    %s262 = sphi 0, %s259
    %s263 = sphi 0, %s262
    %s279 = sphi 0, %s263
    %s289 = sphi 0, %s291
    %s292 = sphi 0, %s289
    %s293 = sphi 0, %s292
    %s309 = sphi 0, %s293
  $region4: #{conv_block_forward_nhwc.1} parent=0 // loop_header_branch
    %18 = sbr.rel (%p16) target = $region8
  $region5: #{conv_block_forward_nhwc.1} parent=0 // loop_body
    %s20 = ssub.s32 %s15, 1
    %s21 = ssub.s32 %s15, 2
    %s31 = sadd.s32 1, %s24
    %p32 = scmp.ge.s32.totalorder %s31, 1
    %s33 = scalar_select %p32, 0, %s31
    %s34 = sadd.s32 1, %s23
    %s35 = scalar_select %p32, %s34, %s23
    %p36 = scmp.ge.s32.totalorder %s35, 2
    %s37 = scalar_select %p36, 0, %s35
    %s38 = sadd.s32 1, %s22
    %s39 = scalar_select %p36, %s38, %s22
    %p40 = scmp.ge.s32.totalorder %s39, 2
    %s41 = scalar_select %p40, 0, %s39
    %s42 = smul.u32 %s23, 4
    %s43 = ssub.s32 %s42, 1
    %p44 = scmp.gt.s32.totalorder %s43, 0
    %s45 = scalar_select %p44, %s43, 0
    %s46 = smul.u32 %s37, 4
    %s47 = ssub.s32 %s46, 1
    %p48 = scmp.gt.s32.totalorder %s47, 0
    %s49 = scalar_select %p48, %s47, 0
    %s50 = ssub.s32 %s22, %s41
    %s51 = ssub.s32 %s45, %s49
    %s52 = sor.u32 %s50, %s51
    %p53 = scmp.eq.s32.totalorder %s52, 0
    %s55 = sadd.s32 %s54, 1
    %s56 = scalar_select %p53, %s54, %s55
    %p59 = pneg %p53
    %p60 = scmp.eq.s32.totalorder %s15, 3
    %p61 = por %p59, %p60
    %p62 = scmp.ne.s32.totalorder %s54, %s57
    %p63 = scmp.eq.s32.totalorder %s15, 0
    %p64 = por %p62, %p63
    %p65 = scmp.ne.s32.totalorder %s54, %s57
    %p66 = scmp.eq.s32.totalorder %s20, 3
    %p67 = por %p65, %p66
    %p68 = scmp.ne.s32.totalorder %s57, %s58
    %p69 = scmp.eq.s32.totalorder %s20, 0
    %p70 = por %p68, %p69
    %p71 = scmp.ne.s32.totalorder %s57, %s58
    %p72 = scmp.eq.s32.totalorder %s21, 3
    %p73 = por %p71, %p72
    %p75 = scmp.ne.s32.totalorder %s58, %s74
    %p76 = scmp.eq.s32.totalorder %s21, 0
    %p77 = por %p75, %p76
    %s78 = ssub.s32 %s22, %s41
    %s79 = ssub.s32 %s23, %s37
    %s80 = sor.u32 %s78, %s79
    %p81 = scmp.eq.s32.totalorder %s80, 0
    %s83 = sadd.s32 %s82, 1
    %s84 = scalar_select %p81, %s82, %s83
    %p87 = pneg %p81
    %p88 = scmp.eq.s32.totalorder %s15, 3
    %p89 = por %p87, %p88
    %p90 = scmp.ne.s32.totalorder %s82, %s85
    %p91 = scmp.eq.s32.totalorder %s15, 0
    %p92 = por %p90, %p91
    %p93 = scmp.ne.s32.totalorder %s82, %s85
    %p94 = scmp.eq.s32.totalorder %s20, 3
    %p95 = por %p93, %p94
    %p96 = scmp.ne.s32.totalorder %s85, %s86
    %p97 = scmp.eq.s32.totalorder %s20, 0
    %p98 = por %p96, %p97
    %p99 = scmp.ne.s32.totalorder %s85, %s86
    %p100 = scmp.eq.s32.totalorder %s21, 3
    %p101 = por %p99, %p100
    %p103 = scmp.ne.s32.totalorder %s86, %s102
    %p104 = scmp.eq.s32.totalorder %s21, 0
    %p105 = por %p103, %p104
    %s106 = sadd.s32 %s23, 1
    %s107 = smul.u32 %s106, 4
    %p108 = scmp.lt.s32.totalorder %s107, 7
    %s109 = scalar_select %p108, %s107, 7
    %s110 = sadd.s32 %s37, 1
    %s111 = smul.u32 %s110, 4
    %p112 = scmp.lt.s32.totalorder %s111, 7
    %s113 = scalar_select %p112, %s111, 7
    %s114 = ssub.s32 %s22, %s41
    %s115 = ssub.s32 %s109, %s113
    %s116 = sor.u32 %s114, %s115
    %p117 = scmp.eq.s32.totalorder %s116, 0
    %s119 = sadd.s32 %s118, 1
    %s120 = scalar_select %p117, %s118, %s119
    %p123 = pneg %p117
    %p124 = scmp.eq.s32.totalorder %s15, 3
    %p125 = por %p123, %p124
    %p126 = scmp.ne.s32.totalorder %s118, %s121
    %p127 = scmp.eq.s32.totalorder %s15, 0
    %p128 = por %p126, %p127
    %p129 = scmp.ne.s32.totalorder %s118, %s121
    %p130 = scmp.eq.s32.totalorder %s20, 3
    %p131 = por %p129, %p130
    %p132 = scmp.ne.s32.totalorder %s121, %s122
    %p133 = scmp.eq.s32.totalorder %s20, 0
    %p134 = por %p132, %p133
    %p135 = scmp.ne.s32.totalorder %s121, %s122
    %p136 = scmp.eq.s32.totalorder %s21, 3
    %p137 = por %p135, %p136
    %p139 = scmp.ne.s32.totalorder %s122, %s138
    %p140 = scmp.eq.s32.totalorder %s21, 0
    %p141 = por %p139, %p140
    %s143 = sadd.s32 %s142, 1
    %p146 = scmp.eq.s32.totalorder %s15, 3
    %p147 = scmp.ne.s32.totalorder %s142, %s144
    %p148 = scmp.eq.s32.totalorder %s15, 0
    %p149 = por %p147, %p148
    %p150 = scmp.ne.s32.totalorder %s142, %s144
    %p151 = scmp.eq.s32.totalorder %s20, 3
    %p152 = por %p150, %p151
    %p153 = scmp.ne.s32.totalorder %s144, %s145
    %p154 = scmp.eq.s32.totalorder %s20, 0
    %p155 = por %p153, %p154
    %p156 = scmp.ne.s32.totalorder %s144, %s145
    %p157 = scmp.eq.s32.totalorder %s21, 3
    %p158 = por %p156, %p157
    %p160 = scmp.ne.s32.totalorder %s145, %s159
    %p161 = scmp.eq.s32.totalorder %s21, 0
    %p162 = por %p160, %p161
    %s164 = sadd.s32 %s163, 1
    %p167 = scmp.eq.s32.totalorder %s15, 3
    %p168 = scmp.ne.s32.totalorder %s163, %s165
    %p169 = scmp.eq.s32.totalorder %s15, 0
    %p170 = por %p168, %p169
    %p171 = scmp.ne.s32.totalorder %s163, %s165
    %p172 = scmp.eq.s32.totalorder %s20, 3
    %p173 = por %p171, %p172
    %p174 = scmp.ne.s32.totalorder %s165, %s166
    %p175 = scmp.eq.s32.totalorder %s20, 0
    %p176 = por %p174, %p175
    %p177 = scmp.ne.s32.totalorder %s165, %s166
    %p178 = scmp.eq.s32.totalorder %s21, 3
    %p179 = por %p177, %p178
    %p181 = scmp.ne.s32.totalorder %s166, %s180
    %p182 = scmp.eq.s32.totalorder %s21, 0
    %p183 = por %p181, %p182
    %s185 = sadd.s32 %s184, 1
    %p188 = scmp.eq.s32.totalorder %s15, 3
    %p189 = scmp.ne.s32.totalorder %s184, %s186
    %p190 = scmp.eq.s32.totalorder %s15, 0
    %p191 = por %p189, %p190
    %p192 = scmp.ne.s32.totalorder %s184, %s186
    %p193 = scmp.eq.s32.totalorder %s20, 3
    %p194 = por %p192, %p193
    %p195 = scmp.ne.s32.totalorder %s186, %s187
    %p196 = scmp.eq.s32.totalorder %s20, 0
    %p197 = por %p195, %p196
    %p198 = scmp.ne.s32.totalorder %s186, %s187
    %p199 = scmp.eq.s32.totalorder %s21, 3
    %p200 = por %p198, %p199
    %p202 = scmp.ne.s32.totalorder %s187, %s201
    %p203 = scmp.eq.s32.totalorder %s21, 0
    %p204 = por %p202, %p203
    %s205 = ssub.s32 %s24, %s33
    %p206 = scmp.eq.s32.totalorder %s205, 0
    %s208 = sadd.s32 %s207, 1
    %s209 = scalar_select %p206, %s207, %s208
    %p212 = pneg %p206
    %p213 = scmp.eq.s32.totalorder %s15, 3
    %p214 = por %p212, %p213
    %p215 = scmp.ne.s32.totalorder %s207, %s210
    %p216 = scmp.eq.s32.totalorder %s15, 0
    %p217 = por %p215, %p216
    %p218 = scmp.ne.s32.totalorder %s207, %s210
    %p219 = scmp.eq.s32.totalorder %s20, 3
    %p220 = por %p218, %p219
    %p221 = scmp.ne.s32.totalorder %s210, %s211
    %p222 = scmp.eq.s32.totalorder %s20, 0
    %p223 = por %p221, %p222
    %p224 = scmp.ne.s32.totalorder %s210, %s211
    %p225 = scmp.eq.s32.totalorder %s21, 3
    %p226 = por %p224, %p225
    %p228 = scmp.ne.s32.totalorder %s211, %s227
    %p229 = scmp.eq.s32.totalorder %s21, 0
    %p230 = por %p228, %p229
    %s231 = ssub.s32 %s24, %s33
    %p232 = scmp.eq.s32.totalorder %s231, 0
    %s234 = sadd.s32 %s233, 1
    %s235 = scalar_select %p232, %s233, %s234
    %p238 = pneg %p232
    %p239 = scmp.eq.s32.totalorder %s15, 3
    %p240 = por %p238, %p239
    %p241 = scmp.ne.s32.totalorder %s233, %s236
    %p242 = scmp.eq.s32.totalorder %s15, 0
    %p243 = por %p241, %p242
    %p244 = scmp.ne.s32.totalorder %s233, %s236
    %p245 = scmp.eq.s32.totalorder %s20, 3
    %p246 = por %p244, %p245
    %p247 = scmp.ne.s32.totalorder %s236, %s237
    %p248 = scmp.eq.s32.totalorder %s20, 0
    %p249 = por %p247, %p248
    %p250 = scmp.ne.s32.totalorder %s236, %s237
    %p251 = scmp.eq.s32.totalorder %s21, 3
    %p252 = por %p250, %p251
    %p254 = scmp.ne.s32.totalorder %s237, %s253
    %p255 = scmp.eq.s32.totalorder %s21, 0
    %p256 = por %p254, %p255
    %s257 = ssub.s32 %s24, %s33
    %p258 = scmp.eq.s32.totalorder %s257, 0
    %s260 = sadd.s32 %s259, 1
    %s261 = scalar_select %p258, %s259, %s260
    %p264 = pneg %p258
    %p265 = scmp.eq.s32.totalorder %s15, 3
    %p266 = por %p264, %p265
    %p267 = scmp.ne.s32.totalorder %s259, %s262
    %p268 = scmp.eq.s32.totalorder %s15, 0
    %p269 = por %p267, %p268
    %p270 = scmp.ne.s32.totalorder %s259, %s262
    %p271 = scmp.eq.s32.totalorder %s20, 3
    %p272 = por %p270, %p271
    %p273 = scmp.ne.s32.totalorder %s262, %s263
    %p274 = scmp.eq.s32.totalorder %s20, 0
    %p275 = por %p273, %p274
    %p276 = scmp.ne.s32.totalorder %s262, %s263
    %p277 = scmp.eq.s32.totalorder %s21, 3
    %p278 = por %p276, %p277
    %p280 = scmp.ne.s32.totalorder %s263, %s279
    %p281 = scmp.eq.s32.totalorder %s21, 0
    %p282 = por %p280, %p281
    %s283 = ssub.s32 %s22, %s41
    %s284 = ssub.s32 %s23, %s37
    %s285 = sor.u32 %s283, %s284
    %s286 = ssub.s32 %s24, %s33
    %s287 = sor.u32 %s285, %s286
    %p288 = scmp.eq.s32.totalorder %s287, 0
    %s290 = sadd.s32 %s289, 1
    %s291 = scalar_select %p288, %s289, %s290
    %p294 = pneg %p288
    %p295 = scmp.eq.s32.totalorder %s15, 3
    %p296 = por %p294, %p295
    %p297 = scmp.ne.s32.totalorder %s289, %s292
    %p298 = scmp.eq.s32.totalorder %s15, 0
    %p299 = por %p297, %p298
    %p300 = scmp.ne.s32.totalorder %s289, %s292
    %p301 = scmp.eq.s32.totalorder %s20, 3
    %p302 = por %p300, %p301
    %p303 = scmp.ne.s32.totalorder %s292, %s293
    %p304 = scmp.eq.s32.totalorder %s20, 0
    %p305 = por %p303, %p304
    %p306 = scmp.ne.s32.totalorder %s292, %s293
    %p307 = scmp.eq.s32.totalorder %s21, 3
    %p308 = por %p306, %p307
    %p310 = scmp.ne.s32.totalorder %s293, %s309
    %p311 = scmp.eq.s32.totalorder %s21, 0
    %p312 = por %p310, %p311
    %p313 = scmp.le.s32.totalorder 1, %s15
    %p314 = scmp.lt.s32.totalorder %s15, 5
    %p315 = pnand %p313, %p314
    %p316 = pneg %p315
    // Predicated region
    $region9: #{conv_block_forward_nhwc.1} parent=5 // pred_check
      _
    $region10: #{conv_block_forward_nhwc.1} parent=5 // pred_check_branch
      %318 = sbr.rel (%p315) target = $region12
    $region11: #{conv_block_forward_nhwc.1} parent=5 // pred_region
      %s319 = ssub.s32 %s15, 1
      // Predicated region
      $region13: #{conv_block_forward_nhwc.1} parent=11 // pred_check
        %p320 = pneg %p155
      $region14: #{conv_block_forward_nhwc.1} parent=11 // pred_check_branch
        %322 = sbr.rel (%p320) target = $region16
      $region15: #{conv_block_forward_nhwc.1} parent=11 // pred_region
        _
      $region16: #{conv_block_forward_nhwc.1} parent=11 // pred_fallthru
        _
      // Predicated region
      $region17: #{conv_block_forward_nhwc.1} parent=11 // pred_check
        %p323 = pneg %p176
      $region18: #{conv_block_forward_nhwc.1} parent=11 // pred_check_branch
        %325 = sbr.rel (%p323) target = $region20
      $region19: #{conv_block_forward_nhwc.1} parent=11 // pred_region
        _
      $region20: #{conv_block_forward_nhwc.1} parent=11 // pred_fallthru
        _
      // Predicated region
      $region21: #{conv_block_forward_nhwc.1} parent=11 // pred_check
        %p326 = pneg %p197
      $region22: #{conv_block_forward_nhwc.1} parent=11 // pred_check_branch
        %328 = sbr.rel (%p326) target = $region24
      $region23: #{conv_block_forward_nhwc.1} parent=11 // pred_region
        _
      $region24: #{conv_block_forward_nhwc.1} parent=11 // pred_fallthru
        _
      // Predicated region
      $region25: #{conv_block_forward_nhwc.1} parent=11 // pred_check
        %p329 = pneg %p223
      $region26: #{conv_block_forward_nhwc.1} parent=11 // pred_check_branch
        %331 = sbr.rel (%p329) target = $region28
      $region27: #{conv_block_forward_nhwc.1} parent=11 // pred_region
        %p332 = scmp.lt.s32.totalorder %s27, 0
        %s333 = scalar_select %p332, %s27, 0
        %s334 = smul.addr %s333, 4
        %s335 = scalar_lea.vmem %s6, %s334
      $region28: #{conv_block_forward_nhwc.1} parent=11 // pred_fallthru
        _
      // Predicated region
      $region29: #{conv_block_forward_nhwc.1} parent=11 // pred_check
        %p336 = pneg %p249
      $region30: #{conv_block_forward_nhwc.1} parent=11 // pred_check_branch
        %338 = sbr.rel (%p336) target = $region32
      $region31: #{conv_block_forward_nhwc.1} parent=11 // pred_region
        %p339 = scmp.lt.s32.totalorder %s27, 0
        %s340 = scalar_select %p339, %s27, 0
        %s341 = scalar_lea.vmem %s7, %s340
      $region32: #{conv_block_forward_nhwc.1} parent=11 // pred_fallthru
        _
      // Predicated region
      $region33: #{conv_block_forward_nhwc.1} parent=11 // pred_check
        %p342 = pneg %p275
      $region34: #{conv_block_forward_nhwc.1} parent=11 // pred_check_branch
        %344 = sbr.rel (%p342) target = $region36
      $region35: #{conv_block_forward_nhwc.1} parent=11 // pred_region
        %p345 = scmp.lt.s32.totalorder %s27, 0
        %s346 = scalar_select %p345, %s27, 0
        %s347 = scalar_lea.vmem %s8, %s346
      $region36: #{conv_block_forward_nhwc.1} parent=11 // pred_fallthru
        _
    $region12: #{conv_block_forward_nhwc.1} parent=5 // pred_fallthru
      _
    %p348 = scmp.lt.s32.totalorder %s15, 4
    // Predicated region
    $region37: #{conv_block_forward_nhwc.1} parent=5 // pred_check
      %p349 = pneg %p348
    $region38: #{conv_block_forward_nhwc.1} parent=5 // pred_check_branch
      %351 = sbr.rel (%p349) target = $region40
    $region39: #{conv_block_forward_nhwc.1} parent=5 // pred_region
      // Predicated region
      $region41: #{conv_block_forward_nhwc.1} parent=39 // pred_check
        %p352 = pneg %p64
      $region42: #{conv_block_forward_nhwc.1} parent=39 // pred_check_branch
        %354 = sbr.rel (%p352) target = $region44
      $region43: #{conv_block_forward_nhwc.1} parent=39 // pred_region
        %s355 = smul.u32 %s23, 4
        %s356 = ssub.s32 %s355, 1
        %p357 = scmp.gt.s32.totalorder %s356, 0
        %s358 = scalar_select %p357, %s356, 0
        %p359 = scmp.lt.s32.totalorder %s22, 1
        %s360 = scalar_select %p359, %s22, 1
        %p361 = scmp.lt.s32.totalorder %s358, 7
        %s362 = scalar_select %p361, %s358, 7
        %s363 = smul.addr %s362, 4
        %s364 = smul.addr %s360, 32
        %s365 = sadd.s32 %s363, %s364
        %s366 = smul.addr %s365, 4
        %s367 = scalar_lea.vmem %s0, %s366
        %s368 = smul.u32 %s23, 4
        %s369 = ssub.s32 %s368, 1
        %p370 = scmp.gt.s32.totalorder %s369, 0
        %s371 = scalar_select %p370, %s369, 0
      $region44: #{conv_block_forward_nhwc.1} parent=39 // pred_fallthru
        _
      // Predicated region
      $region45: #{conv_block_forward_nhwc.1} parent=39 // pred_check
        %p372 = pneg %p92
      $region46: #{conv_block_forward_nhwc.1} parent=39 // pred_check_branch
        %374 = sbr.rel (%p372) target = $region48
      $region47: #{conv_block_forward_nhwc.1} parent=39 // pred_region
        %s375 = smul.u32 4, %s23
        %p376 = scmp.lt.s32.totalorder %s22, 1
        %s377 = scalar_select %p376, %s22, 1
        %p378 = scmp.lt.s32.totalorder %s375, 7
        %s379 = scalar_select %p378, %s375, 7
        %s380 = smul.addr %s379, 4
        %s381 = smul.addr %s377, 32
        %s382 = sadd.s32 %s380, %s381
        %s383 = smul.addr %s382, 4
        %s384 = scalar_lea.vmem %s1, %s383
        %s385 = smul.u32 4, %s23
      $region48: #{conv_block_forward_nhwc.1} parent=39 // pred_fallthru
        _
      // Predicated region
      $region49: #{conv_block_forward_nhwc.1} parent=39 // pred_check
        %p386 = pneg %p128
      $region50: #{conv_block_forward_nhwc.1} parent=39 // pred_check_branch
        %388 = sbr.rel (%p386) target = $region52
      $region51: #{conv_block_forward_nhwc.1} parent=39 // pred_region
        %s389 = sadd.s32 %s23, 1
        %s390 = smul.u32 %s389, 4
        %p391 = scmp.lt.s32.totalorder %s390, 7
        %s392 = scalar_select %p391, %s390, 7
        %p393 = scmp.lt.s32.totalorder %s22, 1
        %s394 = scalar_select %p393, %s22, 1
        %p395 = scmp.lt.s32.totalorder %s392, 7
        %s396 = scalar_select %p395, %s392, 7
        %s397 = smul.addr %s396, 4
        %s398 = smul.addr %s394, 32
        %s399 = sadd.s32 %s397, %s398
        %s400 = smul.addr %s399, 4
        %s401 = scalar_lea.vmem %s2, %s400
        %s402 = sadd.s32 %s23, 1
        %s403 = smul.u32 %s402, 4
        %p404 = scmp.lt.s32.totalorder %s403, 7
        %s405 = scalar_select %p404, %s403, 7
      $region52: #{conv_block_forward_nhwc.1} parent=39 // pred_fallthru
        _
    $region40: #{conv_block_forward_nhwc.1} parent=5 // pred_fallthru
      _
    %p406 = scmp.le.s32.totalorder 1, %s15
    %p407 = scmp.lt.s32.totalorder %s15, 5
    %p408 = pnand %p406, %p407
    %p409 = pneg %p408
    // Predicated region
    $region53: #{conv_block_forward_nhwc.1} parent=5 // pred_check
      _
    $region54: #{conv_block_forward_nhwc.1} parent=5 // pred_check_branch
      %411 = sbr.rel (%p408) target = $region56
    $region55: #{conv_block_forward_nhwc.1} parent=5 // pred_region
      %s412 = ssub.s32 %s15, 1
      %s413 = smul.u32 %s26, 4
      %s414 = ssub.s32 %s413, 1
      %p415 = scmp.gt.s32.totalorder %s414, 0
      %s416 = scalar_select %p415, %s414, 0
      %p417 = scmp.lt.s32.totalorder %s25, 1
      %s418 = scalar_select %p417, %s25, 1
      %p419 = scmp.lt.s32.totalorder %s416, 7
      %s420 = scalar_select %p419, %s416, 7
      %s421 = smul.addr %s420, 4
      %s422 = smul.addr %s418, 32
      %s423 = sadd.s32 %s421, %s422
      %s424 = smul.addr %s423, 4
      %s425 = scalar_lea.vmem %s0, %s424
      %p426 = pneg %p70
      %p427 = pneg %p67
      %s428 = smul.u32 4, %s26
      %p429 = scmp.lt.s32.totalorder %s25, 1
      %s430 = scalar_select %p429, %s25, 1
      %p431 = scmp.lt.s32.totalorder %s428, 7
      %s432 = scalar_select %p431, %s428, 7
      %s433 = smul.addr %s432, 4
      %s434 = smul.addr %s430, 32
      %s435 = sadd.s32 %s433, %s434
      %s436 = smul.addr %s435, 4
      %s437 = scalar_lea.vmem %s1, %s436
      %p438 = pneg %p98
      %p439 = pneg %p95
      %s440 = sadd.s32 %s26, 1
      %s441 = smul.u32 %s440, 4
      %p442 = scmp.lt.s32.totalorder %s441, 7
      %s443 = scalar_select %p442, %s441, 7
      %p444 = scmp.lt.s32.totalorder %s25, 1
      %s445 = scalar_select %p444, %s25, 1
      %p446 = scmp.lt.s32.totalorder %s443, 7
      %s447 = scalar_select %p446, %s443, 7
      %s448 = smul.addr %s447, 4
      %s449 = smul.addr %s445, 32
      %s450 = sadd.s32 %s448, %s449
      %s451 = smul.addr %s450, 4
      %s452 = scalar_lea.vmem %s2, %s451
      %p453 = pneg %p134
      %p454 = pneg %p131
      %p455 = pneg %p155
      %p456 = pneg %p152
      %p457 = pneg %p176
      %p458 = pneg %p173
      %p459 = pneg %p197
      %p460 = pneg %p194
      %p461 = scmp.lt.s32.totalorder %s27, 0
      %s462 = scalar_select %p461, %s27, 0
      %s463 = smul.addr %s462, 4
      %s464 = scalar_lea.vmem %s6, %s463
      %p465 = pneg %p223
      %p466 = pneg %p220
      %p467 = scmp.lt.s32.totalorder %s27, 0
      %s468 = scalar_select %p467, %s27, 0
      %s469 = scalar_lea.vmem %s7, %s468
      %p470 = pneg %p249
      %p471 = pneg %p246
      %p472 = scmp.lt.s32.totalorder %s27, 0
      %s473 = scalar_select %p472, %s27, 0
      %s474 = scalar_lea.vmem %s8, %s473
      %p475 = pneg %p275
      %p476 = pneg %p272
      %p477 = pneg %p305
      %p478 = pneg %p302
      %p479 = scmp.lt.s32.totalorder %s25, 1
      %s480 = scalar_select %p479, %s25, 1
      %p481 = scmp.lt.s32.totalorder %s26, 1
      %s482 = scalar_select %p481, %s26, 1
      %p483 = scmp.lt.s32.totalorder %s27, 0
      %s484 = scalar_select %p483, %s27, 0
      %s485 = smul.addr %s482, 16
      %s486 = sadd.s32 %s484, %s485
      %s487 = smul.addr %s480, 32
      %s488 = sadd.s32 %s486, %s487
      %s489 = smul.addr %s488, 4
      %s490 = scalar_lea.vmem %s9, %s489
      %s491 = smul.u32 %s26, 4
      %s492 = ssub.s32 %s491, 1
      %p493 = scmp.gt.s32.totalorder %s492, 0
      %s494 = scalar_select %p493, %s492, 0
      %p495 = scmp.lt.s32.totalorder %s25, 1
      %s496 = scalar_select %p495, %s25, 1
      %p497 = scmp.lt.s32.totalorder %s494, 7
      %s498 = scalar_select %p497, %s494, 7
      %s499 = smul.addr %s498, 4
      %s500 = smul.addr %s496, 32
      %s501 = sadd.s32 %s499, %s500
      %s502 = smul.addr %s501, 4
      %s503 = scalar_lea.vmem %s0, %s502
      %s504 = smul.u32 %s26, 4
      %s505 = ssub.s32 %s504, 1
      %p506 = scmp.gt.s32.totalorder %s505, 0
      %s507 = scalar_select %p506, %s505, 0
      %s508 = smul.u32 4, %s26
      %p509 = scmp.lt.s32.totalorder %s25, 1
      %s510 = scalar_select %p509, %s25, 1
      %p511 = scmp.lt.s32.totalorder %s508, 7
      %s512 = scalar_select %p511, %s508, 7
      %s513 = smul.addr %s512, 4
      %s514 = smul.addr %s510, 32
      %s515 = sadd.s32 %s513, %s514
      %s516 = smul.addr %s515, 4
      %s517 = scalar_lea.vmem %s1, %s516
      %s518 = smul.u32 4, %s26
      %s519 = sadd.s32 %s26, 1
      %s520 = smul.u32 %s519, 4
      %p521 = scmp.lt.s32.totalorder %s520, 7
      %s522 = scalar_select %p521, %s520, 7
      %p523 = scmp.lt.s32.totalorder %s25, 1
      %s524 = scalar_select %p523, %s25, 1
      %p525 = scmp.lt.s32.totalorder %s522, 7
      %s526 = scalar_select %p525, %s522, 7
      %s527 = smul.addr %s526, 4
      %s528 = smul.addr %s524, 32
      %s529 = sadd.s32 %s527, %s528
      %s530 = smul.addr %s529, 4
      %s531 = scalar_lea.vmem %s2, %s530
      %s532 = sadd.s32 %s26, 1
      %s533 = smul.u32 %s532, 4
      %p534 = scmp.lt.s32.totalorder %s533, 7
      %s535 = scalar_select %p534, %s533, 7
      %p536 = scmp.lt.s32.totalorder %s27, 0
      %s537 = scalar_select %p536, %s27, 0
      %s538 = smul.addr %s537, 4
      %s539 = scalar_lea.vmem %s6, %s538
      %p540 = scmp.lt.s32.totalorder %s27, 0
      %s541 = scalar_select %p540, %s27, 0
      %s542 = scalar_lea.vmem %s7, %s541
      %p543 = scmp.lt.s32.totalorder %s27, 0
      %s544 = scalar_select %p543, %s27, 0
      %s545 = scalar_lea.vmem %s8, %s544
      %p546 = scmp.lt.s32.totalorder %s25, 1
      %s547 = scalar_select %p546, %s25, 1
      %p548 = scmp.lt.s32.totalorder %s26, 1
      %s549 = scalar_select %p548, %s26, 1
      %p550 = scmp.lt.s32.totalorder %s27, 0
      %s551 = scalar_select %p550, %s27, 0
      %s552 = smul.addr %s549, 16
      %s553 = sadd.s32 %s551, %s552
      %s554 = smul.addr %s547, 32
      %s555 = sadd.s32 %s553, %s554
      %s556 = smul.addr %s555, 4
      %s557 = scalar_lea.vmem %s9, %s556
      %p559 = scmp.eq.s32.totalorder %s27, 0
      // Predicated region
      $region57: #{conv_block_forward_nhwc.1} parent=55 // pred_check
        %p560 = pneg %p559
      $region58: #{conv_block_forward_nhwc.1} parent=55 // pred_check_branch
        %562 = sbr.rel (%p560) target = $region60
      $region59: #{conv_block_forward_nhwc.1} parent=55 // pred_region
        %v563 = vld [vmem:[%s503] sm:$0xf]
        %v564 = vld [vmem:[%s503 + $0x4] sm:$0xf]
        %v565 = vld [vmem:[%s503 + $0x8] sm:$0xf]
        %v566 = vld [vmem:[%s503 + $0xc] sm:$0xf]
        %v567 = vld [vmem:[%s517] sm:$0xf]
        %v568 = vld [vmem:[%s517 + $0x4] sm:$0xf]
        %v569 = vld [vmem:[%s517 + $0x8] sm:$0xf]
        %v570 = vld [vmem:[%s517 + $0xc] sm:$0xf]
        %v571 = vld [vmem:[%s517 + $0x10] sm:$0xf]
        %v572 = vld [vmem:[%s517 + $0x14] sm:$0xf]
        %v573 = vld [vmem:[%s517 + $0x18] sm:$0xf]
        %v574 = vld [vmem:[%s517 + $0x1c] sm:$0xf]
        %v575 = vld [vmem:[%s517 + $0x20] sm:$0xf]
        %v576 = vld [vmem:[%s517 + $0x24] sm:$0xf]
        %v577 = vld [vmem:[%s517 + $0x28] sm:$0xf]
        %v578 = vld [vmem:[%s517 + $0x2c] sm:$0xf]
        %v579 = vld [vmem:[%s517 + $0x30] sm:$0xf]
        %v580 = vld [vmem:[%s517 + $0x34] sm:$0xf]
        %v581 = vld [vmem:[%s517 + $0x38] sm:$0xf]
        %v582 = vld [vmem:[%s517 + $0x3c] sm:$0xf]
        %v583 = vld [vmem:[%s531] sm:$0xf]
        %v584 = vld [vmem:[%s531 + $0x4] sm:$0xf]
        %v585 = vld [vmem:[%s531 + $0x8] sm:$0xf]
        %v586 = vld [vmem:[%s531 + $0xc] sm:$0xf]
        %p587 = scmp.gt.s32.totalorder %s26, 0
        %s588 = scalar_select %p587, 1, 0
        %v589 = vstv %s588
        %vm590 = vcmp.eq.s32.totalorder %v589, 1
        %v591 = vsel %vm590, %v563, 0
        %v592 = vsel %vm590, %v564, 0
        %v593 = vsel %vm590, %v565, 0
        %v594 = vsel %vm590, %v566, 0
        %p595 = scmp.lt.s32.totalorder %s26, 1
        %s596 = scalar_select %p595, 1, 0
        %v597 = vstv %s596
        %vm598 = vcmp.eq.s32.totalorder %v597, 1
        %v599 = vsel %vm598, %v583, 0
        %v600 = vsel %vm598, %v584, 0
        %v601 = vsel %vm598, %v585, 0
        %v602 = vsel %vm598, %v586, 0
        %v627 = vunpack.c.l.b16 %v591
        %v628 = vunpack.c.l.b16 %v592
        %v629 = vunpack.c.l.b16 %v593
        %v630 = vunpack.c.l.b16 %v594
        %v631 = vunpack.c.l.b16 %v567
        %v632 = vunpack.c.l.b16 %v568
        %v633 = vunpack.c.l.b16 %v569
        %v634 = vunpack.c.l.b16 %v570
        %v635 = vunpack.c.l.b16 %v571
        %v636 = vunpack.c.l.b16 %v572
        %v637 = vunpack.c.l.b16 %v573
        %v638 = vunpack.c.l.b16 %v574
        %v639 = vunpack.c.l.b16 %v575
        %v640 = vunpack.c.l.b16 %v576
        %v641 = vunpack.c.l.b16 %v577
        %v642 = vunpack.c.l.b16 %v578
        %v643 = vunpack.c.l.b16 %v579
        %v644 = vunpack.c.l.b16 %v580
        %v645 = vunpack.c.l.b16 %v581
        %v646 = vunpack.c.l.b16 %v582
        %v647 = vunpack.c.l.b16 %v599
        %v648 = vunpack.c.l.b16 %v600
        %v649 = vunpack.c.l.b16 %v601
        %v650 = vunpack.c.l.b16 %v602
        %v651 = vpack.c.b16 %v628, %v627
        %v652 = vpack.c.b16 %v630, %v629
        %v653 = vpack.c.b16 %v632, %v631
        %v654 = vpack.c.b16 %v634, %v633
        %v655 = vpack.c.b16 %v636, %v635
        %v656 = vpack.c.b16 %v638, %v637
        %v657 = vpack.c.b16 %v640, %v639
        %v658 = vpack.c.b16 %v642, %v641
        %v659 = vpack.c.b16 %v644, %v643
        %v660 = vpack.c.b16 %v646, %v645
        %v661 = vpack.c.b16 %v648, %v647
        %v662 = vpack.c.b16 %v650, %v649
        %v664 = vshrl.u32 %v651, 16
        %v666 = vrot.slane %v664, 7
        %v667 = vshll.u32 %v651, 16
        %v669 = vor.u32 %v666, %v667
        %v671 = vshrl.u32 %v652, 16
        %v673 = vrot.slane %v671, 7
        %v674 = vshll.u32 %v652, 16
        %v676 = vor.u32 %v673, %v674
        %v678 = vshrl.u32 %v653, 16
        %v680 = vrot.slane %v678, 7
        %v681 = vshll.u32 %v653, 16
        %v683 = vor.u32 %v680, %v681
        %v685 = vshrl.u32 %v654, 16
        %v687 = vrot.slane %v685, 7
        %v688 = vshll.u32 %v654, 16
        %v690 = vor.u32 %v687, %v688
        %v692 = vshrl.u32 %v655, 16
        %v694 = vrot.slane %v692, 7
        %v695 = vshll.u32 %v655, 16
        %v697 = vor.u32 %v694, %v695
        %v699 = vshrl.u32 %v656, 16
        %v701 = vrot.slane %v699, 7
        %v702 = vshll.u32 %v656, 16
        %v704 = vor.u32 %v701, %v702
        %v706 = vshrl.u32 %v657, 16
        %v708 = vrot.slane %v706, 7
        %v709 = vshll.u32 %v657, 16
        %v711 = vor.u32 %v708, %v709
        %v713 = vshrl.u32 %v658, 16
        %v715 = vrot.slane %v713, 7
        %v716 = vshll.u32 %v658, 16
        %v718 = vor.u32 %v715, %v716
        %v720 = vshrl.u32 %v659, 16
        %v722 = vrot.slane %v720, 7
        %v723 = vshll.u32 %v659, 16
        %v725 = vor.u32 %v722, %v723
        %v727 = vshrl.u32 %v660, 16
        %v729 = vrot.slane %v727, 7
        %v730 = vshll.u32 %v660, 16
        %v732 = vor.u32 %v729, %v730
        %v734 = vshrl.u32 %v661, 16
        %v736 = vrot.slane %v734, 7
        %v737 = vshll.u32 %v661, 16
        %v739 = vor.u32 %v736, %v737
        %v741 = vshrl.u32 %v662, 16
        %v743 = vrot.slane %v741, 7
        %v744 = vshll.u32 %v662, 16
        %v746 = vor.u32 %v743, %v744
        %vm771 = vcmask 1040384
        %vm772 = vsmask.f32 256
        %vm773 = vmand %vm771, %vm772
        %v774 = vsel %vm773, 0, %v669
        %v775 = vsel %vm773, 0, %v676
        %v776 = vsel %vm773, 0, %v683
        %v777 = vsel %vm773, 0, %v690
        %v778 = vsel %vm773, 0, %v697
        %v779 = vsel %vm773, 0, %v704
        %v780 = vsel %vm773, 0, %v711
        %v781 = vsel %vm773, 0, %v718
        %v782 = vsel %vm773, 0, %v725
        %v783 = vsel %vm773, 0, %v732
        %v784 = vsel %vm773, 0, %v739
        %v785 = vsel %vm773, 0, %v746
        %v786 = vsel %vm773, %v666, 0
        %v787 = vsel %vm773, %v673, 0
        %v788 = vsel %vm773, %v680, 0
        %v789 = vsel %vm773, %v687, 0
        %v790 = vsel %vm773, %v694, 0
        %v791 = vsel %vm773, %v701, 0
        %v792 = vsel %vm773, %v708, 0
        %v793 = vsel %vm773, %v715, 0
        %v794 = vsel %vm773, %v722, 0
        %v795 = vsel %vm773, %v729, 0
        %v796 = vsel %vm773, %v736, 0
        %v797 = vsel %vm773, %v743, 0
        %v798 = vld [vmem:[%s3] sm:$0x3]
        %vm799 = vsmask.f32 7424
        %v801 = vshrl.u32 %v774, 16
        %v803 = vshll.u32 %v774, 16
        %v805 = vrot.slane %v803, 1
        %v806 = vor.u32 %v801, %v805
        %v808 = vshll.u32 %v786, 16
        %v810 = vrot.slane %v808, 1
        %v811 = vsel %vm799, %v806, %v810
        %v813 = vshrl.u32 %v775, 16
        %v815 = vshll.u32 %v775, 16
        %v817 = vrot.slane %v815, 1
        %v818 = vor.u32 %v813, %v817
        %v820 = vshll.u32 %v787, 16
        %v822 = vrot.slane %v820, 1
        %v823 = vsel %vm799, %v818, %v822
        %v825 = vshrl.u32 %v776, 16
        %v827 = vshll.u32 %v776, 16
        %v829 = vrot.slane %v827, 1
        %v830 = vor.u32 %v825, %v829
        %v832 = vshll.u32 %v788, 16
        %v834 = vrot.slane %v832, 1
        %v835 = vsel %vm799, %v830, %v834
        %v837 = vshrl.u32 %v777, 16
        %v839 = vshll.u32 %v777, 16
        %v841 = vrot.slane %v839, 1
        %v842 = vor.u32 %v837, %v841
        %v844 = vshll.u32 %v789, 16
        %v846 = vrot.slane %v844, 1
        %v847 = vsel %vm799, %v842, %v846
        %v849 = vshrl.u32 %v778, 16
        %v851 = vshll.u32 %v778, 16
        %v853 = vrot.slane %v851, 1
        %v854 = vor.u32 %v849, %v853
        %v856 = vshll.u32 %v790, 16
        %v858 = vrot.slane %v856, 1
        %v859 = vsel %vm799, %v854, %v858
        %v861 = vshrl.u32 %v779, 16
        %v863 = vshll.u32 %v779, 16
        %v865 = vrot.slane %v863, 1
        %v866 = vor.u32 %v861, %v865
        %v868 = vshll.u32 %v791, 16
        %v870 = vrot.slane %v868, 1
        %v871 = vsel %vm799, %v866, %v870
        %v873 = vshrl.u32 %v780, 16
        %v875 = vshll.u32 %v780, 16
        %v877 = vrot.slane %v875, 1
        %v878 = vor.u32 %v873, %v877
        %v880 = vshll.u32 %v792, 16
        %v882 = vrot.slane %v880, 1
        %v883 = vsel %vm799, %v878, %v882
        %v885 = vshrl.u32 %v781, 16
        %v887 = vshll.u32 %v781, 16
        %v889 = vrot.slane %v887, 1
        %v890 = vor.u32 %v885, %v889
        %v892 = vshll.u32 %v793, 16
        %v894 = vrot.slane %v892, 1
        %v895 = vsel %vm799, %v890, %v894
        %v897 = vshrl.u32 %v782, 16
        %v899 = vshll.u32 %v782, 16
        %v901 = vrot.slane %v899, 1
        %v902 = vor.u32 %v897, %v901
        %v904 = vshll.u32 %v794, 16
        %v906 = vrot.slane %v904, 1
        %v907 = vsel %vm799, %v902, %v906
        %v909 = vshrl.u32 %v783, 16
        %v911 = vshll.u32 %v783, 16
        %v913 = vrot.slane %v911, 1
        %v914 = vor.u32 %v909, %v913
        %v916 = vshll.u32 %v795, 16
        %v918 = vrot.slane %v916, 1
        %v919 = vsel %vm799, %v914, %v918
        %s920 = scalar_lea.vmem %s3, 2
        %v921 = vld [vmem:[%s920] sm:$0x3]
        %vm922 = vcmask 31744
        %v924 = vsel %vm922, %v811, 0
        %v927 = vsel %vm922, %v823, 0
        %v930 = vsel %vm922, %v835, 0
        %v933 = vsel %vm922, %v847, 0
        %v936 = vsel %vm922, %v859, 0
        %v939 = vsel %vm922, %v871, 0
        %v942 = vsel %vm922, %v883, 0
        %v945 = vsel %vm922, %v895, 0
        %v948 = vsel %vm922, %v907, 0
        %v951 = vsel %vm922, %v919, 0
        %vm953 = vcmask 1041408
        %v955 = vsel %vm953, %v921, 0
        %957 = vmatprep.subr.bf16.mxu0 0
        %958 = vmatpush1.bf16.msra.mxu0 0
        %959 = vmatprep.subr.bf16.mxu0 0
        %960 = vmatpush1.bf16.msra.mxu0 0
        %961 = vmatprep.subr.bf16.mxu0 0
        %962 = vmatpush1.bf16.msra.mxu0 0
        %963 = vmatprep.subr.bf16.mxu0 0
        %964 = vmatpush1.bf16.msra.mxu0 0
        %965 = vmatprep.subr.bf16.mxu0 0
        %966 = vmatpush1.bf16.msra.mxu0 0
        %967 = vmatprep.subr.bf16.mxu0 0
        %968 = vmatpush1.bf16.msra.mxu0 0
        %969 = vmatprep.subr.bf16.mxu0 0
        %970 = vmatpush1.bf16.msra.mxu0 0
        %971 = vmatprep.subr.bf16.mxu0 0
        %972 = vmatpush1.bf16.msra.mxu0 %v955
        %973 = vmatprep.subr.bf16.mxu0 0
        %974 = vmatpush2.bf16.msra.mxu0 0
        %975 = vmatprep.subr.bf16.mxu0 0
        %976 = vmatpush2.bf16.msra.mxu0 0
        %977 = vmatprep.subr.bf16.mxu0 0
        %978 = vmatpush2.bf16.msra.mxu0 0
        %979 = vmatprep.subr.bf16.mxu0 0
        %980 = vmatpush2.bf16.msra.mxu0 0
        %981 = vmatprep.subr.bf16.mxu0 0
        %982 = vmatpush2.bf16.msra.mxu0 0
        %983 = vmatprep.subr.bf16.mxu0 0
        %984 = vmatpush2.bf16.msra.mxu0 0
        %985 = vmatprep.subr.bf16.mxu0 0
        %986 = vmatpush2.bf16.msra.mxu0 0
        %987 = vmatprep.subr.bf16.mxu0 0
        %988 = vmatpush2.bf16.msra.mxu0 0
        %989 = vmatprep.mubr.bf16.mxu0 0
        %990 = vmatmul.mubr.bf16.gmra.mxu0 %v924
        %v991 = vpop.f32.mrf.mxu0
        %v992 = vadd.f32 0.0, %v991
        %v993 = vpop.f32.mrf.mxu0
        %v994 = vpop.f32.mrf.mxu0
        %v995 = vadd.f32 0.0, %v994
        %v996 = vpop.f32.mrf.mxu0
        %997 = vmatprep.mubr.bf16.mxu0 0
        %998 = vmatmul.mubr.bf16.gmra.mxu0 %v927
        %v999 = vpop.f32.mrf.mxu0
        %v1000 = vadd.f32 0.0, %v999
        %v1001 = vpop.f32.mrf.mxu0
        %v1002 = vpop.f32.mrf.mxu0
        %v1003 = vadd.f32 0.0, %v1002
        %v1004 = vpop.f32.mrf.mxu0
        %1005 = vmatprep.mubr.bf16.mxu0 0
        %1006 = vmatmul.mubr.bf16.gmra.mxu0 %v930
        %v1007 = vpop.f32.mrf.mxu0
        %v1008 = vadd.f32 0.0, %v1007
        %v1009 = vpop.f32.mrf.mxu0
        %v1010 = vpop.f32.mrf.mxu0
        %v1011 = vadd.f32 0.0, %v1010
        %v1012 = vpop.f32.mrf.mxu0
        %1013 = vmatprep.mubr.bf16.mxu0 0
        %1014 = vmatmul.mubr.bf16.gmra.mxu0 %v933
        %v1015 = vpop.f32.mrf.mxu0
        %v1016 = vadd.f32 0.0, %v1015
        %v1017 = vpop.f32.mrf.mxu0
        %v1018 = vpop.f32.mrf.mxu0
        %v1019 = vadd.f32 0.0, %v1018
        %v1020 = vpop.f32.mrf.mxu0
        %1021 = vmatprep.mubr.bf16.mxu0 0
        %1022 = vmatmul.mubr.bf16.gmra.mxu0 %v936
        %v1023 = vpop.f32.mrf.mxu0
        %v1024 = vadd.f32 0.0, %v1023
        %v1025 = vpop.f32.mrf.mxu0
        %v1026 = vpop.f32.mrf.mxu0
        %v1027 = vadd.f32 0.0, %v1026
        %v1028 = vpop.f32.mrf.mxu0
        %1029 = vmatprep.mubr.bf16.mxu0 0
        %1030 = vmatmul.mubr.bf16.gmra.mxu0 %v939
        %v1031 = vpop.f32.mrf.mxu0
        %v1032 = vadd.f32 0.0, %v1031
        %v1033 = vpop.f32.mrf.mxu0
        %v1034 = vpop.f32.mrf.mxu0
        %v1035 = vadd.f32 0.0, %v1034
        %v1036 = vpop.f32.mrf.mxu0
        %1037 = vmatprep.mubr.bf16.mxu0 0
        %1038 = vmatmul.mubr.bf16.gmra.mxu0 %v942
        %v1039 = vpop.f32.mrf.mxu0
        %v1040 = vadd.f32 0.0, %v1039
        %v1041 = vpop.f32.mrf.mxu0
        %v1042 = vpop.f32.mrf.mxu0
        %v1043 = vadd.f32 0.0, %v1042
        %v1044 = vpop.f32.mrf.mxu0
        %1045 = vmatprep.mubr.bf16.mxu0 0
        %1046 = vmatmul.mubr.bf16.gmra.mxu0 %v945
        %v1047 = vpop.f32.mrf.mxu0
        %v1048 = vadd.f32 0.0, %v1047
        %v1049 = vpop.f32.mrf.mxu0
        %v1050 = vpop.f32.mrf.mxu0
        %v1051 = vadd.f32 0.0, %v1050
        %v1052 = vpop.f32.mrf.mxu0
        %1053 = vmatprep.mubr.bf16.mxu0 0
        %1054 = vmatmul.mubr.bf16.gmra.mxu0 %v948
        %v1055 = vpop.f32.mrf.mxu0
        %v1056 = vadd.f32 0.0, %v1055
        %v1057 = vpop.f32.mrf.mxu0
        %v1058 = vpop.f32.mrf.mxu0
        %v1059 = vadd.f32 0.0, %v1058
        %v1060 = vpop.f32.mrf.mxu0
        %1061 = vmatprep.mubr.bf16.mxu0 0
        %1062 = vmatmul.mubr.bf16.gmra.mxu0 %v951
        %v1063 = vpop.f32.mrf.mxu0
        %v1064 = vadd.f32 0.0, %v1063
        %v1065 = vpop.f32.mrf.mxu0
        %v1066 = vpop.f32.mrf.mxu0
        %v1067 = vadd.f32 0.0, %v1066
        %v1068 = vpop.f32.mrf.mxu0
        %1069 = vdwg.mxu0
        %v1070 = vsel %vm922, %v774, 0
        %v1072 = vsel %vm922, %v775, 0
        %v1074 = vsel %vm922, %v776, 0
        %v1076 = vsel %vm922, %v777, 0
        %v1078 = vsel %vm922, %v778, 0
        %v1080 = vsel %vm922, %v779, 0
        %v1082 = vsel %vm922, %v780, 0
        %v1084 = vsel %vm922, %v781, 0
        %v1086 = vsel %vm922, %v782, 0
        %v1088 = vsel %vm922, %v783, 0
        %v1091 = vsel %vm953, %v798, 0
        %1093 = vmatprep.subr.bf16.mxu0 0
        %1094 = vmatpush1.bf16.msra.mxu0 0
        %1095 = vmatprep.subr.bf16.mxu0 0
        %1096 = vmatpush1.bf16.msra.mxu0 0
        %1097 = vmatprep.subr.bf16.mxu0 0
        %1098 = vmatpush1.bf16.msra.mxu0 0
        %1099 = vmatprep.subr.bf16.mxu0 0
        %1100 = vmatpush1.bf16.msra.mxu0 0
        %1101 = vmatprep.subr.bf16.mxu0 0
        %1102 = vmatpush1.bf16.msra.mxu0 0
        %1103 = vmatprep.subr.bf16.mxu0 0
        %1104 = vmatpush1.bf16.msra.mxu0 0
        %1105 = vmatprep.subr.bf16.mxu0 0
        %1106 = vmatpush1.bf16.msra.mxu0 0
        %1107 = vmatprep.subr.bf16.mxu0 0
        %1108 = vmatpush1.bf16.msra.mxu0 %v1091
        %1109 = vmatprep.subr.bf16.mxu0 0
        %1110 = vmatpush2.bf16.msra.mxu0 0
        %1111 = vmatprep.subr.bf16.mxu0 0
        %1112 = vmatpush2.bf16.msra.mxu0 0
        %1113 = vmatprep.subr.bf16.mxu0 0
        %1114 = vmatpush2.bf16.msra.mxu0 0
        %1115 = vmatprep.subr.bf16.mxu0 0
        %1116 = vmatpush2.bf16.msra.mxu0 0
        %1117 = vmatprep.subr.bf16.mxu0 0
        %1118 = vmatpush2.bf16.msra.mxu0 0
        %1119 = vmatprep.subr.bf16.mxu0 0
        %1120 = vmatpush2.bf16.msra.mxu0 0
        %1121 = vmatprep.subr.bf16.mxu0 0
        %1122 = vmatpush2.bf16.msra.mxu0 0
        %1123 = vmatprep.subr.bf16.mxu0 0
        %1124 = vmatpush2.bf16.msra.mxu0 0
        %1125 = vmatprep.mubr.bf16.mxu0 0
        %1126 = vmatmul.mubr.bf16.gmra.mxu0 %v1070
        %v1127 = vpop.f32.mrf.mxu0
        %v1128 = vadd.f32 %v992, %v1127
        %v1129 = vpop.f32.mrf.mxu0
        %v1130 = vpop.f32.mrf.mxu0
        %v1131 = vadd.f32 %v995, %v1130
        %v1132 = vpop.f32.mrf.mxu0
        %1133 = vmatprep.mubr.bf16.mxu0 0
        %1134 = vmatmul.mubr.bf16.gmra.mxu0 %v1072
        %v1135 = vpop.f32.mrf.mxu0
        %v1136 = vadd.f32 %v1000, %v1135
        %v1137 = vpop.f32.mrf.mxu0
        %v1138 = vpop.f32.mrf.mxu0
        %v1139 = vadd.f32 %v1003, %v1138
        %v1140 = vpop.f32.mrf.mxu0
        %1141 = vmatprep.mubr.bf16.mxu0 0
        %1142 = vmatmul.mubr.bf16.gmra.mxu0 %v1074
        %v1143 = vpop.f32.mrf.mxu0
        %v1144 = vadd.f32 %v1008, %v1143
        %v1145 = vpop.f32.mrf.mxu0
        %v1146 = vpop.f32.mrf.mxu0
        %v1147 = vadd.f32 %v1011, %v1146
        %v1148 = vpop.f32.mrf.mxu0
        %1149 = vmatprep.mubr.bf16.mxu0 0
        %1150 = vmatmul.mubr.bf16.gmra.mxu0 %v1076
        %v1151 = vpop.f32.mrf.mxu0
        %v1152 = vadd.f32 %v1016, %v1151
        %v1153 = vpop.f32.mrf.mxu0
        %v1154 = vpop.f32.mrf.mxu0
        %v1155 = vadd.f32 %v1019, %v1154
        %v1156 = vpop.f32.mrf.mxu0
        %1157 = vmatprep.mubr.bf16.mxu0 0
        %1158 = vmatmul.mubr.bf16.gmra.mxu0 %v1078
        %v1159 = vpop.f32.mrf.mxu0
        %v1160 = vadd.f32 %v1024, %v1159
        %v1161 = vpop.f32.mrf.mxu0
        %v1162 = vpop.f32.mrf.mxu0
        %v1163 = vadd.f32 %v1027, %v1162
        %v1164 = vpop.f32.mrf.mxu0
        %1165 = vmatprep.mubr.bf16.mxu0 0
        %1166 = vmatmul.mubr.bf16.gmra.mxu0 %v1080
        %v1167 = vpop.f32.mrf.mxu0
        %v1168 = vadd.f32 %v1032, %v1167
        %v1169 = vpop.f32.mrf.mxu0
        %v1170 = vpop.f32.mrf.mxu0
        %v1171 = vadd.f32 %v1035, %v1170
        %v1172 = vpop.f32.mrf.mxu0
        %1173 = vmatprep.mubr.bf16.mxu0 0
        %1174 = vmatmul.mubr.bf16.gmra.mxu0 %v1082
        %v1175 = vpop.f32.mrf.mxu0
        %v1176 = vadd.f32 %v1040, %v1175
        %v1177 = vpop.f32.mrf.mxu0
        %v1178 = vpop.f32.mrf.mxu0
        %v1179 = vadd.f32 %v1043, %v1178
        %v1180 = vpop.f32.mrf.mxu0
        %1181 = vmatprep.mubr.bf16.mxu0 0
        %1182 = vmatmul.mubr.bf16.gmra.mxu0 %v1084
        %v1183 = vpop.f32.mrf.mxu0
        %v1184 = vadd.f32 %v1048, %v1183
        %v1185 = vpop.f32.mrf.mxu0
        %v1186 = vpop.f32.mrf.mxu0
        %v1187 = vadd.f32 %v1051, %v1186
        %v1188 = vpop.f32.mrf.mxu0
        %1189 = vmatprep.mubr.bf16.mxu0 0
        %1190 = vmatmul.mubr.bf16.gmra.mxu0 %v1086
        %v1191 = vpop.f32.mrf.mxu0
        %v1192 = vadd.f32 %v1056, %v1191
        %v1193 = vpop.f32.mrf.mxu0
        %v1194 = vpop.f32.mrf.mxu0
        %v1195 = vadd.f32 %v1059, %v1194
        %v1196 = vpop.f32.mrf.mxu0
        %1197 = vmatprep.mubr.bf16.mxu0 0
        %1198 = vmatmul.mubr.bf16.gmra.mxu0 %v1088
        %v1199 = vpop.f32.mrf.mxu0
        %v1200 = vadd.f32 %v1064, %v1199
        %v1201 = vpop.f32.mrf.mxu0
        %v1202 = vpop.f32.mrf.mxu0
        %v1203 = vadd.f32 %v1067, %v1202
        %v1204 = vpop.f32.mrf.mxu0
        %1205 = vdwg.mxu0
        %vm1226 = vcmask 1046528
        %v1227 = vrot.slane %v774, 1
        %v1228 = vrot.slane %v786, 1
        %v1229 = vsel %vm1226, %v1227, %v1228
        %v1230 = vrot.slane %v775, 1
        %v1231 = vrot.slane %v787, 1
        %v1232 = vsel %vm1226, %v1230, %v1231
        %v1233 = vrot.slane %v776, 1
        %v1234 = vrot.slane %v788, 1
        %v1235 = vsel %vm1226, %v1233, %v1234
        %v1236 = vrot.slane %v777, 1
        %v1237 = vrot.slane %v789, 1
        %v1238 = vsel %vm1226, %v1236, %v1237
        %v1239 = vrot.slane %v778, 1
        %v1240 = vrot.slane %v790, 1
        %v1241 = vsel %vm1226, %v1239, %v1240
        %v1242 = vrot.slane %v779, 1
        %v1243 = vrot.slane %v791, 1
        %v1244 = vsel %vm1226, %v1242, %v1243
        %v1245 = vrot.slane %v780, 1
        %v1246 = vrot.slane %v792, 1
        %v1247 = vsel %vm1226, %v1245, %v1246
        %v1248 = vrot.slane %v781, 1
        %v1249 = vrot.slane %v793, 1
        %v1250 = vsel %vm1226, %v1248, %v1249
        %v1251 = vrot.slane %v782, 1
        %v1252 = vrot.slane %v794, 1
        %v1253 = vsel %vm1226, %v1251, %v1252
        %v1254 = vrot.slane %v783, 1
        %v1255 = vrot.slane %v795, 1
        %v1256 = vsel %vm1226, %v1254, %v1255
        %s1257 = scalar_lea.vmem %s3, 4
        %v1258 = vld [vmem:[%s1257] sm:$0x3]
        %v1260 = vsel %vm922, %v1229, 0
        %v1263 = vsel %vm922, %v1232, 0
        %v1266 = vsel %vm922, %v1235, 0
        %v1269 = vsel %vm922, %v1238, 0
        %v1272 = vsel %vm922, %v1241, 0
        %v1275 = vsel %vm922, %v1244, 0
        %v1278 = vsel %vm922, %v1247, 0
        %v1281 = vsel %vm922, %v1250, 0
        %v1284 = vsel %vm922, %v1253, 0
        %v1287 = vsel %vm922, %v1256, 0
        %v1290 = vsel %vm953, %v1258, 0
        %1292 = vmatprep.subr.bf16.mxu0 0
        %1293 = vmatpush1.bf16.msra.mxu0 0
        %1294 = vmatprep.subr.bf16.mxu0 0
        %1295 = vmatpush1.bf16.msra.mxu0 0
        %1296 = vmatprep.subr.bf16.mxu0 0
        %1297 = vmatpush1.bf16.msra.mxu0 0
        %1298 = vmatprep.subr.bf16.mxu0 0
        %1299 = vmatpush1.bf16.msra.mxu0 0
        %1300 = vmatprep.subr.bf16.mxu0 0
        %1301 = vmatpush1.bf16.msra.mxu0 0
        %1302 = vmatprep.subr.bf16.mxu0 0
        %1303 = vmatpush1.bf16.msra.mxu0 0
        %1304 = vmatprep.subr.bf16.mxu0 0
        %1305 = vmatpush1.bf16.msra.mxu0 0
        %1306 = vmatprep.subr.bf16.mxu0 0
        %1307 = vmatpush1.bf16.msra.mxu0 %v1290
        %1308 = vmatprep.subr.bf16.mxu0 0
        %1309 = vmatpush2.bf16.msra.mxu0 0
        %1310 = vmatprep.subr.bf16.mxu0 0
        %1311 = vmatpush2.bf16.msra.mxu0 0
        %1312 = vmatprep.subr.bf16.mxu0 0
        %1313 = vmatpush2.bf16.msra.mxu0 0
        %1314 = vmatprep.subr.bf16.mxu0 0
        %1315 = vmatpush2.bf16.msra.mxu0 0
        %1316 = vmatprep.subr.bf16.mxu0 0
        %1317 = vmatpush2.bf16.msra.mxu0 0
        %1318 = vmatprep.subr.bf16.mxu0 0
        %1319 = vmatpush2.bf16.msra.mxu0 0
        %1320 = vmatprep.subr.bf16.mxu0 0
        %1321 = vmatpush2.bf16.msra.mxu0 0
        %1322 = vmatprep.subr.bf16.mxu0 0
        %1323 = vmatpush2.bf16.msra.mxu0 0
        %1324 = vmatprep.mubr.bf16.mxu0 0
        %1325 = vmatmul.mubr.bf16.gmra.mxu0 %v1260
        %v1326 = vpop.f32.mrf.mxu0
        %v1327 = vadd.f32 0.0, %v1326
        %v1328 = vpop.f32.mrf.mxu0
        %v1329 = vpop.f32.mrf.mxu0
        %v1330 = vadd.f32 0.0, %v1329
        %v1331 = vpop.f32.mrf.mxu0
        %1332 = vmatprep.mubr.bf16.mxu0 0
        %1333 = vmatmul.mubr.bf16.gmra.mxu0 %v1263
        %v1334 = vpop.f32.mrf.mxu0
        %v1335 = vadd.f32 0.0, %v1334
        %v1336 = vpop.f32.mrf.mxu0
        %v1337 = vpop.f32.mrf.mxu0
        %v1338 = vadd.f32 0.0, %v1337
        %v1339 = vpop.f32.mrf.mxu0
        %1340 = vmatprep.mubr.bf16.mxu0 0
        %1341 = vmatmul.mubr.bf16.gmra.mxu0 %v1266
        %v1342 = vpop.f32.mrf.mxu0
        %v1343 = vadd.f32 0.0, %v1342
        %v1344 = vpop.f32.mrf.mxu0
        %v1345 = vpop.f32.mrf.mxu0
        %v1346 = vadd.f32 0.0, %v1345
        %v1347 = vpop.f32.mrf.mxu0
        %1348 = vmatprep.mubr.bf16.mxu0 0
        %1349 = vmatmul.mubr.bf16.gmra.mxu0 %v1269
        %v1350 = vpop.f32.mrf.mxu0
        %v1351 = vadd.f32 0.0, %v1350
        %v1352 = vpop.f32.mrf.mxu0
        %v1353 = vpop.f32.mrf.mxu0
        %v1354 = vadd.f32 0.0, %v1353
        %v1355 = vpop.f32.mrf.mxu0
        %1356 = vmatprep.mubr.bf16.mxu0 0
        %1357 = vmatmul.mubr.bf16.gmra.mxu0 %v1272
        %v1358 = vpop.f32.mrf.mxu0
        %v1359 = vadd.f32 0.0, %v1358
        %v1360 = vpop.f32.mrf.mxu0
        %v1361 = vpop.f32.mrf.mxu0
        %v1362 = vadd.f32 0.0, %v1361
        %v1363 = vpop.f32.mrf.mxu0
        %1364 = vmatprep.mubr.bf16.mxu0 0
        %1365 = vmatmul.mubr.bf16.gmra.mxu0 %v1275
        %v1366 = vpop.f32.mrf.mxu0
        %v1367 = vadd.f32 0.0, %v1366
        %v1368 = vpop.f32.mrf.mxu0
        %v1369 = vpop.f32.mrf.mxu0
        %v1370 = vadd.f32 0.0, %v1369
        %v1371 = vpop.f32.mrf.mxu0
        %1372 = vmatprep.mubr.bf16.mxu0 0
        %1373 = vmatmul.mubr.bf16.gmra.mxu0 %v1278
        %v1374 = vpop.f32.mrf.mxu0
        %v1375 = vadd.f32 0.0, %v1374
        %v1376 = vpop.f32.mrf.mxu0
        %v1377 = vpop.f32.mrf.mxu0
        %v1378 = vadd.f32 0.0, %v1377
        %v1379 = vpop.f32.mrf.mxu0
        %1380 = vmatprep.mubr.bf16.mxu0 0
        %1381 = vmatmul.mubr.bf16.gmra.mxu0 %v1281
        %v1382 = vpop.f32.mrf.mxu0
        %v1383 = vadd.f32 0.0, %v1382
        %v1384 = vpop.f32.mrf.mxu0
        %v1385 = vpop.f32.mrf.mxu0
        %v1386 = vadd.f32 0.0, %v1385
        %v1387 = vpop.f32.mrf.mxu0
        %1388 = vmatprep.mubr.bf16.mxu0 0
        %1389 = vmatmul.mubr.bf16.gmra.mxu0 %v1284
        %v1390 = vpop.f32.mrf.mxu0
        %v1391 = vadd.f32 0.0, %v1390
        %v1392 = vpop.f32.mrf.mxu0
        %v1393 = vpop.f32.mrf.mxu0
        %v1394 = vadd.f32 0.0, %v1393
        %v1395 = vpop.f32.mrf.mxu0
        %1396 = vmatprep.mubr.bf16.mxu0 0
        %1397 = vmatmul.mubr.bf16.gmra.mxu0 %v1287
        %v1398 = vpop.f32.mrf.mxu0
        %v1399 = vadd.f32 0.0, %v1398
        %v1400 = vpop.f32.mrf.mxu0
        %v1401 = vpop.f32.mrf.mxu0
        %v1402 = vadd.f32 0.0, %v1401
        %v1403 = vpop.f32.mrf.mxu0
        %1404 = vdwg.mxu0
        %v1405 = vadd.f32 %v1128, %v1327
        %v1406 = vadd.f32 %v1131, %v1330
        %v1407 = vadd.f32 %v1136, %v1335
        %v1408 = vadd.f32 %v1139, %v1338
        %v1409 = vadd.f32 %v1144, %v1343
        %v1410 = vadd.f32 %v1147, %v1346
        %v1411 = vadd.f32 %v1152, %v1351
        %v1412 = vadd.f32 %v1155, %v1354
        %v1413 = vadd.f32 %v1160, %v1359
        %v1414 = vadd.f32 %v1163, %v1362
        %v1415 = vadd.f32 %v1168, %v1367
        %v1416 = vadd.f32 %v1171, %v1370
        %v1417 = vadd.f32 %v1176, %v1375
        %v1418 = vadd.f32 %v1179, %v1378
        %v1419 = vadd.f32 %v1184, %v1383
        %v1420 = vadd.f32 %v1187, %v1386
        %v1421 = vadd.f32 %v1192, %v1391
        %v1422 = vadd.f32 %v1195, %v1394
        %v1423 = vadd.f32 %v1200, %v1399
        %v1424 = vadd.f32 %v1203, %v1402
        %s1425 = scalar_lea.vmem %s3, 6
        %v1426 = vld [vmem:[%s1425] sm:$0x3]
        %v1428 = vsel %vm922, %v784, 0
        %v1431 = vsel %vm953, %v1426, 0
        %1433 = vmatprep.subr.bf16.mxu0 0
        %1434 = vmatpush1.bf16.msra.mxu0 0
        %1435 = vmatprep.subr.bf16.mxu0 0
        %1436 = vmatpush1.bf16.msra.mxu0 0
        %1437 = vmatprep.subr.bf16.mxu0 0
        %1438 = vmatpush1.bf16.msra.mxu0 0
        %1439 = vmatprep.subr.bf16.mxu0 0
        %1440 = vmatpush1.bf16.msra.mxu0 0
        %1441 = vmatprep.subr.bf16.mxu0 0
        %1442 = vmatpush1.bf16.msra.mxu0 0
        %1443 = vmatprep.subr.bf16.mxu0 0
        %1444 = vmatpush1.bf16.msra.mxu0 0
        %1445 = vmatprep.subr.bf16.mxu0 0
        %1446 = vmatpush1.bf16.msra.mxu0 0
        %1447 = vmatprep.subr.bf16.mxu0 0
        %1448 = vmatpush1.bf16.msra.mxu0 %v1431
        %1449 = vmatprep.subr.bf16.mxu0 0
        %1450 = vmatpush2.bf16.msra.mxu0 0
        %1451 = vmatprep.subr.bf16.mxu0 0
        %1452 = vmatpush2.bf16.msra.mxu0 0
        %1453 = vmatprep.subr.bf16.mxu0 0
        %1454 = vmatpush2.bf16.msra.mxu0 0
        %1455 = vmatprep.subr.bf16.mxu0 0
        %1456 = vmatpush2.bf16.msra.mxu0 0
        %1457 = vmatprep.subr.bf16.mxu0 0
        %1458 = vmatpush2.bf16.msra.mxu0 0
        %1459 = vmatprep.subr.bf16.mxu0 0
        %1460 = vmatpush2.bf16.msra.mxu0 0
        %1461 = vmatprep.subr.bf16.mxu0 0
        %1462 = vmatpush2.bf16.msra.mxu0 0
        %1463 = vmatprep.subr.bf16.mxu0 0
        %1464 = vmatpush2.bf16.msra.mxu0 0
        %1465 = vmatprep.mubr.bf16.mxu0 0
        %1466 = vmatmul.mubr.bf16.gmra.mxu0 %v1072
        %v1467 = vpop.f32.mrf.mxu0
        %v1468 = vadd.f32 0.0, %v1467
        %v1469 = vpop.f32.mrf.mxu0
        %v1470 = vpop.f32.mrf.mxu0
        %v1471 = vadd.f32 0.0, %v1470
        %v1472 = vpop.f32.mrf.mxu0
        %1473 = vmatprep.mubr.bf16.mxu0 0
        %1474 = vmatmul.mubr.bf16.gmra.mxu0 %v1074
        %v1475 = vpop.f32.mrf.mxu0
        %v1476 = vadd.f32 0.0, %v1475
        %v1477 = vpop.f32.mrf.mxu0
        %v1478 = vpop.f32.mrf.mxu0
        %v1479 = vadd.f32 0.0, %v1478
        %v1480 = vpop.f32.mrf.mxu0
        %1481 = vmatprep.mubr.bf16.mxu0 0
        %1482 = vmatmul.mubr.bf16.gmra.mxu0 %v1076
        %v1483 = vpop.f32.mrf.mxu0
        %v1484 = vadd.f32 0.0, %v1483
        %v1485 = vpop.f32.mrf.mxu0
        %v1486 = vpop.f32.mrf.mxu0
        %v1487 = vadd.f32 0.0, %v1486
        %v1488 = vpop.f32.mrf.mxu0
        %1489 = vmatprep.mubr.bf16.mxu0 0
        %1490 = vmatmul.mubr.bf16.gmra.mxu0 %v1078
        %v1491 = vpop.f32.mrf.mxu0
        %v1492 = vadd.f32 0.0, %v1491
        %v1493 = vpop.f32.mrf.mxu0
        %v1494 = vpop.f32.mrf.mxu0
        %v1495 = vadd.f32 0.0, %v1494
        %v1496 = vpop.f32.mrf.mxu0
        %1497 = vmatprep.mubr.bf16.mxu0 0
        %1498 = vmatmul.mubr.bf16.gmra.mxu0 %v1080
        %v1499 = vpop.f32.mrf.mxu0
        %v1500 = vadd.f32 0.0, %v1499
        %v1501 = vpop.f32.mrf.mxu0
        %v1502 = vpop.f32.mrf.mxu0
        %v1503 = vadd.f32 0.0, %v1502
        %v1504 = vpop.f32.mrf.mxu0
        %1505 = vmatprep.mubr.bf16.mxu0 0
        %1506 = vmatmul.mubr.bf16.gmra.mxu0 %v1082
        %v1507 = vpop.f32.mrf.mxu0
        %v1508 = vadd.f32 0.0, %v1507
        %v1509 = vpop.f32.mrf.mxu0
        %v1510 = vpop.f32.mrf.mxu0
        %v1511 = vadd.f32 0.0, %v1510
        %v1512 = vpop.f32.mrf.mxu0
        %1513 = vmatprep.mubr.bf16.mxu0 0
        %1514 = vmatmul.mubr.bf16.gmra.mxu0 %v1084
        %v1515 = vpop.f32.mrf.mxu0
        %v1516 = vadd.f32 0.0, %v1515
        %v1517 = vpop.f32.mrf.mxu0
        %v1518 = vpop.f32.mrf.mxu0
        %v1519 = vadd.f32 0.0, %v1518
        %v1520 = vpop.f32.mrf.mxu0
        %1521 = vmatprep.mubr.bf16.mxu0 0
        %1522 = vmatmul.mubr.bf16.gmra.mxu0 %v1086
        %v1523 = vpop.f32.mrf.mxu0
        %v1524 = vadd.f32 0.0, %v1523
        %v1525 = vpop.f32.mrf.mxu0
        %v1526 = vpop.f32.mrf.mxu0
        %v1527 = vadd.f32 0.0, %v1526
        %v1528 = vpop.f32.mrf.mxu0
        %1529 = vmatprep.mubr.bf16.mxu0 0
        %1530 = vmatmul.mubr.bf16.gmra.mxu0 %v1088
        %v1531 = vpop.f32.mrf.mxu0
        %v1532 = vadd.f32 0.0, %v1531
        %v1533 = vpop.f32.mrf.mxu0
        %v1534 = vpop.f32.mrf.mxu0
        %v1535 = vadd.f32 0.0, %v1534
        %v1536 = vpop.f32.mrf.mxu0
        %1537 = vmatprep.mubr.bf16.mxu0 0
        %1538 = vmatmul.mubr.bf16.gmra.mxu0 %v1428
        %v1539 = vpop.f32.mrf.mxu0
        %v1540 = vadd.f32 0.0, %v1539
        %v1541 = vpop.f32.mrf.mxu0
        %v1542 = vpop.f32.mrf.mxu0
        %v1543 = vadd.f32 0.0, %v1542
        %v1544 = vpop.f32.mrf.mxu0
        %1545 = vdwg.mxu0
        %v1546 = vadd.f32 %v1405, %v1468
        %v1547 = vadd.f32 %v1406, %v1471
        %v1548 = vadd.f32 %v1407, %v1476
        %v1549 = vadd.f32 %v1408, %v1479
        %v1550 = vadd.f32 %v1409, %v1484
        %v1551 = vadd.f32 %v1410, %v1487
        %v1552 = vadd.f32 %v1411, %v1492
        %v1553 = vadd.f32 %v1412, %v1495
        %v1554 = vadd.f32 %v1413, %v1500
        %v1555 = vadd.f32 %v1414, %v1503
        %v1556 = vadd.f32 %v1415, %v1508
        %v1557 = vadd.f32 %v1416, %v1511
        %v1558 = vadd.f32 %v1417, %v1516
        %v1559 = vadd.f32 %v1418, %v1519
        %v1560 = vadd.f32 %v1419, %v1524
        %v1561 = vadd.f32 %v1420, %v1527
        %v1562 = vadd.f32 %v1421, %v1532
        %v1563 = vadd.f32 %v1422, %v1535
        %v1564 = vadd.f32 %v1423, %v1540
        %v1565 = vadd.f32 %v1424, %v1543
        %v1566 = vshrl.u32 %v784, 16
        %v1568 = vshll.u32 %v784, 16
        %v1570 = vrot.slane %v1568, 1
        %v1571 = vor.u32 %v1566, %v1570
        %v1573 = vshll.u32 %v796, 16
        %v1575 = vrot.slane %v1573, 1
        %v1576 = vsel %vm799, %v1571, %v1575
        %s1577 = scalar_lea.vmem %s3, 8
        %v1578 = vld [vmem:[%s1577] sm:$0x3]
        %v1580 = vsel %vm922, %v1576, 0
        %v1583 = vsel %vm953, %v1578, 0
        %1585 = vmatprep.subr.bf16.mxu0 0
        %1586 = vmatpush1.bf16.msra.mxu0 0
        %1587 = vmatprep.subr.bf16.mxu0 0
        %1588 = vmatpush1.bf16.msra.mxu0 0
        %1589 = vmatprep.subr.bf16.mxu0 0
        %1590 = vmatpush1.bf16.msra.mxu0 0
        %1591 = vmatprep.subr.bf16.mxu0 0
        %1592 = vmatpush1.bf16.msra.mxu0 0
        %1593 = vmatprep.subr.bf16.mxu0 0
        %1594 = vmatpush1.bf16.msra.mxu0 0
        %1595 = vmatprep.subr.bf16.mxu0 0
        %1596 = vmatpush1.bf16.msra.mxu0 0
        %1597 = vmatprep.subr.bf16.mxu0 0
        %1598 = vmatpush1.bf16.msra.mxu0 0
        %1599 = vmatprep.subr.bf16.mxu0 0
        %1600 = vmatpush1.bf16.msra.mxu0 %v1583
        %1601 = vmatprep.subr.bf16.mxu0 0
        %1602 = vmatpush2.bf16.msra.mxu0 0
        %1603 = vmatprep.subr.bf16.mxu0 0
        %1604 = vmatpush2.bf16.msra.mxu0 0
        %1605 = vmatprep.subr.bf16.mxu0 0
        %1606 = vmatpush2.bf16.msra.mxu0 0
        %1607 = vmatprep.subr.bf16.mxu0 0
        %1608 = vmatpush2.bf16.msra.mxu0 0
        %1609 = vmatprep.subr.bf16.mxu0 0
        %1610 = vmatpush2.bf16.msra.mxu0 0
        %1611 = vmatprep.subr.bf16.mxu0 0
        %1612 = vmatpush2.bf16.msra.mxu0 0
        %1613 = vmatprep.subr.bf16.mxu0 0
        %1614 = vmatpush2.bf16.msra.mxu0 0
        %1615 = vmatprep.subr.bf16.mxu0 0
        %1616 = vmatpush2.bf16.msra.mxu0 0
        %1617 = vmatprep.mubr.bf16.mxu0 0
        %1618 = vmatmul.mubr.bf16.gmra.mxu0 %v927
        %v1619 = vpop.f32.mrf.mxu0
        %v1620 = vadd.f32 0.0, %v1619
        %v1621 = vpop.f32.mrf.mxu0
        %v1622 = vpop.f32.mrf.mxu0
        %v1623 = vadd.f32 0.0, %v1622
        %v1624 = vpop.f32.mrf.mxu0
        %1625 = vmatprep.mubr.bf16.mxu0 0
        %1626 = vmatmul.mubr.bf16.gmra.mxu0 %v930
        %v1627 = vpop.f32.mrf.mxu0
        %v1628 = vadd.f32 0.0, %v1627
        %v1629 = vpop.f32.mrf.mxu0
        %v1630 = vpop.f32.mrf.mxu0
        %v1631 = vadd.f32 0.0, %v1630
        %v1632 = vpop.f32.mrf.mxu0
        %1633 = vmatprep.mubr.bf16.mxu0 0
        %1634 = vmatmul.mubr.bf16.gmra.mxu0 %v933
        %v1635 = vpop.f32.mrf.mxu0
        %v1636 = vadd.f32 0.0, %v1635
        %v1637 = vpop.f32.mrf.mxu0
        %v1638 = vpop.f32.mrf.mxu0
        %v1639 = vadd.f32 0.0, %v1638
        %v1640 = vpop.f32.mrf.mxu0
        %1641 = vmatprep.mubr.bf16.mxu0 0
        %1642 = vmatmul.mubr.bf16.gmra.mxu0 %v936
        %v1643 = vpop.f32.mrf.mxu0
        %v1644 = vadd.f32 0.0, %v1643
        %v1645 = vpop.f32.mrf.mxu0
        %v1646 = vpop.f32.mrf.mxu0
        %v1647 = vadd.f32 0.0, %v1646
        %v1648 = vpop.f32.mrf.mxu0
        %1649 = vmatprep.mubr.bf16.mxu0 0
        %1650 = vmatmul.mubr.bf16.gmra.mxu0 %v939
        %v1651 = vpop.f32.mrf.mxu0
        %v1652 = vadd.f32 0.0, %v1651
        %v1653 = vpop.f32.mrf.mxu0
        %v1654 = vpop.f32.mrf.mxu0
        %v1655 = vadd.f32 0.0, %v1654
        %v1656 = vpop.f32.mrf.mxu0
        %1657 = vmatprep.mubr.bf16.mxu0 0
        %1658 = vmatmul.mubr.bf16.gmra.mxu0 %v942
        %v1659 = vpop.f32.mrf.mxu0
        %v1660 = vadd.f32 0.0, %v1659
        %v1661 = vpop.f32.mrf.mxu0
        %v1662 = vpop.f32.mrf.mxu0
        %v1663 = vadd.f32 0.0, %v1662
        %v1664 = vpop.f32.mrf.mxu0
        %1665 = vmatprep.mubr.bf16.mxu0 0
        %1666 = vmatmul.mubr.bf16.gmra.mxu0 %v945
        %v1667 = vpop.f32.mrf.mxu0
        %v1668 = vadd.f32 0.0, %v1667
        %v1669 = vpop.f32.mrf.mxu0
        %v1670 = vpop.f32.mrf.mxu0
        %v1671 = vadd.f32 0.0, %v1670
        %v1672 = vpop.f32.mrf.mxu0
        %1673 = vmatprep.mubr.bf16.mxu0 0
        %1674 = vmatmul.mubr.bf16.gmra.mxu0 %v948
        %v1675 = vpop.f32.mrf.mxu0
        %v1676 = vadd.f32 0.0, %v1675
        %v1677 = vpop.f32.mrf.mxu0
        %v1678 = vpop.f32.mrf.mxu0
        %v1679 = vadd.f32 0.0, %v1678
        %v1680 = vpop.f32.mrf.mxu0
        %1681 = vmatprep.mubr.bf16.mxu0 0
        %1682 = vmatmul.mubr.bf16.gmra.mxu0 %v951
        %v1683 = vpop.f32.mrf.mxu0
        %v1684 = vadd.f32 0.0, %v1683
        %v1685 = vpop.f32.mrf.mxu0
        %v1686 = vpop.f32.mrf.mxu0
        %v1687 = vadd.f32 0.0, %v1686
        %v1688 = vpop.f32.mrf.mxu0
        %1689 = vmatprep.mubr.bf16.mxu0 0
        %1690 = vmatmul.mubr.bf16.gmra.mxu0 %v1580
        %v1691 = vpop.f32.mrf.mxu0
        %v1692 = vadd.f32 0.0, %v1691
        %v1693 = vpop.f32.mrf.mxu0
        %v1694 = vpop.f32.mrf.mxu0
        %v1695 = vadd.f32 0.0, %v1694
        %v1696 = vpop.f32.mrf.mxu0
        %1697 = vdwg.mxu0
        %v1698 = vadd.f32 %v1546, %v1620
        %v1699 = vadd.f32 %v1547, %v1623
        %v1700 = vadd.f32 %v1548, %v1628
        %v1701 = vadd.f32 %v1549, %v1631
        %v1702 = vadd.f32 %v1550, %v1636
        %v1703 = vadd.f32 %v1551, %v1639
        %v1704 = vadd.f32 %v1552, %v1644
        %v1705 = vadd.f32 %v1553, %v1647
        %v1706 = vadd.f32 %v1554, %v1652
        %v1707 = vadd.f32 %v1555, %v1655
        %v1708 = vadd.f32 %v1556, %v1660
        %v1709 = vadd.f32 %v1557, %v1663
        %v1710 = vadd.f32 %v1558, %v1668
        %v1711 = vadd.f32 %v1559, %v1671
        %v1712 = vadd.f32 %v1560, %v1676
        %v1713 = vadd.f32 %v1561, %v1679
        %v1714 = vadd.f32 %v1562, %v1684
        %v1715 = vadd.f32 %v1563, %v1687
        %v1716 = vadd.f32 %v1564, %v1692
        %v1717 = vadd.f32 %v1565, %v1695
        %v1720 = vrot.slane %v784, 1
        %v1721 = vrot.slane %v796, 1
        %v1722 = vsel %vm1226, %v1720, %v1721
        %s1723 = scalar_lea.vmem %s3, 10
        %v1724 = vld [vmem:[%s1723] sm:$0x3]
        %v1726 = vsel %vm922, %v1722, 0
        %v1729 = vsel %vm953, %v1724, 0
        %1731 = vmatprep.subr.bf16.mxu0 0
        %1732 = vmatpush1.bf16.msra.mxu0 0
        %1733 = vmatprep.subr.bf16.mxu0 0
        %1734 = vmatpush1.bf16.msra.mxu0 0
        %1735 = vmatprep.subr.bf16.mxu0 0
        %1736 = vmatpush1.bf16.msra.mxu0 0
        %1737 = vmatprep.subr.bf16.mxu0 0
        %1738 = vmatpush1.bf16.msra.mxu0 0
        %1739 = vmatprep.subr.bf16.mxu0 0
        %1740 = vmatpush1.bf16.msra.mxu0 0
        %1741 = vmatprep.subr.bf16.mxu0 0
        %1742 = vmatpush1.bf16.msra.mxu0 0
        %1743 = vmatprep.subr.bf16.mxu0 0
        %1744 = vmatpush1.bf16.msra.mxu0 0
        %1745 = vmatprep.subr.bf16.mxu0 0
        %1746 = vmatpush1.bf16.msra.mxu0 %v1729
        %1747 = vmatprep.subr.bf16.mxu0 0
        %1748 = vmatpush2.bf16.msra.mxu0 0
        %1749 = vmatprep.subr.bf16.mxu0 0
        %1750 = vmatpush2.bf16.msra.mxu0 0
        %1751 = vmatprep.subr.bf16.mxu0 0
        %1752 = vmatpush2.bf16.msra.mxu0 0
        %1753 = vmatprep.subr.bf16.mxu0 0
        %1754 = vmatpush2.bf16.msra.mxu0 0
        %1755 = vmatprep.subr.bf16.mxu0 0
        %1756 = vmatpush2.bf16.msra.mxu0 0
        %1757 = vmatprep.subr.bf16.mxu0 0
        %1758 = vmatpush2.bf16.msra.mxu0 0
        %1759 = vmatprep.subr.bf16.mxu0 0
        %1760 = vmatpush2.bf16.msra.mxu0 0
        %1761 = vmatprep.subr.bf16.mxu0 0
        %1762 = vmatpush2.bf16.msra.mxu0 0
        %1763 = vmatprep.mubr.bf16.mxu0 0
        %1764 = vmatmul.mubr.bf16.gmra.mxu0 %v1263
        %v1765 = vpop.f32.mrf.mxu0
        %v1766 = vadd.f32 0.0, %v1765
        %v1767 = vpop.f32.mrf.mxu0
        %v1768 = vpop.f32.mrf.mxu0
        %v1769 = vadd.f32 0.0, %v1768
        %v1770 = vpop.f32.mrf.mxu0
        %1771 = vmatprep.mubr.bf16.mxu0 0
        %1772 = vmatmul.mubr.bf16.gmra.mxu0 %v1266
        %v1773 = vpop.f32.mrf.mxu0
        %v1774 = vadd.f32 0.0, %v1773
        %v1775 = vpop.f32.mrf.mxu0
        %v1776 = vpop.f32.mrf.mxu0
        %v1777 = vadd.f32 0.0, %v1776
        %v1778 = vpop.f32.mrf.mxu0
        %1779 = vmatprep.mubr.bf16.mxu0 0
        %1780 = vmatmul.mubr.bf16.gmra.mxu0 %v1269
        %v1781 = vpop.f32.mrf.mxu0
        %v1782 = vadd.f32 0.0, %v1781
        %v1783 = vpop.f32.mrf.mxu0
        %v1784 = vpop.f32.mrf.mxu0
        %v1785 = vadd.f32 0.0, %v1784
        %v1786 = vpop.f32.mrf.mxu0
        %1787 = vmatprep.mubr.bf16.mxu0 0
        %1788 = vmatmul.mubr.bf16.gmra.mxu0 %v1272
        %v1789 = vpop.f32.mrf.mxu0
        %v1790 = vadd.f32 0.0, %v1789
        %v1791 = vpop.f32.mrf.mxu0
        %v1792 = vpop.f32.mrf.mxu0
        %v1793 = vadd.f32 0.0, %v1792
        %v1794 = vpop.f32.mrf.mxu0
        %1795 = vmatprep.mubr.bf16.mxu0 0
        %1796 = vmatmul.mubr.bf16.gmra.mxu0 %v1275
        %v1797 = vpop.f32.mrf.mxu0
        %v1798 = vadd.f32 0.0, %v1797
        %v1799 = vpop.f32.mrf.mxu0
        %v1800 = vpop.f32.mrf.mxu0
        %v1801 = vadd.f32 0.0, %v1800
        %v1802 = vpop.f32.mrf.mxu0
        %1803 = vmatprep.mubr.bf16.mxu0 0
        %1804 = vmatmul.mubr.bf16.gmra.mxu0 %v1278
        %v1805 = vpop.f32.mrf.mxu0
        %v1806 = vadd.f32 0.0, %v1805
        %v1807 = vpop.f32.mrf.mxu0
        %v1808 = vpop.f32.mrf.mxu0
        %v1809 = vadd.f32 0.0, %v1808
        %v1810 = vpop.f32.mrf.mxu0
        %1811 = vmatprep.mubr.bf16.mxu0 0
        %1812 = vmatmul.mubr.bf16.gmra.mxu0 %v1281
        %v1813 = vpop.f32.mrf.mxu0
        %v1814 = vadd.f32 0.0, %v1813
        %v1815 = vpop.f32.mrf.mxu0
        %v1816 = vpop.f32.mrf.mxu0
        %v1817 = vadd.f32 0.0, %v1816
        %v1818 = vpop.f32.mrf.mxu0
        %1819 = vmatprep.mubr.bf16.mxu0 0
        %1820 = vmatmul.mubr.bf16.gmra.mxu0 %v1284
        %v1821 = vpop.f32.mrf.mxu0
        %v1822 = vadd.f32 0.0, %v1821
        %v1823 = vpop.f32.mrf.mxu0
        %v1824 = vpop.f32.mrf.mxu0
        %v1825 = vadd.f32 0.0, %v1824
        %v1826 = vpop.f32.mrf.mxu0
        %1827 = vmatprep.mubr.bf16.mxu0 0
        %1828 = vmatmul.mubr.bf16.gmra.mxu0 %v1287
        %v1829 = vpop.f32.mrf.mxu0
        %v1830 = vadd.f32 0.0, %v1829
        %v1831 = vpop.f32.mrf.mxu0
        %v1832 = vpop.f32.mrf.mxu0
        %v1833 = vadd.f32 0.0, %v1832
        %v1834 = vpop.f32.mrf.mxu0
        %1835 = vmatprep.mubr.bf16.mxu0 0
        %1836 = vmatmul.mubr.bf16.gmra.mxu0 %v1726
        %v1837 = vpop.f32.mrf.mxu0
        %v1838 = vadd.f32 0.0, %v1837
        %v1839 = vpop.f32.mrf.mxu0
        %v1840 = vpop.f32.mrf.mxu0
        %v1841 = vadd.f32 0.0, %v1840
        %v1842 = vpop.f32.mrf.mxu0
        %1843 = vdwg.mxu0
        %v1844 = vadd.f32 %v1698, %v1766
        %v1845 = vadd.f32 %v1699, %v1769
        %v1846 = vadd.f32 %v1700, %v1774
        %v1847 = vadd.f32 %v1701, %v1777
        %v1848 = vadd.f32 %v1702, %v1782
        %v1849 = vadd.f32 %v1703, %v1785
        %v1850 = vadd.f32 %v1704, %v1790
        %v1851 = vadd.f32 %v1705, %v1793
        %v1852 = vadd.f32 %v1706, %v1798
        %v1853 = vadd.f32 %v1707, %v1801
        %v1854 = vadd.f32 %v1708, %v1806
        %v1855 = vadd.f32 %v1709, %v1809
        %v1856 = vadd.f32 %v1710, %v1814
        %v1857 = vadd.f32 %v1711, %v1817
        %v1858 = vadd.f32 %v1712, %v1822
        %v1859 = vadd.f32 %v1713, %v1825
        %v1860 = vadd.f32 %v1714, %v1830
        %v1861 = vadd.f32 %v1715, %v1833
        %v1862 = vadd.f32 %v1716, %v1838
        %v1863 = vadd.f32 %v1717, %v1841
        %s1864 = scalar_lea.vmem %s3, 12
        %v1865 = vld [vmem:[%s1864] sm:$0x3]
        %v1867 = vsel %vm922, %v785, 0
        %v1870 = vsel %vm953, %v1865, 0
        %1872 = vmatprep.subr.bf16.mxu0 0
        %1873 = vmatpush1.bf16.msra.mxu0 0
        %1874 = vmatprep.subr.bf16.mxu0 0
        %1875 = vmatpush1.bf16.msra.mxu0 0
        %1876 = vmatprep.subr.bf16.mxu0 0
        %1877 = vmatpush1.bf16.msra.mxu0 0
        %1878 = vmatprep.subr.bf16.mxu0 0
        %1879 = vmatpush1.bf16.msra.mxu0 0
        %1880 = vmatprep.subr.bf16.mxu0 0
        %1881 = vmatpush1.bf16.msra.mxu0 0
        %1882 = vmatprep.subr.bf16.mxu0 0
        %1883 = vmatpush1.bf16.msra.mxu0 0
        %1884 = vmatprep.subr.bf16.mxu0 0
        %1885 = vmatpush1.bf16.msra.mxu0 0
        %1886 = vmatprep.subr.bf16.mxu0 0
        %1887 = vmatpush1.bf16.msra.mxu0 %v1870
        %1888 = vmatprep.subr.bf16.mxu0 0
        %1889 = vmatpush2.bf16.msra.mxu0 0
        %1890 = vmatprep.subr.bf16.mxu0 0
        %1891 = vmatpush2.bf16.msra.mxu0 0
        %1892 = vmatprep.subr.bf16.mxu0 0
        %1893 = vmatpush2.bf16.msra.mxu0 0
        %1894 = vmatprep.subr.bf16.mxu0 0
        %1895 = vmatpush2.bf16.msra.mxu0 0
        %1896 = vmatprep.subr.bf16.mxu0 0
        %1897 = vmatpush2.bf16.msra.mxu0 0
        %1898 = vmatprep.subr.bf16.mxu0 0
        %1899 = vmatpush2.bf16.msra.mxu0 0
        %1900 = vmatprep.subr.bf16.mxu0 0
        %1901 = vmatpush2.bf16.msra.mxu0 0
        %1902 = vmatprep.subr.bf16.mxu0 0
        %1903 = vmatpush2.bf16.msra.mxu0 0
        %1904 = vmatprep.mubr.bf16.mxu0 0
        %1905 = vmatmul.mubr.bf16.gmra.mxu0 %v1074
        %v1906 = vpop.f32.mrf.mxu0
        %v1907 = vadd.f32 0.0, %v1906
        %v1908 = vpop.f32.mrf.mxu0
        %v1909 = vpop.f32.mrf.mxu0
        %v1910 = vadd.f32 0.0, %v1909
        %v1911 = vpop.f32.mrf.mxu0
        %1912 = vmatprep.mubr.bf16.mxu0 0
        %1913 = vmatmul.mubr.bf16.gmra.mxu0 %v1076
        %v1914 = vpop.f32.mrf.mxu0
        %v1915 = vadd.f32 0.0, %v1914
        %v1916 = vpop.f32.mrf.mxu0
        %v1917 = vpop.f32.mrf.mxu0
        %v1918 = vadd.f32 0.0, %v1917
        %v1919 = vpop.f32.mrf.mxu0
        %1920 = vmatprep.mubr.bf16.mxu0 0
        %1921 = vmatmul.mubr.bf16.gmra.mxu0 %v1078
        %v1922 = vpop.f32.mrf.mxu0
        %v1923 = vadd.f32 0.0, %v1922
        %v1924 = vpop.f32.mrf.mxu0
        %v1925 = vpop.f32.mrf.mxu0
        %v1926 = vadd.f32 0.0, %v1925
        %v1927 = vpop.f32.mrf.mxu0
        %1928 = vmatprep.mubr.bf16.mxu0 0
        %1929 = vmatmul.mubr.bf16.gmra.mxu0 %v1080
        %v1930 = vpop.f32.mrf.mxu0
        %v1931 = vadd.f32 0.0, %v1930
        %v1932 = vpop.f32.mrf.mxu0
        %v1933 = vpop.f32.mrf.mxu0
        %v1934 = vadd.f32 0.0, %v1933
        %v1935 = vpop.f32.mrf.mxu0
        %1936 = vmatprep.mubr.bf16.mxu0 0
        %1937 = vmatmul.mubr.bf16.gmra.mxu0 %v1082
        %v1938 = vpop.f32.mrf.mxu0
        %v1939 = vadd.f32 0.0, %v1938
        %v1940 = vpop.f32.mrf.mxu0
        %v1941 = vpop.f32.mrf.mxu0
        %v1942 = vadd.f32 0.0, %v1941
        %v1943 = vpop.f32.mrf.mxu0
        %1944 = vmatprep.mubr.bf16.mxu0 0
        %1945 = vmatmul.mubr.bf16.gmra.mxu0 %v1084
        %v1946 = vpop.f32.mrf.mxu0
        %v1947 = vadd.f32 0.0, %v1946
        %v1948 = vpop.f32.mrf.mxu0
        %v1949 = vpop.f32.mrf.mxu0
        %v1950 = vadd.f32 0.0, %v1949
        %v1951 = vpop.f32.mrf.mxu0
        %1952 = vmatprep.mubr.bf16.mxu0 0
        %1953 = vmatmul.mubr.bf16.gmra.mxu0 %v1086
        %v1954 = vpop.f32.mrf.mxu0
        %v1955 = vadd.f32 0.0, %v1954
        %v1956 = vpop.f32.mrf.mxu0
        %v1957 = vpop.f32.mrf.mxu0
        %v1958 = vadd.f32 0.0, %v1957
        %v1959 = vpop.f32.mrf.mxu0
        %1960 = vmatprep.mubr.bf16.mxu0 0
        %1961 = vmatmul.mubr.bf16.gmra.mxu0 %v1088
        %v1962 = vpop.f32.mrf.mxu0
        %v1963 = vadd.f32 0.0, %v1962
        %v1964 = vpop.f32.mrf.mxu0
        %v1965 = vpop.f32.mrf.mxu0
        %v1966 = vadd.f32 0.0, %v1965
        %v1967 = vpop.f32.mrf.mxu0
        %1968 = vmatprep.mubr.bf16.mxu0 0
        %1969 = vmatmul.mubr.bf16.gmra.mxu0 %v1428
        %v1970 = vpop.f32.mrf.mxu0
        %v1971 = vadd.f32 0.0, %v1970
        %v1972 = vpop.f32.mrf.mxu0
        %v1973 = vpop.f32.mrf.mxu0
        %v1974 = vadd.f32 0.0, %v1973
        %v1975 = vpop.f32.mrf.mxu0
        %1976 = vmatprep.mubr.bf16.mxu0 0
        %1977 = vmatmul.mubr.bf16.gmra.mxu0 %v1867
        %v1978 = vpop.f32.mrf.mxu0
        %v1979 = vadd.f32 0.0, %v1978
        %v1980 = vpop.f32.mrf.mxu0
        %v1981 = vpop.f32.mrf.mxu0
        %v1982 = vadd.f32 0.0, %v1981
        %v1983 = vpop.f32.mrf.mxu0
        %1984 = vdwg.mxu0
        %v1985 = vadd.f32 %v1844, %v1907
        %v1986 = vadd.f32 %v1845, %v1910
        %v1987 = vadd.f32 %v1846, %v1915
        %v1988 = vadd.f32 %v1847, %v1918
        %v1989 = vadd.f32 %v1848, %v1923
        %v1990 = vadd.f32 %v1849, %v1926
        %v1991 = vadd.f32 %v1850, %v1931
        %v1992 = vadd.f32 %v1851, %v1934
        %v1993 = vadd.f32 %v1852, %v1939
        %v1994 = vadd.f32 %v1853, %v1942
        %v1995 = vadd.f32 %v1854, %v1947
        %v1996 = vadd.f32 %v1855, %v1950
        %v1997 = vadd.f32 %v1856, %v1955
        %v1998 = vadd.f32 %v1857, %v1958
        %v1999 = vadd.f32 %v1858, %v1963
        %v2000 = vadd.f32 %v1859, %v1966
        %v2001 = vadd.f32 %v1860, %v1971
        %v2002 = vadd.f32 %v1861, %v1974
        %v2003 = vadd.f32 %v1862, %v1979
        %v2004 = vadd.f32 %v1863, %v1982
        %v2005 = vshrl.u32 %v785, 16
        %v2007 = vshll.u32 %v785, 16
        %v2009 = vrot.slane %v2007, 1
        %v2010 = vor.u32 %v2005, %v2009
        %v2012 = vshll.u32 %v797, 16
        %v2014 = vrot.slane %v2012, 1
        %v2015 = vsel %vm799, %v2010, %v2014
        %s2016 = scalar_lea.vmem %s3, 14
        %v2017 = vld [vmem:[%s2016] sm:$0x3]
        %v2019 = vsel %vm922, %v2015, 0
        %v2022 = vsel %vm953, %v2017, 0
        %2024 = vmatprep.subr.bf16.mxu0 0
        %2025 = vmatpush1.bf16.msra.mxu0 0
        %2026 = vmatprep.subr.bf16.mxu0 0
        %2027 = vmatpush1.bf16.msra.mxu0 0
        %2028 = vmatprep.subr.bf16.mxu0 0
        %2029 = vmatpush1.bf16.msra.mxu0 0
        %2030 = vmatprep.subr.bf16.mxu0 0
        %2031 = vmatpush1.bf16.msra.mxu0 0
        %2032 = vmatprep.subr.bf16.mxu0 0
        %2033 = vmatpush1.bf16.msra.mxu0 0
        %2034 = vmatprep.subr.bf16.mxu0 0
        %2035 = vmatpush1.bf16.msra.mxu0 0
        %2036 = vmatprep.subr.bf16.mxu0 0
        %2037 = vmatpush1.bf16.msra.mxu0 0
        %2038 = vmatprep.subr.bf16.mxu0 0
        %2039 = vmatpush1.bf16.msra.mxu0 %v2022
        %2040 = vmatprep.subr.bf16.mxu0 0
        %2041 = vmatpush2.bf16.msra.mxu0 0
        %2042 = vmatprep.subr.bf16.mxu0 0
        %2043 = vmatpush2.bf16.msra.mxu0 0
        %2044 = vmatprep.subr.bf16.mxu0 0
        %2045 = vmatpush2.bf16.msra.mxu0 0
        %2046 = vmatprep.subr.bf16.mxu0 0
        %2047 = vmatpush2.bf16.msra.mxu0 0
        %2048 = vmatprep.subr.bf16.mxu0 0
        %2049 = vmatpush2.bf16.msra.mxu0 0
        %2050 = vmatprep.subr.bf16.mxu0 0
        %2051 = vmatpush2.bf16.msra.mxu0 0
        %2052 = vmatprep.subr.bf16.mxu0 0
        %2053 = vmatpush2.bf16.msra.mxu0 0
        %2054 = vmatprep.subr.bf16.mxu0 0
        %2055 = vmatpush2.bf16.msra.mxu0 0
        %2056 = vmatprep.mubr.bf16.mxu0 0
        %2057 = vmatmul.mubr.bf16.gmra.mxu0 %v930
        %v2058 = vpop.f32.mrf.mxu0
        %v2059 = vadd.f32 0.0, %v2058
        %v2060 = vpop.f32.mrf.mxu0
        %v2061 = vpop.f32.mrf.mxu0
        %v2062 = vadd.f32 0.0, %v2061
        %v2063 = vpop.f32.mrf.mxu0
        %2064 = vmatprep.mubr.bf16.mxu0 0
        %2065 = vmatmul.mubr.bf16.gmra.mxu0 %v933
        %v2066 = vpop.f32.mrf.mxu0
        %v2067 = vadd.f32 0.0, %v2066
        %v2068 = vpop.f32.mrf.mxu0
        %v2069 = vpop.f32.mrf.mxu0
        %v2070 = vadd.f32 0.0, %v2069
        %v2071 = vpop.f32.mrf.mxu0
        %2072 = vmatprep.mubr.bf16.mxu0 0
        %2073 = vmatmul.mubr.bf16.gmra.mxu0 %v936
        %v2074 = vpop.f32.mrf.mxu0
        %v2075 = vadd.f32 0.0, %v2074
        %v2076 = vpop.f32.mrf.mxu0
        %v2077 = vpop.f32.mrf.mxu0
        %v2078 = vadd.f32 0.0, %v2077
        %v2079 = vpop.f32.mrf.mxu0
        %2080 = vmatprep.mubr.bf16.mxu0 0
        %2081 = vmatmul.mubr.bf16.gmra.mxu0 %v939
        %v2082 = vpop.f32.mrf.mxu0
        %v2083 = vadd.f32 0.0, %v2082
        %v2084 = vpop.f32.mrf.mxu0
        %v2085 = vpop.f32.mrf.mxu0
        %v2086 = vadd.f32 0.0, %v2085
        %v2087 = vpop.f32.mrf.mxu0
        %2088 = vmatprep.mubr.bf16.mxu0 0
        %2089 = vmatmul.mubr.bf16.gmra.mxu0 %v942
        %v2090 = vpop.f32.mrf.mxu0
        %v2091 = vadd.f32 0.0, %v2090
        %v2092 = vpop.f32.mrf.mxu0
        %v2093 = vpop.f32.mrf.mxu0
        %v2094 = vadd.f32 0.0, %v2093
        %v2095 = vpop.f32.mrf.mxu0
        %2096 = vmatprep.mubr.bf16.mxu0 0
        %2097 = vmatmul.mubr.bf16.gmra.mxu0 %v945
        %v2098 = vpop.f32.mrf.mxu0
        %v2099 = vadd.f32 0.0, %v2098
        %v2100 = vpop.f32.mrf.mxu0
        %v2101 = vpop.f32.mrf.mxu0
        %v2102 = vadd.f32 0.0, %v2101
        %v2103 = vpop.f32.mrf.mxu0
        %2104 = vmatprep.mubr.bf16.mxu0 0
        %2105 = vmatmul.mubr.bf16.gmra.mxu0 %v948
        %v2106 = vpop.f32.mrf.mxu0
        %v2107 = vadd.f32 0.0, %v2106
        %v2108 = vpop.f32.mrf.mxu0
        %v2109 = vpop.f32.mrf.mxu0
        %v2110 = vadd.f32 0.0, %v2109
        %v2111 = vpop.f32.mrf.mxu0
        %2112 = vmatprep.mubr.bf16.mxu0 0
        %2113 = vmatmul.mubr.bf16.gmra.mxu0 %v951
        %v2114 = vpop.f32.mrf.mxu0
        %v2115 = vadd.f32 0.0, %v2114
        %v2116 = vpop.f32.mrf.mxu0
        %v2117 = vpop.f32.mrf.mxu0
        %v2118 = vadd.f32 0.0, %v2117
        %v2119 = vpop.f32.mrf.mxu0
        %2120 = vmatprep.mubr.bf16.mxu0 0
        %2121 = vmatmul.mubr.bf16.gmra.mxu0 %v1580
        %v2122 = vpop.f32.mrf.mxu0
        %v2123 = vadd.f32 0.0, %v2122
        %v2124 = vpop.f32.mrf.mxu0
        %v2125 = vpop.f32.mrf.mxu0
        %v2126 = vadd.f32 0.0, %v2125
        %v2127 = vpop.f32.mrf.mxu0
        %2128 = vmatprep.mubr.bf16.mxu0 0
        %2129 = vmatmul.mubr.bf16.gmra.mxu0 %v2019
        %v2130 = vpop.f32.mrf.mxu0
        %v2131 = vadd.f32 0.0, %v2130
        %v2132 = vpop.f32.mrf.mxu0
        %v2133 = vpop.f32.mrf.mxu0
        %v2134 = vadd.f32 0.0, %v2133
        %v2135 = vpop.f32.mrf.mxu0
        %2136 = vdwg.mxu0
        %v2137 = vadd.f32 %v1985, %v2059
        %v2138 = vadd.f32 %v1986, %v2062
        %v2139 = vadd.f32 %v1987, %v2067
        %v2140 = vadd.f32 %v1988, %v2070
        %v2141 = vadd.f32 %v1989, %v2075
        %v2142 = vadd.f32 %v1990, %v2078
        %v2143 = vadd.f32 %v1991, %v2083
        %v2144 = vadd.f32 %v1992, %v2086
        %v2145 = vadd.f32 %v1993, %v2091
        %v2146 = vadd.f32 %v1994, %v2094
        %v2147 = vadd.f32 %v1995, %v2099
        %v2148 = vadd.f32 %v1996, %v2102
        %v2149 = vadd.f32 %v1997, %v2107
        %v2150 = vadd.f32 %v1998, %v2110
        %v2151 = vadd.f32 %v1999, %v2115
        %v2152 = vadd.f32 %v2000, %v2118
        %v2153 = vadd.f32 %v2001, %v2123
        %v2154 = vadd.f32 %v2002, %v2126
        %v2155 = vadd.f32 %v2003, %v2131
        %v2156 = vadd.f32 %v2004, %v2134
        %v2159 = vrot.slane %v785, 1
        %v2160 = vrot.slane %v797, 1
        %v2161 = vsel %vm1226, %v2159, %v2160
        %s2162 = scalar_lea.vmem %s3, 16
        %v2163 = vld [vmem:[%s2162] sm:$0x3]
        %v2165 = vsel %vm922, %v2161, 0
        %v2168 = vsel %vm953, %v2163, 0
        %2170 = vmatprep.subr.bf16.mxu0 0
        %2171 = vmatpush1.bf16.msra.mxu0 0
        %2172 = vmatprep.subr.bf16.mxu0 0
        %2173 = vmatpush1.bf16.msra.mxu0 0
        %2174 = vmatprep.subr.bf16.mxu0 0
        %2175 = vmatpush1.bf16.msra.mxu0 0
        %2176 = vmatprep.subr.bf16.mxu0 0
        %2177 = vmatpush1.bf16.msra.mxu0 0
        %2178 = vmatprep.subr.bf16.mxu0 0
        %2179 = vmatpush1.bf16.msra.mxu0 0
        %2180 = vmatprep.subr.bf16.mxu0 0
        %2181 = vmatpush1.bf16.msra.mxu0 0
        %2182 = vmatprep.subr.bf16.mxu0 0
        %2183 = vmatpush1.bf16.msra.mxu0 0
        %2184 = vmatprep.subr.bf16.mxu0 0
        %2185 = vmatpush1.bf16.msra.mxu0 %v2168
        %2186 = vmatprep.subr.bf16.mxu0 0
        %2187 = vmatpush2.bf16.msra.mxu0 0
        %2188 = vmatprep.subr.bf16.mxu0 0
        %2189 = vmatpush2.bf16.msra.mxu0 0
        %2190 = vmatprep.subr.bf16.mxu0 0
        %2191 = vmatpush2.bf16.msra.mxu0 0
        %2192 = vmatprep.subr.bf16.mxu0 0
        %2193 = vmatpush2.bf16.msra.mxu0 0
        %2194 = vmatprep.subr.bf16.mxu0 0
        %2195 = vmatpush2.bf16.msra.mxu0 0
        %2196 = vmatprep.subr.bf16.mxu0 0
        %2197 = vmatpush2.bf16.msra.mxu0 0
        %2198 = vmatprep.subr.bf16.mxu0 0
        %2199 = vmatpush2.bf16.msra.mxu0 0
        %2200 = vmatprep.subr.bf16.mxu0 0
        %2201 = vmatpush2.bf16.msra.mxu0 0
        %2202 = vmatprep.mubr.bf16.mxu0 0
        %2203 = vmatmul.mubr.bf16.gmra.mxu0 %v1266
        %v2204 = vpop.f32.mrf.mxu0
        %v2205 = vadd.f32 0.0, %v2204
        %v2206 = vpop.f32.mrf.mxu0
        %v2207 = vpop.f32.mrf.mxu0
        %v2208 = vadd.f32 0.0, %v2207
        %v2209 = vpop.f32.mrf.mxu0
        %2210 = vmatprep.mubr.bf16.mxu0 0
        %2211 = vmatmul.mubr.bf16.gmra.mxu0 %v1269
        %v2212 = vpop.f32.mrf.mxu0
        %v2213 = vadd.f32 0.0, %v2212
        %v2214 = vpop.f32.mrf.mxu0
        %v2215 = vpop.f32.mrf.mxu0
        %v2216 = vadd.f32 0.0, %v2215
        %v2217 = vpop.f32.mrf.mxu0
        %2218 = vmatprep.mubr.bf16.mxu0 0
        %2219 = vmatmul.mubr.bf16.gmra.mxu0 %v1272
        %v2220 = vpop.f32.mrf.mxu0
        %v2221 = vadd.f32 0.0, %v2220
        %v2222 = vpop.f32.mrf.mxu0
        %v2223 = vpop.f32.mrf.mxu0
        %v2224 = vadd.f32 0.0, %v2223
        %v2225 = vpop.f32.mrf.mxu0
        %2226 = vmatprep.mubr.bf16.mxu0 0
        %2227 = vmatmul.mubr.bf16.gmra.mxu0 %v1275
        %v2228 = vpop.f32.mrf.mxu0
        %v2229 = vadd.f32 0.0, %v2228
        %v2230 = vpop.f32.mrf.mxu0
        %v2231 = vpop.f32.mrf.mxu0
        %v2232 = vadd.f32 0.0, %v2231
        %v2233 = vpop.f32.mrf.mxu0
        %2234 = vmatprep.mubr.bf16.mxu0 0
        %2235 = vmatmul.mubr.bf16.gmra.mxu0 %v1278
        %v2236 = vpop.f32.mrf.mxu0
        %v2237 = vadd.f32 0.0, %v2236
        %v2238 = vpop.f32.mrf.mxu0
        %v2239 = vpop.f32.mrf.mxu0
        %v2240 = vadd.f32 0.0, %v2239
        %v2241 = vpop.f32.mrf.mxu0
        %2242 = vmatprep.mubr.bf16.mxu0 0
        %2243 = vmatmul.mubr.bf16.gmra.mxu0 %v1281
        %v2244 = vpop.f32.mrf.mxu0
        %v2245 = vadd.f32 0.0, %v2244
        %v2246 = vpop.f32.mrf.mxu0
        %v2247 = vpop.f32.mrf.mxu0
        %v2248 = vadd.f32 0.0, %v2247
        %v2249 = vpop.f32.mrf.mxu0
        %2250 = vmatprep.mubr.bf16.mxu0 0
        %2251 = vmatmul.mubr.bf16.gmra.mxu0 %v1284
        %v2252 = vpop.f32.mrf.mxu0
        %v2253 = vadd.f32 0.0, %v2252
        %v2254 = vpop.f32.mrf.mxu0
        %v2255 = vpop.f32.mrf.mxu0
        %v2256 = vadd.f32 0.0, %v2255
        %v2257 = vpop.f32.mrf.mxu0
        %2258 = vmatprep.mubr.bf16.mxu0 0
        %2259 = vmatmul.mubr.bf16.gmra.mxu0 %v1287
        %v2260 = vpop.f32.mrf.mxu0
        %v2261 = vadd.f32 0.0, %v2260
        %v2262 = vpop.f32.mrf.mxu0
        %v2263 = vpop.f32.mrf.mxu0
        %v2264 = vadd.f32 0.0, %v2263
        %v2265 = vpop.f32.mrf.mxu0
        %2266 = vmatprep.mubr.bf16.mxu0 0
        %2267 = vmatmul.mubr.bf16.gmra.mxu0 %v1726
        %v2268 = vpop.f32.mrf.mxu0
        %v2269 = vadd.f32 0.0, %v2268
        %v2270 = vpop.f32.mrf.mxu0
        %v2271 = vpop.f32.mrf.mxu0
        %v2272 = vadd.f32 0.0, %v2271
        %v2273 = vpop.f32.mrf.mxu0
        %2274 = vmatprep.mubr.bf16.mxu0 0
        %2275 = vmatmul.mubr.bf16.gmra.mxu0 %v2165
        %v2276 = vpop.f32.mrf.mxu0
        %v2277 = vadd.f32 0.0, %v2276
        %v2278 = vpop.f32.mrf.mxu0
        %v2279 = vpop.f32.mrf.mxu0
        %v2280 = vadd.f32 0.0, %v2279
        %v2281 = vpop.f32.mrf.mxu0
        %2282 = vdwg.mxu0
        %v2283 = vadd.f32 %v2137, %v2205
        %v2284 = vadd.f32 %v2138, %v2208
        %v2285 = vadd.f32 %v2139, %v2213
        %v2286 = vadd.f32 %v2140, %v2216
        %v2287 = vadd.f32 %v2141, %v2221
        %v2288 = vadd.f32 %v2142, %v2224
        %v2289 = vadd.f32 %v2143, %v2229
        %v2290 = vadd.f32 %v2144, %v2232
        %v2291 = vadd.f32 %v2145, %v2237
        %v2292 = vadd.f32 %v2146, %v2240
        %v2293 = vadd.f32 %v2147, %v2245
        %v2294 = vadd.f32 %v2148, %v2248
        %v2295 = vadd.f32 %v2149, %v2253
        %v2296 = vadd.f32 %v2150, %v2256
        %v2297 = vadd.f32 %v2151, %v2261
        %v2298 = vadd.f32 %v2152, %v2264
        %v2299 = vadd.f32 %v2153, %v2269
        %v2300 = vadd.f32 %v2154, %v2272
        %v2301 = vadd.f32 %v2155, %v2277
        %v2302 = vadd.f32 %v2156, %v2280
        %v2303 = vld [vmem:[%s4] sm:$0x1]
        %v2305 = vlaneseq
        %v2306 = vshrl.u32 %v2305, 7
        %v2307 = vsub.s32 0, %v2306
        %v2308 = vrot.slane %v2303, %v2307
        %v2310 = vmul.f32 %v2283, %v2308
        %v2311 = vmul.f32 %v2284, %v2308
        %v2312 = vmul.f32 %v2285, %v2308
        %v2313 = vmul.f32 %v2286, %v2308
        %v2314 = vmul.f32 %v2287, %v2308
        %v2315 = vmul.f32 %v2288, %v2308
        %v2316 = vmul.f32 %v2289, %v2308
        %v2317 = vmul.f32 %v2290, %v2308
        %v2318 = vmul.f32 %v2291, %v2308
        %v2319 = vmul.f32 %v2292, %v2308
        %v2320 = vmul.f32 %v2293, %v2308
        %v2321 = vmul.f32 %v2294, %v2308
        %v2322 = vmul.f32 %v2295, %v2308
        %v2323 = vmul.f32 %v2296, %v2308
        %v2324 = vmul.f32 %v2297, %v2308
        %v2325 = vmul.f32 %v2298, %v2308
        %v2326 = vmul.f32 %v2299, %v2308
        %v2327 = vmul.f32 %v2300, %v2308
        %v2328 = vmul.f32 %v2301, %v2308
        %v2329 = vmul.f32 %v2302, %v2308
        %v2330 = vld [vmem:[%s5] sm:$0x1]
        %v2332 = vlaneseq
        %v2333 = vshrl.u32 %v2332, 7
        %v2334 = vsub.s32 0, %v2333
        %v2335 = vrot.slane %v2330, %v2334
        %v2337 = vadd.f32 %v2310, %v2335
        %v2338 = vadd.f32 %v2311, %v2335
        %v2339 = vadd.f32 %v2312, %v2335
        %v2340 = vadd.f32 %v2313, %v2335
        %v2341 = vadd.f32 %v2314, %v2335
        %v2342 = vadd.f32 %v2315, %v2335
        %v2343 = vadd.f32 %v2316, %v2335
        %v2344 = vadd.f32 %v2317, %v2335
        %v2345 = vadd.f32 %v2318, %v2335
        %v2346 = vadd.f32 %v2319, %v2335
        %v2347 = vadd.f32 %v2320, %v2335
        %v2348 = vadd.f32 %v2321, %v2335
        %v2349 = vadd.f32 %v2322, %v2335
        %v2350 = vadd.f32 %v2323, %v2335
        %v2351 = vadd.f32 %v2324, %v2335
        %v2352 = vadd.f32 %v2325, %v2335
        %v2353 = vadd.f32 %v2326, %v2335
        %v2354 = vadd.f32 %v2327, %v2335
        %v2355 = vadd.f32 %v2328, %v2335
        %v2356 = vadd.f32 %v2329, %v2335
        %v2357 = vmax.f32 %v2337, 0.0
        %v2358 = vmax.f32 %v2338, 0.0
        %v2359 = vmax.f32 %v2339, 0.0
        %v2360 = vmax.f32 %v2340, 0.0
        %v2361 = vmax.f32 %v2341, 0.0
        %v2362 = vmax.f32 %v2342, 0.0
        %v2363 = vmax.f32 %v2343, 0.0
        %v2364 = vmax.f32 %v2344, 0.0
        %v2365 = vmax.f32 %v2345, 0.0
        %v2366 = vmax.f32 %v2346, 0.0
        %v2367 = vmax.f32 %v2347, 0.0
        %v2368 = vmax.f32 %v2348, 0.0
        %v2369 = vmax.f32 %v2349, 0.0
        %v2370 = vmax.f32 %v2350, 0.0
        %v2371 = vmax.f32 %v2351, 0.0
        %v2372 = vmax.f32 %v2352, 0.0
        %v2373 = vmax.f32 %v2353, 0.0
        %v2374 = vmax.f32 %v2354, 0.0
        %v2375 = vmax.f32 %v2355, 0.0
        %v2376 = vmax.f32 %v2356, 0.0
        %v2377 = vsel %vm590, 1, 0
        %v2378 = vsel %vm598, 1, 0
        %vm2379 = vcmp.eq.s32.totalorder %v2377, 1
        %vm2380 = vcmp.eq.s32.totalorder %v2378, 1
        %v2381 = vsel %vm2379, %v2357, 0.0
        %v2382 = vsel %vm2379, %v2358, 0.0
        %v2383 = vsel 1, %v2359, 0.0
        %v2384 = vsel 1, %v2360, 0.0
        %v2385 = vsel 1, %v2361, 0.0
        %v2386 = vsel 1, %v2362, 0.0
        %v2387 = vsel 1, %v2363, 0.0
        %v2388 = vsel 1, %v2364, 0.0
        %v2389 = vsel 1, %v2365, 0.0
        %v2390 = vsel 1, %v2366, 0.0
        %v2391 = vsel 1, %v2367, 0.0
        %v2392 = vsel 1, %v2368, 0.0
        %v2393 = vsel 1, %v2369, 0.0
        %v2394 = vsel 1, %v2370, 0.0
        %v2395 = vsel 1, %v2371, 0.0
        %v2396 = vsel 1, %v2372, 0.0
        %v2397 = vsel 1, %v2373, 0.0
        %v2398 = vsel 1, %v2374, 0.0
        %v2399 = vsel %vm2380, %v2375, 0.0
        %v2400 = vsel %vm2380, %v2376, 0.0
        %v2401 = vpack.c.bf16 %v2382, %v2381
        %v2402 = vpack.c.bf16 %v2384, %v2383
        %v2403 = vpack.c.bf16 %v2386, %v2385
        %v2404 = vpack.c.bf16 %v2388, %v2387
        %v2405 = vpack.c.bf16 %v2390, %v2389
        %v2406 = vpack.c.bf16 %v2392, %v2391
        %v2407 = vpack.c.bf16 %v2394, %v2393
        %v2408 = vpack.c.bf16 %v2396, %v2395
        %v2409 = vpack.c.bf16 %v2398, %v2397
        %v2410 = vpack.c.bf16 %v2400, %v2399
        %v2412 = vshrl.u32 %v2401, 16
        %v2414 = vrot.slane %v2412, 7
        %v2415 = vshll.u32 %v2401, 16
        %v2417 = vor.u32 %v2414, %v2415
        %v2419 = vshrl.u32 %v2402, 16
        %v2421 = vrot.slane %v2419, 7
        %v2422 = vshll.u32 %v2402, 16
        %v2424 = vor.u32 %v2421, %v2422
        %v2426 = vshrl.u32 %v2403, 16
        %v2428 = vrot.slane %v2426, 7
        %v2429 = vshll.u32 %v2403, 16
        %v2431 = vor.u32 %v2428, %v2429
        %v2433 = vshrl.u32 %v2404, 16
        %v2435 = vrot.slane %v2433, 7
        %v2436 = vshll.u32 %v2404, 16
        %v2438 = vor.u32 %v2435, %v2436
        %v2440 = vshrl.u32 %v2405, 16
        %v2442 = vrot.slane %v2440, 7
        %v2443 = vshll.u32 %v2405, 16
        %v2445 = vor.u32 %v2442, %v2443
        %v2447 = vshrl.u32 %v2406, 16
        %v2449 = vrot.slane %v2447, 7
        %v2450 = vshll.u32 %v2406, 16
        %v2452 = vor.u32 %v2449, %v2450
        %v2454 = vshrl.u32 %v2407, 16
        %v2456 = vrot.slane %v2454, 7
        %v2457 = vshll.u32 %v2407, 16
        %v2459 = vor.u32 %v2456, %v2457
        %v2461 = vshrl.u32 %v2408, 16
        %v2463 = vrot.slane %v2461, 7
        %v2464 = vshll.u32 %v2408, 16
        %v2466 = vor.u32 %v2463, %v2464
        %v2468 = vshrl.u32 %v2409, 16
        %v2470 = vrot.slane %v2468, 7
        %v2471 = vshll.u32 %v2409, 16
        %v2473 = vor.u32 %v2470, %v2471
        %v2475 = vshrl.u32 %v2410, 16
        %v2477 = vrot.slane %v2475, 7
        %v2478 = vshll.u32 %v2410, 16
        %v2480 = vor.u32 %v2477, %v2478
        %v2501 = vsel %vm773, 0, %v2417
        %v2502 = vsel %vm773, 0, %v2424
        %v2503 = vsel %vm773, 0, %v2431
        %v2504 = vsel %vm773, 0, %v2438
        %v2505 = vsel %vm773, 0, %v2445
        %v2506 = vsel %vm773, 0, %v2452
        %v2507 = vsel %vm773, 0, %v2459
        %v2508 = vsel %vm773, 0, %v2466
        %v2509 = vsel %vm773, 0, %v2473
        %v2510 = vsel %vm773, 0, %v2480
        %v2511 = vsel %vm773, %v2414, 0
        %v2512 = vsel %vm773, %v2421, 0
        %v2513 = vsel %vm773, %v2428, 0
        %v2514 = vsel %vm773, %v2435, 0
        %v2515 = vsel %vm773, %v2442, 0
        %v2516 = vsel %vm773, %v2449, 0
        %v2517 = vsel %vm773, %v2456, 0
        %v2518 = vsel %vm773, %v2463, 0
        %v2519 = vsel %vm773, %v2470, 0
        %v2520 = vsel %vm773, %v2477, 0
        %v2541 = vunpack.c.l.b16 %v2501
        %v2542 = vunpack.c.h.b16 %v2501
        %v2543 = vunpack.c.l.b16 %v2511
        %v2544 = vunpack.c.l.b16 %v2502
        %v2545 = vunpack.c.h.b16 %v2502
        %v2546 = vunpack.c.l.b16 %v2512
        %v2547 = vunpack.c.l.b16 %v2503
        %v2548 = vunpack.c.h.b16 %v2503
        %v2549 = vunpack.c.l.b16 %v2513
        %v2550 = vunpack.c.l.b16 %v2504
        %v2551 = vunpack.c.h.b16 %v2504
        %v2552 = vunpack.c.l.b16 %v2514
        %v2553 = vunpack.c.l.b16 %v2505
        %v2554 = vunpack.c.h.b16 %v2505
        %v2555 = vunpack.c.l.b16 %v2515
        %v2556 = vunpack.c.l.b16 %v2506
        %v2557 = vunpack.c.h.b16 %v2506
        %v2558 = vunpack.c.l.b16 %v2516
        %v2559 = vunpack.c.l.b16 %v2507
        %v2560 = vunpack.c.h.b16 %v2507
        %v2561 = vunpack.c.l.b16 %v2517
        %v2562 = vunpack.c.l.b16 %v2508
        %v2563 = vunpack.c.h.b16 %v2508
        %v2564 = vunpack.c.l.b16 %v2518
        %v2565 = vunpack.c.l.b16 %v2509
        %v2566 = vunpack.c.h.b16 %v2509
        %v2567 = vunpack.c.l.b16 %v2519
        %v2568 = vunpack.c.l.b16 %v2510
        %v2569 = vunpack.c.h.b16 %v2510
        %v2570 = vunpack.c.l.b16 %v2520
        %v2571 = vpack.c.b16 %v2541, %v2541
        %v2572 = vpack.c.b16 %v2542, %v2542
        %v2573 = vpack.c.b16 %v2543, %v2543
        %v2574 = vpack.c.b16 %v2544, %v2544
        %v2575 = vpack.c.b16 %v2545, %v2545
        %v2576 = vpack.c.b16 %v2546, %v2546
        %v2577 = vpack.c.b16 %v2547, %v2547
        %v2578 = vpack.c.b16 %v2548, %v2548
        %v2579 = vpack.c.b16 %v2549, %v2549
        %v2580 = vpack.c.b16 %v2550, %v2550
        %v2581 = vpack.c.b16 %v2551, %v2551
        %v2582 = vpack.c.b16 %v2552, %v2552
        %v2583 = vpack.c.b16 %v2553, %v2553
        %v2584 = vpack.c.b16 %v2554, %v2554
        %v2585 = vpack.c.b16 %v2555, %v2555
        %v2586 = vpack.c.b16 %v2556, %v2556
        %v2587 = vpack.c.b16 %v2557, %v2557
        %v2588 = vpack.c.b16 %v2558, %v2558
        %v2589 = vpack.c.b16 %v2559, %v2559
        %v2590 = vpack.c.b16 %v2560, %v2560
        %v2591 = vpack.c.b16 %v2561, %v2561
        %v2592 = vpack.c.b16 %v2562, %v2562
        %v2593 = vpack.c.b16 %v2563, %v2563
        %v2594 = vpack.c.b16 %v2564, %v2564
        %v2595 = vpack.c.b16 %v2565, %v2565
        %v2596 = vpack.c.b16 %v2566, %v2566
        %v2597 = vpack.c.b16 %v2567, %v2567
        %v2598 = vpack.c.b16 %v2568, %v2568
        %v2599 = vpack.c.b16 %v2569, %v2569
        %v2600 = vpack.c.b16 %v2570, %v2570
        %vm2631 = vcmask 60416
        %2632 = vst.msk [vmem:[#allocation2] sm:$0xf] %vm2631, %v2571
        %2633 = vst.msk [vmem:[#allocation2 + $0x4] sm:$0xf] %vm2631, %v2572
        %vm2634 = vcmask 57344
        %2635 = vst.msk [vmem:[#allocation2 + $0x8] sm:$0x1] %vm2634, %v2573
        %2636 = vst.msk [vmem:[#allocation2 + $0xc] sm:$0xf] %vm2631, %v2574
        %2637 = vst.msk [vmem:[#allocation2 + $0x10] sm:$0xf] %vm2631, %v2575
        %2638 = vst.msk [vmem:[#allocation2 + $0x14] sm:$0x1] %vm2634, %v2576
        %2639 = vst.msk [vmem:[#allocation2 + $0x18] sm:$0xf] %vm2631, %v2577
        %2640 = vst.msk [vmem:[#allocation2 + $0x1c] sm:$0xf] %vm2631, %v2578
        %2641 = vst.msk [vmem:[#allocation2 + $0x20] sm:$0x1] %vm2634, %v2579
        %2642 = vst.msk [vmem:[#allocation2 + $0x24] sm:$0xf] %vm2631, %v2580
        %2643 = vst.msk [vmem:[#allocation2 + $0x28] sm:$0xf] %vm2631, %v2581
        %2644 = vst.msk [vmem:[#allocation2 + $0x2c] sm:$0x1] %vm2634, %v2582
        %2645 = vst.msk [vmem:[#allocation2 + $0x30] sm:$0xf] %vm2631, %v2583
        %2646 = vst.msk [vmem:[#allocation2 + $0x34] sm:$0xf] %vm2631, %v2584
        %2647 = vst.msk [vmem:[#allocation2 + $0x38] sm:$0x1] %vm2634, %v2585
        %2648 = vst.msk [vmem:[#allocation2 + $0x3c] sm:$0xf] %vm2631, %v2586
        %2649 = vst.msk [vmem:[#allocation2 + $0x40] sm:$0xf] %vm2631, %v2587
        %2650 = vst.msk [vmem:[#allocation2 + $0x44] sm:$0x1] %vm2634, %v2588
        %2651 = vst.msk [vmem:[#allocation2 + $0x48] sm:$0xf] %vm2631, %v2589
        %2652 = vst.msk [vmem:[#allocation2 + $0x4c] sm:$0xf] %vm2631, %v2590
        %2653 = vst.msk [vmem:[#allocation2 + $0x50] sm:$0x1] %vm2634, %v2591
        %2654 = vst.msk [vmem:[#allocation2 + $0x54] sm:$0xf] %vm2631, %v2592
        %2655 = vst.msk [vmem:[#allocation2 + $0x58] sm:$0xf] %vm2631, %v2593
        %2656 = vst.msk [vmem:[#allocation2 + $0x5c] sm:$0x1] %vm2634, %v2594
        %2657 = vst.msk [vmem:[#allocation2 + $0x60] sm:$0xf] %vm2631, %v2595
        %2658 = vst.msk [vmem:[#allocation2 + $0x64] sm:$0xf] %vm2631, %v2596
        %2659 = vst.msk [vmem:[#allocation2 + $0x68] sm:$0x1] %vm2634, %v2597
        %2660 = vst.msk [vmem:[#allocation2 + $0x6c] sm:$0xf] %vm2631, %v2598
        %2661 = vst.msk [vmem:[#allocation2 + $0x70] sm:$0xf] %vm2631, %v2599
        %2662 = vst.msk [vmem:[#allocation2 + $0x74] sm:$0x1] %vm2634, %v2600
      $region60: #{conv_block_forward_nhwc.1} parent=55 // pred_fallthru
        _
      %v2663 = vld [vmem:[#allocation2] sm:$0xf]
      %v2664 = vld [vmem:[#allocation2 + $0x4] sm:$0xf]
      %v2665 = vld [vmem:[#allocation2 + $0xc] sm:$0xf]
      %v2666 = vld [vmem:[#allocation2 + $0x10] sm:$0xf]
      %v2667 = vld [vmem:[#allocation2 + $0x18] sm:$0xf]
      %v2668 = vld [vmem:[#allocation2 + $0x1c] sm:$0xf]
      %v2669 = vld [vmem:[#allocation2 + $0x24] sm:$0xf]
      %v2670 = vld [vmem:[#allocation2 + $0x28] sm:$0xf]
      %v2671 = vld [vmem:[#allocation2 + $0x30] sm:$0xf]
      %v2672 = vld [vmem:[#allocation2 + $0x34] sm:$0xf]
      %v2673 = vld [vmem:[#allocation2 + $0x3c] sm:$0xf]
      %v2674 = vld [vmem:[#allocation2 + $0x40] sm:$0xf]
      %v2675 = vld [vmem:[#allocation2 + $0x48] sm:$0xf]
      %v2676 = vld [vmem:[#allocation2 + $0x4c] sm:$0xf]
      %v2677 = vld [vmem:[#allocation2 + $0x54] sm:$0xf]
      %v2678 = vld [vmem:[#allocation2 + $0x58] sm:$0xf]
      %v2679 = vld [vmem:[%s539] sm:$0xf]
      %v2680 = vld [vmem:[#allocation2 + $0x8] sm:$0x1]
      %v2681 = vld [vmem:[#allocation2 + $0x14] sm:$0x1]
      %v2682 = vld [vmem:[#allocation2 + $0x20] sm:$0x1]
      %v2683 = vld [vmem:[#allocation2 + $0x2c] sm:$0x1]
      %v2684 = vld [vmem:[#allocation2 + $0x38] sm:$0x1]
      %v2685 = vld [vmem:[#allocation2 + $0x44] sm:$0x1]
      %v2686 = vld [vmem:[#allocation2 + $0x50] sm:$0x1]
      %v2687 = vld [vmem:[#allocation2 + $0x5c] sm:$0x1]
      %vm2688 = vsmask.f32 3328
      %vm2689 = vsmask.f32 7440
      %vm2690 = vmor %vm2688, %vm2689
      %v2692 = vshrl.u32 %v2663, 16
      %v2694 = vrot.slane %v2692, 4
      %v2695 = vshll.u32 %v2663, 16
      %v2697 = vrot.slane %v2695, 5
      %v2698 = vor.u32 %v2694, %v2697
      %v2699 = vrot.slane %v2698, 4
      %v2701 = vshll.u32 %v2664, 16
      %v2703 = vrot.slane %v2701, 5
      %v2704 = vsel %vm2690, %v2699, %v2703
      %v2705 = vshrl.u32 %v2664, 16
      %v2707 = vrot.slane %v2705, 4
      %v2708 = vor.u32 %v2707, %v2703
      %v2709 = vrot.slane %v2708, 4
      %v2711 = vshll.u32 %v2680, 16
      %v2713 = vrot.slane %v2711, 5
      %v2714 = vsel %vm2690, %v2709, %v2713
      %v2716 = vshrl.u32 %v2665, 16
      %v2718 = vrot.slane %v2716, 4
      %v2719 = vshll.u32 %v2665, 16
      %v2721 = vrot.slane %v2719, 5
      %v2722 = vor.u32 %v2718, %v2721
      %v2723 = vrot.slane %v2722, 4
      %v2725 = vshll.u32 %v2666, 16
      %v2727 = vrot.slane %v2725, 5
      %v2728 = vsel %vm2690, %v2723, %v2727
      %v2729 = vshrl.u32 %v2666, 16
      %v2731 = vrot.slane %v2729, 4
      %v2732 = vor.u32 %v2731, %v2727
      %v2733 = vrot.slane %v2732, 4
      %v2735 = vshll.u32 %v2681, 16
      %v2737 = vrot.slane %v2735, 5
      %v2738 = vsel %vm2690, %v2733, %v2737
      %v2740 = vshrl.u32 %v2667, 16
      %v2742 = vrot.slane %v2740, 4
      %v2743 = vshll.u32 %v2667, 16
      %v2745 = vrot.slane %v2743, 5
      %v2746 = vor.u32 %v2742, %v2745
      %v2747 = vrot.slane %v2746, 4
      %v2749 = vshll.u32 %v2668, 16
      %v2751 = vrot.slane %v2749, 5
      %v2752 = vsel %vm2690, %v2747, %v2751
      %v2753 = vshrl.u32 %v2668, 16
      %v2755 = vrot.slane %v2753, 4
      %v2756 = vor.u32 %v2755, %v2751
      %v2757 = vrot.slane %v2756, 4
      %v2759 = vshll.u32 %v2682, 16
      %v2761 = vrot.slane %v2759, 5
      %v2762 = vsel %vm2690, %v2757, %v2761
      %v2764 = vshrl.u32 %v2669, 16
      %v2766 = vrot.slane %v2764, 4
      %v2767 = vshll.u32 %v2669, 16
      %v2769 = vrot.slane %v2767, 5
      %v2770 = vor.u32 %v2766, %v2769
      %v2771 = vrot.slane %v2770, 4
      %v2773 = vshll.u32 %v2670, 16
      %v2775 = vrot.slane %v2773, 5
      %v2776 = vsel %vm2690, %v2771, %v2775
      %v2777 = vshrl.u32 %v2670, 16
      %v2779 = vrot.slane %v2777, 4
      %v2780 = vor.u32 %v2779, %v2775
      %v2781 = vrot.slane %v2780, 4
      %v2783 = vshll.u32 %v2683, 16
      %v2785 = vrot.slane %v2783, 5
      %v2786 = vsel %vm2690, %v2781, %v2785
      %v2788 = vshrl.u32 %v2671, 16
      %v2790 = vrot.slane %v2788, 4
      %v2791 = vshll.u32 %v2671, 16
      %v2793 = vrot.slane %v2791, 5
      %v2794 = vor.u32 %v2790, %v2793
      %v2795 = vrot.slane %v2794, 4
      %v2797 = vshll.u32 %v2672, 16
      %v2799 = vrot.slane %v2797, 5
      %v2800 = vsel %vm2690, %v2795, %v2799
      %v2801 = vshrl.u32 %v2672, 16
      %v2803 = vrot.slane %v2801, 4
      %v2804 = vor.u32 %v2803, %v2799
      %v2805 = vrot.slane %v2804, 4
      %v2807 = vshll.u32 %v2684, 16
      %v2809 = vrot.slane %v2807, 5
      %v2810 = vsel %vm2690, %v2805, %v2809
      %v2812 = vshrl.u32 %v2673, 16
      %v2814 = vrot.slane %v2812, 4
      %v2815 = vshll.u32 %v2673, 16
      %v2817 = vrot.slane %v2815, 5
      %v2818 = vor.u32 %v2814, %v2817
      %v2819 = vrot.slane %v2818, 4
      %v2821 = vshll.u32 %v2674, 16
      %v2823 = vrot.slane %v2821, 5
      %v2824 = vsel %vm2690, %v2819, %v2823
      %v2825 = vshrl.u32 %v2674, 16
      %v2827 = vrot.slane %v2825, 4
      %v2828 = vor.u32 %v2827, %v2823
      %v2829 = vrot.slane %v2828, 4
      %v2831 = vshll.u32 %v2685, 16
      %v2833 = vrot.slane %v2831, 5
      %v2834 = vsel %vm2690, %v2829, %v2833
      %v2836 = vshrl.u32 %v2675, 16
      %v2838 = vrot.slane %v2836, 4
      %v2839 = vshll.u32 %v2675, 16
      %v2841 = vrot.slane %v2839, 5
      %v2842 = vor.u32 %v2838, %v2841
      %v2843 = vrot.slane %v2842, 4
      %v2845 = vshll.u32 %v2676, 16
      %v2847 = vrot.slane %v2845, 5
      %v2848 = vsel %vm2690, %v2843, %v2847
      %v2849 = vshrl.u32 %v2676, 16
      %v2851 = vrot.slane %v2849, 4
      %v2852 = vor.u32 %v2851, %v2847
      %v2853 = vrot.slane %v2852, 4
      %v2855 = vshll.u32 %v2686, 16
      %v2857 = vrot.slane %v2855, 5
      %v2858 = vsel %vm2690, %v2853, %v2857
      %v2860 = vshrl.u32 %v2677, 16
      %v2862 = vrot.slane %v2860, 4
      %v2863 = vshll.u32 %v2677, 16
      %v2865 = vrot.slane %v2863, 5
      %v2866 = vor.u32 %v2862, %v2865
      %v2867 = vrot.slane %v2866, 4
      %v2869 = vshll.u32 %v2678, 16
      %v2871 = vrot.slane %v2869, 5
      %v2872 = vsel %vm2690, %v2867, %v2871
      %v2873 = vshrl.u32 %v2678, 16
      %v2875 = vrot.slane %v2873, 4
      %v2876 = vor.u32 %v2875, %v2871
      %v2877 = vrot.slane %v2876, 4
      %v2879 = vshll.u32 %v2687, 16
      %v2881 = vrot.slane %v2879, 5
      %v2882 = vsel %vm2690, %v2877, %v2881
      %s2883 = scalar_lea.vmem %s539, 4
      %v2884 = vld [vmem:[%s2883] sm:$0xf]
      %v2885 = vunpack.c.l.b16 %v2704
      %v2886 = vunpack.c.l.b16 %v2714
      %v2887 = vunpack.c.l.b16 %v2728
      %v2888 = vunpack.c.l.b16 %v2738
      %v2889 = vunpack.c.l.b16 %v2752
      %v2890 = vunpack.c.l.b16 %v2762
      %v2891 = vunpack.c.l.b16 %v2776
      %v2892 = vunpack.c.l.b16 %v2786
      %v2893 = vunpack.c.l.b16 %v2800
      %v2894 = vunpack.c.l.b16 %v2810
      %v2895 = vunpack.c.l.b16 %v2824
      %v2896 = vunpack.c.l.b16 %v2834
      %v2897 = vunpack.c.l.b16 %v2848
      %v2898 = vunpack.c.l.b16 %v2858
      %v2899 = vunpack.c.l.b16 %v2872
      %v2900 = vunpack.c.l.b16 %v2882
      %v2901 = vpack.c.b16 %v2886, %v2885
      %v2902 = vpack.c.b16 %v2888, %v2887
      %v2903 = vpack.c.b16 %v2890, %v2889
      %v2904 = vpack.c.b16 %v2892, %v2891
      %v2905 = vpack.c.b16 %v2894, %v2893
      %v2906 = vpack.c.b16 %v2896, %v2895
      %v2907 = vpack.c.b16 %v2898, %v2897
      %v2908 = vpack.c.b16 %v2900, %v2899
      %vm2909 = vcmask 64512
      %v2911 = vsel %vm2909, %v2901, 0
      %v2914 = vsel %vm2909, %v2902, 0
      %v2917 = vsel %vm2909, %v2903, 0
      %v2920 = vsel %vm2909, %v2904, 0
      %v2923 = vsel %vm2909, %v2905, 0
      %v2926 = vsel %vm2909, %v2906, 0
      %v2929 = vsel %vm2909, %v2907, 0
      %v2932 = vsel %vm2909, %v2908, 0
      %vm2934 = vcmask 1043456
      %v2936 = vsel %vm2934, %v2884, 0
      %2938 = vmatprep.subr.bf16.mxu0 0
      %2939 = vmatpush1.bf16.msra.mxu0 0
      %2940 = vmatprep.subr.bf16.mxu0 0
      %2941 = vmatpush1.bf16.msra.mxu0 0
      %2942 = vmatprep.subr.bf16.mxu0 0
      %2943 = vmatpush1.bf16.msra.mxu0 0
      %2944 = vmatprep.subr.bf16.mxu0 0
      %2945 = vmatpush1.bf16.msra.mxu0 0
      %2946 = vmatprep.subr.bf16.mxu0 0
      %2947 = vmatpush1.bf16.msra.mxu0 0
      %2948 = vmatprep.subr.bf16.mxu0 0
      %2949 = vmatpush1.bf16.msra.mxu0 0
      %2950 = vmatprep.subr.bf16.mxu0 0
      %2951 = vmatpush1.bf16.msra.mxu0 0
      %2952 = vmatprep.subr.bf16.mxu0 0
      %2953 = vmatpush1.bf16.msra.mxu0 %v2936
      %2954 = vmatprep.subr.bf16.mxu0 0
      %2955 = vmatpush2.bf16.msra.mxu0 0
      %2956 = vmatprep.subr.bf16.mxu0 0
      %2957 = vmatpush2.bf16.msra.mxu0 0
      %2958 = vmatprep.subr.bf16.mxu0 0
      %2959 = vmatpush2.bf16.msra.mxu0 0
      %2960 = vmatprep.subr.bf16.mxu0 0
      %2961 = vmatpush2.bf16.msra.mxu0 0
      %2962 = vmatprep.subr.bf16.mxu0 0
      %2963 = vmatpush2.bf16.msra.mxu0 0
      %2964 = vmatprep.subr.bf16.mxu0 0
      %2965 = vmatpush2.bf16.msra.mxu0 0
      %2966 = vmatprep.subr.bf16.mxu0 0
      %2967 = vmatpush2.bf16.msra.mxu0 0
      %2968 = vmatprep.subr.bf16.mxu0 0
      %2969 = vmatpush2.bf16.msra.mxu0 0
      %2970 = vmatprep.mubr.bf16.mxu0 0
      %2971 = vmatmul.mubr.bf16.gmra.mxu0 %v2911
      %v2972 = vpop.f32.mrf.mxu0
      %v2973 = vadd.f32 0.0, %v2972
      %v2974 = vpop.f32.mrf.mxu0
      %v2975 = vpop.f32.mrf.mxu0
      %v2976 = vadd.f32 0.0, %v2975
      %v2977 = vpop.f32.mrf.mxu0
      %2978 = vmatprep.mubr.bf16.mxu0 0
      %2979 = vmatmul.mubr.bf16.gmra.mxu0 %v2914
      %v2980 = vpop.f32.mrf.mxu0
      %v2981 = vadd.f32 0.0, %v2980
      %v2982 = vpop.f32.mrf.mxu0
      %v2983 = vpop.f32.mrf.mxu0
      %v2984 = vadd.f32 0.0, %v2983
      %v2985 = vpop.f32.mrf.mxu0
      %2986 = vmatprep.mubr.bf16.mxu0 0
      %2987 = vmatmul.mubr.bf16.gmra.mxu0 %v2917
      %v2988 = vpop.f32.mrf.mxu0
      %v2989 = vadd.f32 0.0, %v2988
      %v2990 = vpop.f32.mrf.mxu0
      %v2991 = vpop.f32.mrf.mxu0
      %v2992 = vadd.f32 0.0, %v2991
      %v2993 = vpop.f32.mrf.mxu0
      %2994 = vmatprep.mubr.bf16.mxu0 0
      %2995 = vmatmul.mubr.bf16.gmra.mxu0 %v2920
      %v2996 = vpop.f32.mrf.mxu0
      %v2997 = vadd.f32 0.0, %v2996
      %v2998 = vpop.f32.mrf.mxu0
      %v2999 = vpop.f32.mrf.mxu0
      %v3000 = vadd.f32 0.0, %v2999
      %v3001 = vpop.f32.mrf.mxu0
      %3002 = vmatprep.mubr.bf16.mxu0 0
      %3003 = vmatmul.mubr.bf16.gmra.mxu0 %v2923
      %v3004 = vpop.f32.mrf.mxu0
      %v3005 = vadd.f32 0.0, %v3004
      %v3006 = vpop.f32.mrf.mxu0
      %v3007 = vpop.f32.mrf.mxu0
      %v3008 = vadd.f32 0.0, %v3007
      %v3009 = vpop.f32.mrf.mxu0
      %3010 = vmatprep.mubr.bf16.mxu0 0
      %3011 = vmatmul.mubr.bf16.gmra.mxu0 %v2926
      %v3012 = vpop.f32.mrf.mxu0
      %v3013 = vadd.f32 0.0, %v3012
      %v3014 = vpop.f32.mrf.mxu0
      %v3015 = vpop.f32.mrf.mxu0
      %v3016 = vadd.f32 0.0, %v3015
      %v3017 = vpop.f32.mrf.mxu0
      %3018 = vmatprep.mubr.bf16.mxu0 0
      %3019 = vmatmul.mubr.bf16.gmra.mxu0 %v2929
      %v3020 = vpop.f32.mrf.mxu0
      %v3021 = vadd.f32 0.0, %v3020
      %v3022 = vpop.f32.mrf.mxu0
      %v3023 = vpop.f32.mrf.mxu0
      %v3024 = vadd.f32 0.0, %v3023
      %v3025 = vpop.f32.mrf.mxu0
      %3026 = vmatprep.mubr.bf16.mxu0 0
      %3027 = vmatmul.mubr.bf16.gmra.mxu0 %v2932
      %v3028 = vpop.f32.mrf.mxu0
      %v3029 = vadd.f32 0.0, %v3028
      %v3030 = vpop.f32.mrf.mxu0
      %v3031 = vpop.f32.mrf.mxu0
      %v3032 = vadd.f32 0.0, %v3031
      %v3033 = vpop.f32.mrf.mxu0
      %3034 = vdwg.mxu0
      %v3051 = vunpack.c.l.b16 %v2663
      %v3052 = vunpack.c.l.b16 %v2664
      %v3053 = vunpack.c.l.b16 %v2665
      %v3054 = vunpack.c.l.b16 %v2666
      %v3055 = vunpack.c.l.b16 %v2667
      %v3056 = vunpack.c.l.b16 %v2668
      %v3057 = vunpack.c.l.b16 %v2669
      %v3058 = vunpack.c.l.b16 %v2670
      %v3059 = vunpack.c.l.b16 %v2671
      %v3060 = vunpack.c.l.b16 %v2672
      %v3061 = vunpack.c.l.b16 %v2673
      %v3062 = vunpack.c.l.b16 %v2674
      %v3063 = vunpack.c.l.b16 %v2675
      %v3064 = vunpack.c.l.b16 %v2676
      %v3065 = vunpack.c.l.b16 %v2677
      %v3066 = vunpack.c.l.b16 %v2678
      %v3067 = vpack.c.b16 %v3052, %v3051
      %v3068 = vpack.c.b16 %v3054, %v3053
      %v3069 = vpack.c.b16 %v3056, %v3055
      %v3070 = vpack.c.b16 %v3058, %v3057
      %v3071 = vpack.c.b16 %v3060, %v3059
      %v3072 = vpack.c.b16 %v3062, %v3061
      %v3073 = vpack.c.b16 %v3064, %v3063
      %v3074 = vpack.c.b16 %v3066, %v3065
      %v3076 = vsel %vm2909, %v3067, 0
      %v3079 = vsel %vm2909, %v3068, 0
      %v3082 = vsel %vm2909, %v3069, 0
      %v3085 = vsel %vm2909, %v3070, 0
      %v3088 = vsel %vm2909, %v3071, 0
      %v3091 = vsel %vm2909, %v3072, 0
      %v3094 = vsel %vm2909, %v3073, 0
      %v3097 = vsel %vm2909, %v3074, 0
      %v3100 = vsel %vm2934, %v2679, 0
      %3102 = vmatprep.subr.bf16.mxu0 0
      %3103 = vmatpush1.bf16.msra.mxu0 0
      %3104 = vmatprep.subr.bf16.mxu0 0
      %3105 = vmatpush1.bf16.msra.mxu0 0
      %3106 = vmatprep.subr.bf16.mxu0 0
      %3107 = vmatpush1.bf16.msra.mxu0 0
      %3108 = vmatprep.subr.bf16.mxu0 0
      %3109 = vmatpush1.bf16.msra.mxu0 0
      %3110 = vmatprep.subr.bf16.mxu0 0
      %3111 = vmatpush1.bf16.msra.mxu0 0
      %3112 = vmatprep.subr.bf16.mxu0 0
      %3113 = vmatpush1.bf16.msra.mxu0 0
      %3114 = vmatprep.subr.bf16.mxu0 0
      %3115 = vmatpush1.bf16.msra.mxu0 0
      %3116 = vmatprep.subr.bf16.mxu0 0
      %3117 = vmatpush1.bf16.msra.mxu0 %v3100
      %3118 = vmatprep.subr.bf16.mxu0 0
      %3119 = vmatpush2.bf16.msra.mxu0 0
      %3120 = vmatprep.subr.bf16.mxu0 0
      %3121 = vmatpush2.bf16.msra.mxu0 0
      %3122 = vmatprep.subr.bf16.mxu0 0
      %3123 = vmatpush2.bf16.msra.mxu0 0
      %3124 = vmatprep.subr.bf16.mxu0 0
      %3125 = vmatpush2.bf16.msra.mxu0 0
      %3126 = vmatprep.subr.bf16.mxu0 0
      %3127 = vmatpush2.bf16.msra.mxu0 0
      %3128 = vmatprep.subr.bf16.mxu0 0
      %3129 = vmatpush2.bf16.msra.mxu0 0
      %3130 = vmatprep.subr.bf16.mxu0 0
      %3131 = vmatpush2.bf16.msra.mxu0 0
      %3132 = vmatprep.subr.bf16.mxu0 0
      %3133 = vmatpush2.bf16.msra.mxu0 0
      %3134 = vmatprep.mubr.bf16.mxu0 0
      %3135 = vmatmul.mubr.bf16.gmra.mxu0 %v3076
      %v3136 = vpop.f32.mrf.mxu0
      %v3137 = vadd.f32 %v2973, %v3136
      %v3138 = vpop.f32.mrf.mxu0
      %v3139 = vpop.f32.mrf.mxu0
      %v3140 = vadd.f32 %v2976, %v3139
      %v3141 = vpop.f32.mrf.mxu0
      %3142 = vmatprep.mubr.bf16.mxu0 0
      %3143 = vmatmul.mubr.bf16.gmra.mxu0 %v3079
      %v3144 = vpop.f32.mrf.mxu0
      %v3145 = vadd.f32 %v2981, %v3144
      %v3146 = vpop.f32.mrf.mxu0
      %v3147 = vpop.f32.mrf.mxu0
      %v3148 = vadd.f32 %v2984, %v3147
      %v3149 = vpop.f32.mrf.mxu0
      %3150 = vmatprep.mubr.bf16.mxu0 0
      %3151 = vmatmul.mubr.bf16.gmra.mxu0 %v3082
      %v3152 = vpop.f32.mrf.mxu0
      %v3153 = vadd.f32 %v2989, %v3152
      %v3154 = vpop.f32.mrf.mxu0
      %v3155 = vpop.f32.mrf.mxu0
      %v3156 = vadd.f32 %v2992, %v3155
      %v3157 = vpop.f32.mrf.mxu0
      %3158 = vmatprep.mubr.bf16.mxu0 0
      %3159 = vmatmul.mubr.bf16.gmra.mxu0 %v3085
      %v3160 = vpop.f32.mrf.mxu0
      %v3161 = vadd.f32 %v2997, %v3160
      %v3162 = vpop.f32.mrf.mxu0
      %v3163 = vpop.f32.mrf.mxu0
      %v3164 = vadd.f32 %v3000, %v3163
      %v3165 = vpop.f32.mrf.mxu0
      %3166 = vmatprep.mubr.bf16.mxu0 0
      %3167 = vmatmul.mubr.bf16.gmra.mxu0 %v3088
      %v3168 = vpop.f32.mrf.mxu0
      %v3169 = vadd.f32 %v3005, %v3168
      %v3170 = vpop.f32.mrf.mxu0
      %v3171 = vpop.f32.mrf.mxu0
      %v3172 = vadd.f32 %v3008, %v3171
      %v3173 = vpop.f32.mrf.mxu0
      %3174 = vmatprep.mubr.bf16.mxu0 0
      %3175 = vmatmul.mubr.bf16.gmra.mxu0 %v3091
      %v3176 = vpop.f32.mrf.mxu0
      %v3177 = vadd.f32 %v3013, %v3176
      %v3178 = vpop.f32.mrf.mxu0
      %v3179 = vpop.f32.mrf.mxu0
      %v3180 = vadd.f32 %v3016, %v3179
      %v3181 = vpop.f32.mrf.mxu0
      %3182 = vmatprep.mubr.bf16.mxu0 0
      %3183 = vmatmul.mubr.bf16.gmra.mxu0 %v3094
      %v3184 = vpop.f32.mrf.mxu0
      %v3185 = vadd.f32 %v3021, %v3184
      %v3186 = vpop.f32.mrf.mxu0
      %v3187 = vpop.f32.mrf.mxu0
      %v3188 = vadd.f32 %v3024, %v3187
      %v3189 = vpop.f32.mrf.mxu0
      %3190 = vmatprep.mubr.bf16.mxu0 0
      %3191 = vmatmul.mubr.bf16.gmra.mxu0 %v3097
      %v3192 = vpop.f32.mrf.mxu0
      %v3193 = vadd.f32 %v3029, %v3192
      %v3194 = vpop.f32.mrf.mxu0
      %v3195 = vpop.f32.mrf.mxu0
      %v3196 = vadd.f32 %v3032, %v3195
      %v3197 = vpop.f32.mrf.mxu0
      %3198 = vdwg.mxu0
      %v3199 = vld [vmem:[#allocation2] sm:$0xe]
      %v3200 = vld [vmem:[#allocation2 + $0xc] sm:$0xe]
      %v3201 = vld [vmem:[#allocation2 + $0x18] sm:$0xe]
      %v3202 = vld [vmem:[#allocation2 + $0x24] sm:$0xe]
      %v3203 = vld [vmem:[#allocation2 + $0x30] sm:$0xe]
      %v3204 = vld [vmem:[#allocation2 + $0x3c] sm:$0xe]
      %v3205 = vld [vmem:[#allocation2 + $0x48] sm:$0xe]
      %v3206 = vld [vmem:[#allocation2 + $0x54] sm:$0xe]
      %vm3223 = vcmask 1042432
      %vm3224 = vcmask 1046532
      %vm3225 = vmor %vm3223, %vm3224
      %v3226 = vrot.slane %v3199, 5
      %v3227 = vrot.slane %v3226, 4
      %v3228 = vrot.slane %v2664, 5
      %v3229 = vsel %vm3225, %v3227, %v3228
      %v3230 = vrot.slane %v3228, 4
      %v3231 = vrot.slane %v2680, 5
      %v3232 = vsel %vm3225, %v3230, %v3231
      %v3233 = vrot.slane %v3200, 5
      %v3234 = vrot.slane %v3233, 4
      %v3235 = vrot.slane %v2666, 5
      %v3236 = vsel %vm3225, %v3234, %v3235
      %v3237 = vrot.slane %v3235, 4
      %v3238 = vrot.slane %v2681, 5
      %v3239 = vsel %vm3225, %v3237, %v3238
      %v3240 = vrot.slane %v3201, 5
      %v3241 = vrot.slane %v3240, 4
      %v3242 = vrot.slane %v2668, 5
      %v3243 = vsel %vm3225, %v3241, %v3242
      %v3244 = vrot.slane %v3242, 4
      %v3245 = vrot.slane %v2682, 5
      %v3246 = vsel %vm3225, %v3244, %v3245
      %v3247 = vrot.slane %v3202, 5
      %v3248 = vrot.slane %v3247, 4
      %v3249 = vrot.slane %v2670, 5
      %v3250 = vsel %vm3225, %v3248, %v3249
      %v3251 = vrot.slane %v3249, 4
      %v3252 = vrot.slane %v2683, 5
      %v3253 = vsel %vm3225, %v3251, %v3252
      %v3254 = vrot.slane %v3203, 5
      %v3255 = vrot.slane %v3254, 4
      %v3256 = vrot.slane %v2672, 5
      %v3257 = vsel %vm3225, %v3255, %v3256
      %v3258 = vrot.slane %v3256, 4
      %v3259 = vrot.slane %v2684, 5
      %v3260 = vsel %vm3225, %v3258, %v3259
      %v3261 = vrot.slane %v3204, 5
      %v3262 = vrot.slane %v3261, 4
      %v3263 = vrot.slane %v2674, 5
      %v3264 = vsel %vm3225, %v3262, %v3263
      %v3265 = vrot.slane %v3263, 4
      %v3266 = vrot.slane %v2685, 5
      %v3267 = vsel %vm3225, %v3265, %v3266
      %v3268 = vrot.slane %v3205, 5
      %v3269 = vrot.slane %v3268, 4
      %v3270 = vrot.slane %v2676, 5
      %v3271 = vsel %vm3225, %v3269, %v3270
      %v3272 = vrot.slane %v3270, 4
      %v3273 = vrot.slane %v2686, 5
      %v3274 = vsel %vm3225, %v3272, %v3273
      %v3275 = vrot.slane %v3206, 5
      %v3276 = vrot.slane %v3275, 4
      %v3277 = vrot.slane %v2678, 5
      %v3278 = vsel %vm3225, %v3276, %v3277
      %v3279 = vrot.slane %v3277, 4
      %v3280 = vrot.slane %v2687, 5
      %v3281 = vsel %vm3225, %v3279, %v3280
      %s3282 = scalar_lea.vmem %s539, 8
      %v3283 = vld [vmem:[%s3282] sm:$0xf]
      %v3284 = vunpack.c.l.b16 %v3229
      %v3285 = vunpack.c.l.b16 %v3232
      %v3286 = vunpack.c.l.b16 %v3236
      %v3287 = vunpack.c.l.b16 %v3239
      %v3288 = vunpack.c.l.b16 %v3243
      %v3289 = vunpack.c.l.b16 %v3246
      %v3290 = vunpack.c.l.b16 %v3250
      %v3291 = vunpack.c.l.b16 %v3253
      %v3292 = vunpack.c.l.b16 %v3257
      %v3293 = vunpack.c.l.b16 %v3260
      %v3294 = vunpack.c.l.b16 %v3264
      %v3295 = vunpack.c.l.b16 %v3267
      %v3296 = vunpack.c.l.b16 %v3271
      %v3297 = vunpack.c.l.b16 %v3274
      %v3298 = vunpack.c.l.b16 %v3278
      %v3299 = vunpack.c.l.b16 %v3281
      %v3300 = vpack.c.b16 %v3285, %v3284
      %v3301 = vpack.c.b16 %v3287, %v3286
      %v3302 = vpack.c.b16 %v3289, %v3288
      %v3303 = vpack.c.b16 %v3291, %v3290
      %v3304 = vpack.c.b16 %v3293, %v3292
      %v3305 = vpack.c.b16 %v3295, %v3294
      %v3306 = vpack.c.b16 %v3297, %v3296
      %v3307 = vpack.c.b16 %v3299, %v3298
      %v3309 = vsel %vm2909, %v3300, 0
      %v3312 = vsel %vm2909, %v3301, 0
      %v3315 = vsel %vm2909, %v3302, 0
      %v3318 = vsel %vm2909, %v3303, 0
      %v3321 = vsel %vm2909, %v3304, 0
      %v3324 = vsel %vm2909, %v3305, 0
      %v3327 = vsel %vm2909, %v3306, 0
      %v3330 = vsel %vm2909, %v3307, 0
      %v3333 = vsel %vm2934, %v3283, 0
      %3335 = vmatprep.subr.bf16.mxu0 0
      %3336 = vmatpush1.bf16.msra.mxu0 0
      %3337 = vmatprep.subr.bf16.mxu0 0
      %3338 = vmatpush1.bf16.msra.mxu0 0
      %3339 = vmatprep.subr.bf16.mxu0 0
      %3340 = vmatpush1.bf16.msra.mxu0 0
      %3341 = vmatprep.subr.bf16.mxu0 0
      %3342 = vmatpush1.bf16.msra.mxu0 0
      %3343 = vmatprep.subr.bf16.mxu0 0
      %3344 = vmatpush1.bf16.msra.mxu0 0
      %3345 = vmatprep.subr.bf16.mxu0 0
      %3346 = vmatpush1.bf16.msra.mxu0 0
      %3347 = vmatprep.subr.bf16.mxu0 0
      %3348 = vmatpush1.bf16.msra.mxu0 0
      %3349 = vmatprep.subr.bf16.mxu0 0
      %3350 = vmatpush1.bf16.msra.mxu0 %v3333
      %3351 = vmatprep.subr.bf16.mxu0 0
      %3352 = vmatpush2.bf16.msra.mxu0 0
      %3353 = vmatprep.subr.bf16.mxu0 0
      %3354 = vmatpush2.bf16.msra.mxu0 0
      %3355 = vmatprep.subr.bf16.mxu0 0
      %3356 = vmatpush2.bf16.msra.mxu0 0
      %3357 = vmatprep.subr.bf16.mxu0 0
      %3358 = vmatpush2.bf16.msra.mxu0 0
      %3359 = vmatprep.subr.bf16.mxu0 0
      %3360 = vmatpush2.bf16.msra.mxu0 0
      %3361 = vmatprep.subr.bf16.mxu0 0
      %3362 = vmatpush2.bf16.msra.mxu0 0
      %3363 = vmatprep.subr.bf16.mxu0 0
      %3364 = vmatpush2.bf16.msra.mxu0 0
      %3365 = vmatprep.subr.bf16.mxu0 0
      %3366 = vmatpush2.bf16.msra.mxu0 0
      %3367 = vmatprep.mubr.bf16.mxu0 0
      %3368 = vmatmul.mubr.bf16.gmra.mxu0 %v3309
      %v3369 = vpop.f32.mrf.mxu0
      %v3370 = vadd.f32 0.0, %v3369
      %v3371 = vpop.f32.mrf.mxu0
      %v3372 = vpop.f32.mrf.mxu0
      %v3373 = vadd.f32 0.0, %v3372
      %v3374 = vpop.f32.mrf.mxu0
      %3375 = vmatprep.mubr.bf16.mxu0 0
      %3376 = vmatmul.mubr.bf16.gmra.mxu0 %v3312
      %v3377 = vpop.f32.mrf.mxu0
      %v3378 = vadd.f32 0.0, %v3377
      %v3379 = vpop.f32.mrf.mxu0
      %v3380 = vpop.f32.mrf.mxu0
      %v3381 = vadd.f32 0.0, %v3380
      %v3382 = vpop.f32.mrf.mxu0
      %3383 = vmatprep.mubr.bf16.mxu0 0
      %3384 = vmatmul.mubr.bf16.gmra.mxu0 %v3315
      %v3385 = vpop.f32.mrf.mxu0
      %v3386 = vadd.f32 0.0, %v3385
      %v3387 = vpop.f32.mrf.mxu0
      %v3388 = vpop.f32.mrf.mxu0
      %v3389 = vadd.f32 0.0, %v3388
      %v3390 = vpop.f32.mrf.mxu0
      %3391 = vmatprep.mubr.bf16.mxu0 0
      %3392 = vmatmul.mubr.bf16.gmra.mxu0 %v3318
      %v3393 = vpop.f32.mrf.mxu0
      %v3394 = vadd.f32 0.0, %v3393
      %v3395 = vpop.f32.mrf.mxu0
      %v3396 = vpop.f32.mrf.mxu0
      %v3397 = vadd.f32 0.0, %v3396
      %v3398 = vpop.f32.mrf.mxu0
      %3399 = vmatprep.mubr.bf16.mxu0 0
      %3400 = vmatmul.mubr.bf16.gmra.mxu0 %v3321
      %v3401 = vpop.f32.mrf.mxu0
      %v3402 = vadd.f32 0.0, %v3401
      %v3403 = vpop.f32.mrf.mxu0
      %v3404 = vpop.f32.mrf.mxu0
      %v3405 = vadd.f32 0.0, %v3404
      %v3406 = vpop.f32.mrf.mxu0
      %3407 = vmatprep.mubr.bf16.mxu0 0
      %3408 = vmatmul.mubr.bf16.gmra.mxu0 %v3324
      %v3409 = vpop.f32.mrf.mxu0
      %v3410 = vadd.f32 0.0, %v3409
      %v3411 = vpop.f32.mrf.mxu0
      %v3412 = vpop.f32.mrf.mxu0
      %v3413 = vadd.f32 0.0, %v3412
      %v3414 = vpop.f32.mrf.mxu0
      %3415 = vmatprep.mubr.bf16.mxu0 0
      %3416 = vmatmul.mubr.bf16.gmra.mxu0 %v3327
      %v3417 = vpop.f32.mrf.mxu0
      %v3418 = vadd.f32 0.0, %v3417
      %v3419 = vpop.f32.mrf.mxu0
      %v3420 = vpop.f32.mrf.mxu0
      %v3421 = vadd.f32 0.0, %v3420
      %v3422 = vpop.f32.mrf.mxu0
      %3423 = vmatprep.mubr.bf16.mxu0 0
      %3424 = vmatmul.mubr.bf16.gmra.mxu0 %v3330
      %v3425 = vpop.f32.mrf.mxu0
      %v3426 = vadd.f32 0.0, %v3425
      %v3427 = vpop.f32.mrf.mxu0
      %v3428 = vpop.f32.mrf.mxu0
      %v3429 = vadd.f32 0.0, %v3428
      %v3430 = vpop.f32.mrf.mxu0
      %3431 = vdwg.mxu0
      %v3432 = vadd.f32 %v3137, %v3370
      %v3433 = vadd.f32 %v3140, %v3373
      %v3434 = vadd.f32 %v3145, %v3378
      %v3435 = vadd.f32 %v3148, %v3381
      %v3436 = vadd.f32 %v3153, %v3386
      %v3437 = vadd.f32 %v3156, %v3389
      %v3438 = vadd.f32 %v3161, %v3394
      %v3439 = vadd.f32 %v3164, %v3397
      %v3440 = vadd.f32 %v3169, %v3402
      %v3441 = vadd.f32 %v3172, %v3405
      %v3442 = vadd.f32 %v3177, %v3410
      %v3443 = vadd.f32 %v3180, %v3413
      %v3444 = vadd.f32 %v3185, %v3418
      %v3445 = vadd.f32 %v3188, %v3421
      %v3446 = vadd.f32 %v3193, %v3426
      %v3447 = vadd.f32 %v3196, %v3429
      %s3448 = scalar_lea.vmem [#allocation2], 12
      %v3449 = vld [vmem:[%s3448] sm:$0xf]
      %v3450 = vld [vmem:[%s3448 + $0x4] sm:$0xf]
      %v3451 = vld [vmem:[%s3448 + $0xc] sm:$0xf]
      %v3452 = vld [vmem:[%s3448 + $0x10] sm:$0xf]
      %v3453 = vld [vmem:[%s3448 + $0x18] sm:$0xf]
      %v3454 = vld [vmem:[%s3448 + $0x1c] sm:$0xf]
      %v3455 = vld [vmem:[%s3448 + $0x24] sm:$0xf]
      %v3456 = vld [vmem:[%s3448 + $0x28] sm:$0xf]
      %v3457 = vld [vmem:[%s3448 + $0x30] sm:$0xf]
      %v3458 = vld [vmem:[%s3448 + $0x34] sm:$0xf]
      %v3459 = vld [vmem:[%s3448 + $0x3c] sm:$0xf]
      %v3460 = vld [vmem:[%s3448 + $0x40] sm:$0xf]
      %v3461 = vld [vmem:[%s3448 + $0x48] sm:$0xf]
      %v3462 = vld [vmem:[%s3448 + $0x4c] sm:$0xf]
      %v3463 = vld [vmem:[%s3448 + $0x54] sm:$0xf]
      %v3464 = vld [vmem:[%s3448 + $0x58] sm:$0xf]
      %s3465 = scalar_lea.vmem %s539, 12
      %v3466 = vld [vmem:[%s3465] sm:$0xf]
      %v3483 = vunpack.c.l.b16 %v3449
      %v3484 = vunpack.c.l.b16 %v3450
      %v3485 = vunpack.c.l.b16 %v3451
      %v3486 = vunpack.c.l.b16 %v3452
      %v3487 = vunpack.c.l.b16 %v3453
      %v3488 = vunpack.c.l.b16 %v3454
      %v3489 = vunpack.c.l.b16 %v3455
      %v3490 = vunpack.c.l.b16 %v3456
      %v3491 = vunpack.c.l.b16 %v3457
      %v3492 = vunpack.c.l.b16 %v3458
      %v3493 = vunpack.c.l.b16 %v3459
      %v3494 = vunpack.c.l.b16 %v3460
      %v3495 = vunpack.c.l.b16 %v3461
      %v3496 = vunpack.c.l.b16 %v3462
      %v3497 = vunpack.c.l.b16 %v3463
      %v3498 = vunpack.c.l.b16 %v3464
      %v3499 = vpack.c.b16 %v3484, %v3483
      %v3500 = vpack.c.b16 %v3486, %v3485
      %v3501 = vpack.c.b16 %v3488, %v3487
      %v3502 = vpack.c.b16 %v3490, %v3489
      %v3503 = vpack.c.b16 %v3492, %v3491
      %v3504 = vpack.c.b16 %v3494, %v3493
      %v3505 = vpack.c.b16 %v3496, %v3495
      %v3506 = vpack.c.b16 %v3498, %v3497
      %v3508 = vsel %vm2909, %v3499, 0
      %v3511 = vsel %vm2909, %v3500, 0
      %v3514 = vsel %vm2909, %v3501, 0
      %v3517 = vsel %vm2909, %v3502, 0
      %v3520 = vsel %vm2909, %v3503, 0
      %v3523 = vsel %vm2909, %v3504, 0
      %v3526 = vsel %vm2909, %v3505, 0
      %v3529 = vsel %vm2909, %v3506, 0
      %v3532 = vsel %vm2934, %v3466, 0
      %3534 = vmatprep.subr.bf16.mxu0 0
      %3535 = vmatpush1.bf16.msra.mxu0 0
      %3536 = vmatprep.subr.bf16.mxu0 0
      %3537 = vmatpush1.bf16.msra.mxu0 0
      %3538 = vmatprep.subr.bf16.mxu0 0
      %3539 = vmatpush1.bf16.msra.mxu0 0
      %3540 = vmatprep.subr.bf16.mxu0 0
      %3541 = vmatpush1.bf16.msra.mxu0 0
      %3542 = vmatprep.subr.bf16.mxu0 0
      %3543 = vmatpush1.bf16.msra.mxu0 0
      %3544 = vmatprep.subr.bf16.mxu0 0
      %3545 = vmatpush1.bf16.msra.mxu0 0
      %3546 = vmatprep.subr.bf16.mxu0 0
      %3547 = vmatpush1.bf16.msra.mxu0 0
      %3548 = vmatprep.subr.bf16.mxu0 0
      %3549 = vmatpush1.bf16.msra.mxu0 %v3532
      %3550 = vmatprep.subr.bf16.mxu0 0
      %3551 = vmatpush2.bf16.msra.mxu0 0
      %3552 = vmatprep.subr.bf16.mxu0 0
      %3553 = vmatpush2.bf16.msra.mxu0 0
      %3554 = vmatprep.subr.bf16.mxu0 0
      %3555 = vmatpush2.bf16.msra.mxu0 0
      %3556 = vmatprep.subr.bf16.mxu0 0
      %3557 = vmatpush2.bf16.msra.mxu0 0
      %3558 = vmatprep.subr.bf16.mxu0 0
      %3559 = vmatpush2.bf16.msra.mxu0 0
      %3560 = vmatprep.subr.bf16.mxu0 0
      %3561 = vmatpush2.bf16.msra.mxu0 0
      %3562 = vmatprep.subr.bf16.mxu0 0
      %3563 = vmatpush2.bf16.msra.mxu0 0
      %3564 = vmatprep.subr.bf16.mxu0 0
      %3565 = vmatpush2.bf16.msra.mxu0 0
      %3566 = vmatprep.mubr.bf16.mxu0 0
      %3567 = vmatmul.mubr.bf16.gmra.mxu0 %v3508
      %v3568 = vpop.f32.mrf.mxu0
      %v3569 = vadd.f32 0.0, %v3568
      %v3570 = vpop.f32.mrf.mxu0
      %v3571 = vpop.f32.mrf.mxu0
      %v3572 = vadd.f32 0.0, %v3571
      %v3573 = vpop.f32.mrf.mxu0
      %3574 = vmatprep.mubr.bf16.mxu0 0
      %3575 = vmatmul.mubr.bf16.gmra.mxu0 %v3511
      %v3576 = vpop.f32.mrf.mxu0
      %v3577 = vadd.f32 0.0, %v3576
      %v3578 = vpop.f32.mrf.mxu0
      %v3579 = vpop.f32.mrf.mxu0
      %v3580 = vadd.f32 0.0, %v3579
      %v3581 = vpop.f32.mrf.mxu0
      %3582 = vmatprep.mubr.bf16.mxu0 0
      %3583 = vmatmul.mubr.bf16.gmra.mxu0 %v3514
      %v3584 = vpop.f32.mrf.mxu0
      %v3585 = vadd.f32 0.0, %v3584
      %v3586 = vpop.f32.mrf.mxu0
      %v3587 = vpop.f32.mrf.mxu0
      %v3588 = vadd.f32 0.0, %v3587
      %v3589 = vpop.f32.mrf.mxu0
      %3590 = vmatprep.mubr.bf16.mxu0 0
      %3591 = vmatmul.mubr.bf16.gmra.mxu0 %v3517
      %v3592 = vpop.f32.mrf.mxu0
      %v3593 = vadd.f32 0.0, %v3592
      %v3594 = vpop.f32.mrf.mxu0
      %v3595 = vpop.f32.mrf.mxu0
      %v3596 = vadd.f32 0.0, %v3595
      %v3597 = vpop.f32.mrf.mxu0
      %3598 = vmatprep.mubr.bf16.mxu0 0
      %3599 = vmatmul.mubr.bf16.gmra.mxu0 %v3520
      %v3600 = vpop.f32.mrf.mxu0
      %v3601 = vadd.f32 0.0, %v3600
      %v3602 = vpop.f32.mrf.mxu0
      %v3603 = vpop.f32.mrf.mxu0
      %v3604 = vadd.f32 0.0, %v3603
      %v3605 = vpop.f32.mrf.mxu0
      %3606 = vmatprep.mubr.bf16.mxu0 0
      %3607 = vmatmul.mubr.bf16.gmra.mxu0 %v3523
      %v3608 = vpop.f32.mrf.mxu0
      %v3609 = vadd.f32 0.0, %v3608
      %v3610 = vpop.f32.mrf.mxu0
      %v3611 = vpop.f32.mrf.mxu0
      %v3612 = vadd.f32 0.0, %v3611
      %v3613 = vpop.f32.mrf.mxu0
      %3614 = vmatprep.mubr.bf16.mxu0 0
      %3615 = vmatmul.mubr.bf16.gmra.mxu0 %v3526
      %v3616 = vpop.f32.mrf.mxu0
      %v3617 = vadd.f32 0.0, %v3616
      %v3618 = vpop.f32.mrf.mxu0
      %v3619 = vpop.f32.mrf.mxu0
      %v3620 = vadd.f32 0.0, %v3619
      %v3621 = vpop.f32.mrf.mxu0
      %3622 = vmatprep.mubr.bf16.mxu0 0
      %3623 = vmatmul.mubr.bf16.gmra.mxu0 %v3529
      %v3624 = vpop.f32.mrf.mxu0
      %v3625 = vadd.f32 0.0, %v3624
      %v3626 = vpop.f32.mrf.mxu0
      %v3627 = vpop.f32.mrf.mxu0
      %v3628 = vadd.f32 0.0, %v3627
      %v3629 = vpop.f32.mrf.mxu0
      %3630 = vdwg.mxu0
      %v3631 = vadd.f32 %v3432, %v3569
      %v3632 = vadd.f32 %v3433, %v3572
      %v3633 = vadd.f32 %v3434, %v3577
      %v3634 = vadd.f32 %v3435, %v3580
      %v3635 = vadd.f32 %v3436, %v3585
      %v3636 = vadd.f32 %v3437, %v3588
      %v3637 = vadd.f32 %v3438, %v3593
      %v3638 = vadd.f32 %v3439, %v3596
      %v3639 = vadd.f32 %v3440, %v3601
      %v3640 = vadd.f32 %v3441, %v3604
      %v3641 = vadd.f32 %v3442, %v3609
      %v3642 = vadd.f32 %v3443, %v3612
      %v3643 = vadd.f32 %v3444, %v3617
      %v3644 = vadd.f32 %v3445, %v3620
      %v3645 = vadd.f32 %v3446, %v3625
      %v3646 = vadd.f32 %v3447, %v3628
      %v3647 = vld [vmem:[%s3448] sm:$0xf]
      %v3648 = vld [vmem:[%s3448 + $0x4] sm:$0xf]
      %v3649 = vld [vmem:[%s3448 + $0x8] sm:$0x1]
      %v3650 = vld [vmem:[%s3448 + $0xc] sm:$0xf]
      %v3651 = vld [vmem:[%s3448 + $0x10] sm:$0xf]
      %v3652 = vld [vmem:[%s3448 + $0x14] sm:$0x1]
      %v3653 = vld [vmem:[%s3448 + $0x18] sm:$0xf]
      %v3654 = vld [vmem:[%s3448 + $0x1c] sm:$0xf]
      %v3655 = vld [vmem:[%s3448 + $0x20] sm:$0x1]
      %v3656 = vld [vmem:[%s3448 + $0x24] sm:$0xf]
      %v3657 = vld [vmem:[%s3448 + $0x28] sm:$0xf]
      %v3658 = vld [vmem:[%s3448 + $0x2c] sm:$0x1]
      %v3659 = vld [vmem:[%s3448 + $0x30] sm:$0xf]
      %v3660 = vld [vmem:[%s3448 + $0x34] sm:$0xf]
      %v3661 = vld [vmem:[%s3448 + $0x38] sm:$0x1]
      %v3662 = vld [vmem:[%s3448 + $0x3c] sm:$0xf]
      %v3663 = vld [vmem:[%s3448 + $0x40] sm:$0xf]
      %v3664 = vld [vmem:[%s3448 + $0x44] sm:$0x1]
      %v3665 = vld [vmem:[%s3448 + $0x48] sm:$0xf]
      %v3666 = vld [vmem:[%s3448 + $0x4c] sm:$0xf]
      %v3667 = vld [vmem:[%s3448 + $0x50] sm:$0x1]
      %v3668 = vld [vmem:[%s3448 + $0x54] sm:$0xf]
      %v3669 = vld [vmem:[%s3448 + $0x58] sm:$0xf]
      %v3670 = vld [vmem:[%s3448 + $0x5c] sm:$0x1]
      %v3672 = vshrl.u32 %v3647, 16
      %v3674 = vrot.slane %v3672, 4
      %v3675 = vshll.u32 %v3647, 16
      %v3677 = vrot.slane %v3675, 5
      %v3678 = vor.u32 %v3674, %v3677
      %v3679 = vrot.slane %v3678, 4
      %v3681 = vshll.u32 %v3648, 16
      %v3683 = vrot.slane %v3681, 5
      %v3684 = vsel %vm2690, %v3679, %v3683
      %v3685 = vshrl.u32 %v3648, 16
      %v3687 = vrot.slane %v3685, 4
      %v3688 = vor.u32 %v3687, %v3683
      %v3689 = vrot.slane %v3688, 4
      %v3691 = vshll.u32 %v3649, 16
      %v3693 = vrot.slane %v3691, 5
      %v3694 = vsel %vm2690, %v3689, %v3693
      %v3696 = vshrl.u32 %v3650, 16
      %v3698 = vrot.slane %v3696, 4
      %v3699 = vshll.u32 %v3650, 16
      %v3701 = vrot.slane %v3699, 5
      %v3702 = vor.u32 %v3698, %v3701
      %v3703 = vrot.slane %v3702, 4
      %v3705 = vshll.u32 %v3651, 16
      %v3707 = vrot.slane %v3705, 5
      %v3708 = vsel %vm2690, %v3703, %v3707
      %v3709 = vshrl.u32 %v3651, 16
      %v3711 = vrot.slane %v3709, 4
      %v3712 = vor.u32 %v3711, %v3707
      %v3713 = vrot.slane %v3712, 4
      %v3715 = vshll.u32 %v3652, 16
      %v3717 = vrot.slane %v3715, 5
      %v3718 = vsel %vm2690, %v3713, %v3717
      %v3720 = vshrl.u32 %v3653, 16
      %v3722 = vrot.slane %v3720, 4
      %v3723 = vshll.u32 %v3653, 16
      %v3725 = vrot.slane %v3723, 5
      %v3726 = vor.u32 %v3722, %v3725
      %v3727 = vrot.slane %v3726, 4
      %v3729 = vshll.u32 %v3654, 16
      %v3731 = vrot.slane %v3729, 5
      %v3732 = vsel %vm2690, %v3727, %v3731
      %v3733 = vshrl.u32 %v3654, 16
      %v3735 = vrot.slane %v3733, 4
      %v3736 = vor.u32 %v3735, %v3731
      %v3737 = vrot.slane %v3736, 4
      %v3739 = vshll.u32 %v3655, 16
      %v3741 = vrot.slane %v3739, 5
      %v3742 = vsel %vm2690, %v3737, %v3741
      %v3744 = vshrl.u32 %v3656, 16
      %v3746 = vrot.slane %v3744, 4
      %v3747 = vshll.u32 %v3656, 16
      %v3749 = vrot.slane %v3747, 5
      %v3750 = vor.u32 %v3746, %v3749
      %v3751 = vrot.slane %v3750, 4
      %v3753 = vshll.u32 %v3657, 16
      %v3755 = vrot.slane %v3753, 5
      %v3756 = vsel %vm2690, %v3751, %v3755
      %v3757 = vshrl.u32 %v3657, 16
      %v3759 = vrot.slane %v3757, 4
      %v3760 = vor.u32 %v3759, %v3755
      %v3761 = vrot.slane %v3760, 4
      %v3763 = vshll.u32 %v3658, 16
      %v3765 = vrot.slane %v3763, 5
      %v3766 = vsel %vm2690, %v3761, %v3765
      %v3768 = vshrl.u32 %v3659, 16
      %v3770 = vrot.slane %v3768, 4
      %v3771 = vshll.u32 %v3659, 16
      %v3773 = vrot.slane %v3771, 5
      %v3774 = vor.u32 %v3770, %v3773
      %v3775 = vrot.slane %v3774, 4
      %v3777 = vshll.u32 %v3660, 16
      %v3779 = vrot.slane %v3777, 5
      %v3780 = vsel %vm2690, %v3775, %v3779
      %v3781 = vshrl.u32 %v3660, 16
      %v3783 = vrot.slane %v3781, 4
      %v3784 = vor.u32 %v3783, %v3779
      %v3785 = vrot.slane %v3784, 4
      %v3787 = vshll.u32 %v3661, 16
      %v3789 = vrot.slane %v3787, 5
      %v3790 = vsel %vm2690, %v3785, %v3789
      %v3792 = vshrl.u32 %v3662, 16
      %v3794 = vrot.slane %v3792, 4
      %v3795 = vshll.u32 %v3662, 16
      %v3797 = vrot.slane %v3795, 5
      %v3798 = vor.u32 %v3794, %v3797
      %v3799 = vrot.slane %v3798, 4
      %v3801 = vshll.u32 %v3663, 16
      %v3803 = vrot.slane %v3801, 5
      %v3804 = vsel %vm2690, %v3799, %v3803
      %v3805 = vshrl.u32 %v3663, 16
      %v3807 = vrot.slane %v3805, 4
      %v3808 = vor.u32 %v3807, %v3803
      %v3809 = vrot.slane %v3808, 4
      %v3811 = vshll.u32 %v3664, 16
      %v3813 = vrot.slane %v3811, 5
      %v3814 = vsel %vm2690, %v3809, %v3813
      %v3816 = vshrl.u32 %v3665, 16
      %v3818 = vrot.slane %v3816, 4
      %v3819 = vshll.u32 %v3665, 16
      %v3821 = vrot.slane %v3819, 5
      %v3822 = vor.u32 %v3818, %v3821
      %v3823 = vrot.slane %v3822, 4
      %v3825 = vshll.u32 %v3666, 16
      %v3827 = vrot.slane %v3825, 5
      %v3828 = vsel %vm2690, %v3823, %v3827
      %v3829 = vshrl.u32 %v3666, 16
      %v3831 = vrot.slane %v3829, 4
      %v3832 = vor.u32 %v3831, %v3827
      %v3833 = vrot.slane %v3832, 4
      %v3835 = vshll.u32 %v3667, 16
      %v3837 = vrot.slane %v3835, 5
      %v3838 = vsel %vm2690, %v3833, %v3837
      %v3840 = vshrl.u32 %v3668, 16
      %v3842 = vrot.slane %v3840, 4
      %v3843 = vshll.u32 %v3668, 16
      %v3845 = vrot.slane %v3843, 5
      %v3846 = vor.u32 %v3842, %v3845
      %v3847 = vrot.slane %v3846, 4
      %v3849 = vshll.u32 %v3669, 16
      %v3851 = vrot.slane %v3849, 5
      %v3852 = vsel %vm2690, %v3847, %v3851
      %v3853 = vshrl.u32 %v3669, 16
      %v3855 = vrot.slane %v3853, 4
      %v3856 = vor.u32 %v3855, %v3851
      %v3857 = vrot.slane %v3856, 4
      %v3859 = vshll.u32 %v3670, 16
      %v3861 = vrot.slane %v3859, 5
      %v3862 = vsel %vm2690, %v3857, %v3861
      %s3863 = scalar_lea.vmem %s539, 16
      %v3864 = vld [vmem:[%s3863] sm:$0xf]
      %v3865 = vunpack.c.l.b16 %v3684
      %v3866 = vunpack.c.l.b16 %v3694
      %v3867 = vunpack.c.l.b16 %v3708
      %v3868 = vunpack.c.l.b16 %v3718
      %v3869 = vunpack.c.l.b16 %v3732
      %v3870 = vunpack.c.l.b16 %v3742
      %v3871 = vunpack.c.l.b16 %v3756
      %v3872 = vunpack.c.l.b16 %v3766
      %v3873 = vunpack.c.l.b16 %v3780
      %v3874 = vunpack.c.l.b16 %v3790
      %v3875 = vunpack.c.l.b16 %v3804
      %v3876 = vunpack.c.l.b16 %v3814
      %v3877 = vunpack.c.l.b16 %v3828
      %v3878 = vunpack.c.l.b16 %v3838
      %v3879 = vunpack.c.l.b16 %v3852
      %v3880 = vunpack.c.l.b16 %v3862
      %v3881 = vpack.c.b16 %v3866, %v3865
      %v3882 = vpack.c.b16 %v3868, %v3867
      %v3883 = vpack.c.b16 %v3870, %v3869
      %v3884 = vpack.c.b16 %v3872, %v3871
      %v3885 = vpack.c.b16 %v3874, %v3873
      %v3886 = vpack.c.b16 %v3876, %v3875
      %v3887 = vpack.c.b16 %v3878, %v3877
      %v3888 = vpack.c.b16 %v3880, %v3879
      %v3890 = vsel %vm2909, %v3881, 0
      %v3893 = vsel %vm2909, %v3882, 0
      %v3896 = vsel %vm2909, %v3883, 0
      %v3899 = vsel %vm2909, %v3884, 0
      %v3902 = vsel %vm2909, %v3885, 0
      %v3905 = vsel %vm2909, %v3886, 0
      %v3908 = vsel %vm2909, %v3887, 0
      %v3911 = vsel %vm2909, %v3888, 0
      %v3914 = vsel %vm2934, %v3864, 0
      %3916 = vmatprep.subr.bf16.mxu0 0
      %3917 = vmatpush1.bf16.msra.mxu0 0
      %3918 = vmatprep.subr.bf16.mxu0 0
      %3919 = vmatpush1.bf16.msra.mxu0 0
      %3920 = vmatprep.subr.bf16.mxu0 0
      %3921 = vmatpush1.bf16.msra.mxu0 0
      %3922 = vmatprep.subr.bf16.mxu0 0
      %3923 = vmatpush1.bf16.msra.mxu0 0
      %3924 = vmatprep.subr.bf16.mxu0 0
      %3925 = vmatpush1.bf16.msra.mxu0 0
      %3926 = vmatprep.subr.bf16.mxu0 0
      %3927 = vmatpush1.bf16.msra.mxu0 0
      %3928 = vmatprep.subr.bf16.mxu0 0
      %3929 = vmatpush1.bf16.msra.mxu0 0
      %3930 = vmatprep.subr.bf16.mxu0 0
      %3931 = vmatpush1.bf16.msra.mxu0 %v3914
      %3932 = vmatprep.subr.bf16.mxu0 0
      %3933 = vmatpush2.bf16.msra.mxu0 0
      %3934 = vmatprep.subr.bf16.mxu0 0
      %3935 = vmatpush2.bf16.msra.mxu0 0
      %3936 = vmatprep.subr.bf16.mxu0 0
      %3937 = vmatpush2.bf16.msra.mxu0 0
      %3938 = vmatprep.subr.bf16.mxu0 0
      %3939 = vmatpush2.bf16.msra.mxu0 0
      %3940 = vmatprep.subr.bf16.mxu0 0
      %3941 = vmatpush2.bf16.msra.mxu0 0
      %3942 = vmatprep.subr.bf16.mxu0 0
      %3943 = vmatpush2.bf16.msra.mxu0 0
      %3944 = vmatprep.subr.bf16.mxu0 0
      %3945 = vmatpush2.bf16.msra.mxu0 0
      %3946 = vmatprep.subr.bf16.mxu0 0
      %3947 = vmatpush2.bf16.msra.mxu0 0
      %3948 = vmatprep.mubr.bf16.mxu0 0
      %3949 = vmatmul.mubr.bf16.gmra.mxu0 %v3890
      %v3950 = vpop.f32.mrf.mxu0
      %v3951 = vadd.f32 0.0, %v3950
      %v3952 = vpop.f32.mrf.mxu0
      %v3953 = vpop.f32.mrf.mxu0
      %v3954 = vadd.f32 0.0, %v3953
      %v3955 = vpop.f32.mrf.mxu0
      %3956 = vmatprep.mubr.bf16.mxu0 0
      %3957 = vmatmul.mubr.bf16.gmra.mxu0 %v3893
      %v3958 = vpop.f32.mrf.mxu0
      %v3959 = vadd.f32 0.0, %v3958
      %v3960 = vpop.f32.mrf.mxu0
      %v3961 = vpop.f32.mrf.mxu0
      %v3962 = vadd.f32 0.0, %v3961
      %v3963 = vpop.f32.mrf.mxu0
      %3964 = vmatprep.mubr.bf16.mxu0 0
      %3965 = vmatmul.mubr.bf16.gmra.mxu0 %v3896
      %v3966 = vpop.f32.mrf.mxu0
      %v3967 = vadd.f32 0.0, %v3966
      %v3968 = vpop.f32.mrf.mxu0
      %v3969 = vpop.f32.mrf.mxu0
      %v3970 = vadd.f32 0.0, %v3969
      %v3971 = vpop.f32.mrf.mxu0
      %3972 = vmatprep.mubr.bf16.mxu0 0
      %3973 = vmatmul.mubr.bf16.gmra.mxu0 %v3899
      %v3974 = vpop.f32.mrf.mxu0
      %v3975 = vadd.f32 0.0, %v3974
      %v3976 = vpop.f32.mrf.mxu0
      %v3977 = vpop.f32.mrf.mxu0
      %v3978 = vadd.f32 0.0, %v3977
      %v3979 = vpop.f32.mrf.mxu0
      %3980 = vmatprep.mubr.bf16.mxu0 0
      %3981 = vmatmul.mubr.bf16.gmra.mxu0 %v3902
      %v3982 = vpop.f32.mrf.mxu0
      %v3983 = vadd.f32 0.0, %v3982
      %v3984 = vpop.f32.mrf.mxu0
      %v3985 = vpop.f32.mrf.mxu0
      %v3986 = vadd.f32 0.0, %v3985
      %v3987 = vpop.f32.mrf.mxu0
      %3988 = vmatprep.mubr.bf16.mxu0 0
      %3989 = vmatmul.mubr.bf16.gmra.mxu0 %v3905
      %v3990 = vpop.f32.mrf.mxu0
      %v3991 = vadd.f32 0.0, %v3990
      %v3992 = vpop.f32.mrf.mxu0
      %v3993 = vpop.f32.mrf.mxu0
      %v3994 = vadd.f32 0.0, %v3993
      %v3995 = vpop.f32.mrf.mxu0
      %3996 = vmatprep.mubr.bf16.mxu0 0
      %3997 = vmatmul.mubr.bf16.gmra.mxu0 %v3908
      %v3998 = vpop.f32.mrf.mxu0
      %v3999 = vadd.f32 0.0, %v3998
      %v4000 = vpop.f32.mrf.mxu0
      %v4001 = vpop.f32.mrf.mxu0
      %v4002 = vadd.f32 0.0, %v4001
      %v4003 = vpop.f32.mrf.mxu0
      %4004 = vmatprep.mubr.bf16.mxu0 0
      %4005 = vmatmul.mubr.bf16.gmra.mxu0 %v3911
      %v4006 = vpop.f32.mrf.mxu0
      %v4007 = vadd.f32 0.0, %v4006
      %v4008 = vpop.f32.mrf.mxu0
      %v4009 = vpop.f32.mrf.mxu0
      %v4010 = vadd.f32 0.0, %v4009
      %v4011 = vpop.f32.mrf.mxu0
      %4012 = vdwg.mxu0
      %v4013 = vadd.f32 %v3631, %v3951
      %v4014 = vadd.f32 %v3632, %v3954
      %v4015 = vadd.f32 %v3633, %v3959
      %v4016 = vadd.f32 %v3634, %v3962
      %v4017 = vadd.f32 %v3635, %v3967
      %v4018 = vadd.f32 %v3636, %v3970
      %v4019 = vadd.f32 %v3637, %v3975
      %v4020 = vadd.f32 %v3638, %v3978
      %v4021 = vadd.f32 %v3639, %v3983
      %v4022 = vadd.f32 %v3640, %v3986
      %v4023 = vadd.f32 %v3641, %v3991
      %v4024 = vadd.f32 %v3642, %v3994
      %v4025 = vadd.f32 %v3643, %v3999
      %v4026 = vadd.f32 %v3644, %v4002
      %v4027 = vadd.f32 %v3645, %v4007
      %v4028 = vadd.f32 %v3646, %v4010
      %v4029 = vld [vmem:[%s3448] sm:$0xe]
      %v4030 = vld [vmem:[%s3448 + $0xc] sm:$0xe]
      %v4031 = vld [vmem:[%s3448 + $0x18] sm:$0xe]
      %v4032 = vld [vmem:[%s3448 + $0x24] sm:$0xe]
      %v4033 = vld [vmem:[%s3448 + $0x30] sm:$0xe]
      %v4034 = vld [vmem:[%s3448 + $0x3c] sm:$0xe]
      %v4035 = vld [vmem:[%s3448 + $0x48] sm:$0xe]
      %v4036 = vld [vmem:[%s3448 + $0x54] sm:$0xe]
      %v4061 = vrot.slane %v4029, 5
      %v4062 = vrot.slane %v4061, 4
      %v4063 = vrot.slane %v3648, 5
      %v4064 = vsel %vm3225, %v4062, %v4063
      %v4065 = vrot.slane %v4063, 4
      %v4066 = vrot.slane %v3649, 5
      %v4067 = vsel %vm3225, %v4065, %v4066
      %v4068 = vrot.slane %v4030, 5
      %v4069 = vrot.slane %v4068, 4
      %v4070 = vrot.slane %v3651, 5
      %v4071 = vsel %vm3225, %v4069, %v4070
      %v4072 = vrot.slane %v4070, 4
      %v4073 = vrot.slane %v3652, 5
      %v4074 = vsel %vm3225, %v4072, %v4073
      %v4075 = vrot.slane %v4031, 5
      %v4076 = vrot.slane %v4075, 4
      %v4077 = vrot.slane %v3654, 5
      %v4078 = vsel %vm3225, %v4076, %v4077
      %v4079 = vrot.slane %v4077, 4
      %v4080 = vrot.slane %v3655, 5
      %v4081 = vsel %vm3225, %v4079, %v4080
      %v4082 = vrot.slane %v4032, 5
      %v4083 = vrot.slane %v4082, 4
      %v4084 = vrot.slane %v3657, 5
      %v4085 = vsel %vm3225, %v4083, %v4084
      %v4086 = vrot.slane %v4084, 4
      %v4087 = vrot.slane %v3658, 5
      %v4088 = vsel %vm3225, %v4086, %v4087
      %v4089 = vrot.slane %v4033, 5
      %v4090 = vrot.slane %v4089, 4
      %v4091 = vrot.slane %v3660, 5
      %v4092 = vsel %vm3225, %v4090, %v4091
      %v4093 = vrot.slane %v4091, 4
      %v4094 = vrot.slane %v3661, 5
      %v4095 = vsel %vm3225, %v4093, %v4094
      %v4096 = vrot.slane %v4034, 5
      %v4097 = vrot.slane %v4096, 4
      %v4098 = vrot.slane %v3663, 5
      %v4099 = vsel %vm3225, %v4097, %v4098
      %v4100 = vrot.slane %v4098, 4
      %v4101 = vrot.slane %v3664, 5
      %v4102 = vsel %vm3225, %v4100, %v4101
      %v4103 = vrot.slane %v4035, 5
      %v4104 = vrot.slane %v4103, 4
      %v4105 = vrot.slane %v3666, 5
      %v4106 = vsel %vm3225, %v4104, %v4105
      %v4107 = vrot.slane %v4105, 4
      %v4108 = vrot.slane %v3667, 5
      %v4109 = vsel %vm3225, %v4107, %v4108
      %v4110 = vrot.slane %v4036, 5
      %v4111 = vrot.slane %v4110, 4
      %v4112 = vrot.slane %v3669, 5
      %v4113 = vsel %vm3225, %v4111, %v4112
      %v4114 = vrot.slane %v4112, 4
      %v4115 = vrot.slane %v3670, 5
      %v4116 = vsel %vm3225, %v4114, %v4115
      %s4117 = scalar_lea.vmem %s539, 20
      %v4118 = vld [vmem:[%s4117] sm:$0xf]
      %v4119 = vunpack.c.l.b16 %v4064
      %v4120 = vunpack.c.l.b16 %v4067
      %v4121 = vunpack.c.l.b16 %v4071
      %v4122 = vunpack.c.l.b16 %v4074
      %v4123 = vunpack.c.l.b16 %v4078
      %v4124 = vunpack.c.l.b16 %v4081
      %v4125 = vunpack.c.l.b16 %v4085
      %v4126 = vunpack.c.l.b16 %v4088
      %v4127 = vunpack.c.l.b16 %v4092
      %v4128 = vunpack.c.l.b16 %v4095
      %v4129 = vunpack.c.l.b16 %v4099
      %v4130 = vunpack.c.l.b16 %v4102
      %v4131 = vunpack.c.l.b16 %v4106
      %v4132 = vunpack.c.l.b16 %v4109
      %v4133 = vunpack.c.l.b16 %v4113
      %v4134 = vunpack.c.l.b16 %v4116
      %v4135 = vpack.c.b16 %v4120, %v4119
      %v4136 = vpack.c.b16 %v4122, %v4121
      %v4137 = vpack.c.b16 %v4124, %v4123
      %v4138 = vpack.c.b16 %v4126, %v4125
      %v4139 = vpack.c.b16 %v4128, %v4127
      %v4140 = vpack.c.b16 %v4130, %v4129
      %v4141 = vpack.c.b16 %v4132, %v4131
      %v4142 = vpack.c.b16 %v4134, %v4133
      %v4144 = vsel %vm2909, %v4135, 0
      %v4147 = vsel %vm2909, %v4136, 0
      %v4150 = vsel %vm2909, %v4137, 0
      %v4153 = vsel %vm2909, %v4138, 0
      %v4156 = vsel %vm2909, %v4139, 0
      %v4159 = vsel %vm2909, %v4140, 0
      %v4162 = vsel %vm2909, %v4141, 0
      %v4165 = vsel %vm2909, %v4142, 0
      %v4168 = vsel %vm2934, %v4118, 0
      %4170 = vmatprep.subr.bf16.mxu0 0
      %4171 = vmatpush1.bf16.msra.mxu0 0
      %4172 = vmatprep.subr.bf16.mxu0 0
      %4173 = vmatpush1.bf16.msra.mxu0 0
      %4174 = vmatprep.subr.bf16.mxu0 0
      %4175 = vmatpush1.bf16.msra.mxu0 0
      %4176 = vmatprep.subr.bf16.mxu0 0
      %4177 = vmatpush1.bf16.msra.mxu0 0
      %4178 = vmatprep.subr.bf16.mxu0 0
      %4179 = vmatpush1.bf16.msra.mxu0 0
      %4180 = vmatprep.subr.bf16.mxu0 0
      %4181 = vmatpush1.bf16.msra.mxu0 0
      %4182 = vmatprep.subr.bf16.mxu0 0
      %4183 = vmatpush1.bf16.msra.mxu0 0
      %4184 = vmatprep.subr.bf16.mxu0 0
      %4185 = vmatpush1.bf16.msra.mxu0 %v4168
      %4186 = vmatprep.subr.bf16.mxu0 0
      %4187 = vmatpush2.bf16.msra.mxu0 0
      %4188 = vmatprep.subr.bf16.mxu0 0
      %4189 = vmatpush2.bf16.msra.mxu0 0
      %4190 = vmatprep.subr.bf16.mxu0 0
      %4191 = vmatpush2.bf16.msra.mxu0 0
      %4192 = vmatprep.subr.bf16.mxu0 0
      %4193 = vmatpush2.bf16.msra.mxu0 0
      %4194 = vmatprep.subr.bf16.mxu0 0
      %4195 = vmatpush2.bf16.msra.mxu0 0
      %4196 = vmatprep.subr.bf16.mxu0 0
      %4197 = vmatpush2.bf16.msra.mxu0 0
      %4198 = vmatprep.subr.bf16.mxu0 0
      %4199 = vmatpush2.bf16.msra.mxu0 0
      %4200 = vmatprep.subr.bf16.mxu0 0
      %4201 = vmatpush2.bf16.msra.mxu0 0
      %4202 = vmatprep.mubr.bf16.mxu0 0
      %4203 = vmatmul.mubr.bf16.gmra.mxu0 %v4144
      %v4204 = vpop.f32.mrf.mxu0
      %v4205 = vadd.f32 0.0, %v4204
      %v4206 = vpop.f32.mrf.mxu0
      %v4207 = vpop.f32.mrf.mxu0
      %v4208 = vadd.f32 0.0, %v4207
      %v4209 = vpop.f32.mrf.mxu0
      %4210 = vmatprep.mubr.bf16.mxu0 0
      %4211 = vmatmul.mubr.bf16.gmra.mxu0 %v4147
      %v4212 = vpop.f32.mrf.mxu0
      %v4213 = vadd.f32 0.0, %v4212
      %v4214 = vpop.f32.mrf.mxu0
      %v4215 = vpop.f32.mrf.mxu0
      %v4216 = vadd.f32 0.0, %v4215
      %v4217 = vpop.f32.mrf.mxu0
      %4218 = vmatprep.mubr.bf16.mxu0 0
      %4219 = vmatmul.mubr.bf16.gmra.mxu0 %v4150
      %v4220 = vpop.f32.mrf.mxu0
      %v4221 = vadd.f32 0.0, %v4220
      %v4222 = vpop.f32.mrf.mxu0
      %v4223 = vpop.f32.mrf.mxu0
      %v4224 = vadd.f32 0.0, %v4223
      %v4225 = vpop.f32.mrf.mxu0
      %4226 = vmatprep.mubr.bf16.mxu0 0
      %4227 = vmatmul.mubr.bf16.gmra.mxu0 %v4153
      %v4228 = vpop.f32.mrf.mxu0
      %v4229 = vadd.f32 0.0, %v4228
      %v4230 = vpop.f32.mrf.mxu0
      %v4231 = vpop.f32.mrf.mxu0
      %v4232 = vadd.f32 0.0, %v4231
      %v4233 = vpop.f32.mrf.mxu0
      %4234 = vmatprep.mubr.bf16.mxu0 0
      %4235 = vmatmul.mubr.bf16.gmra.mxu0 %v4156
      %v4236 = vpop.f32.mrf.mxu0
      %v4237 = vadd.f32 0.0, %v4236
      %v4238 = vpop.f32.mrf.mxu0
      %v4239 = vpop.f32.mrf.mxu0
      %v4240 = vadd.f32 0.0, %v4239
      %v4241 = vpop.f32.mrf.mxu0
      %4242 = vmatprep.mubr.bf16.mxu0 0
      %4243 = vmatmul.mubr.bf16.gmra.mxu0 %v4159
      %v4244 = vpop.f32.mrf.mxu0
      %v4245 = vadd.f32 0.0, %v4244
      %v4246 = vpop.f32.mrf.mxu0
      %v4247 = vpop.f32.mrf.mxu0
      %v4248 = vadd.f32 0.0, %v4247
      %v4249 = vpop.f32.mrf.mxu0
      %4250 = vmatprep.mubr.bf16.mxu0 0
      %4251 = vmatmul.mubr.bf16.gmra.mxu0 %v4162
      %v4252 = vpop.f32.mrf.mxu0
      %v4253 = vadd.f32 0.0, %v4252
      %v4254 = vpop.f32.mrf.mxu0
      %v4255 = vpop.f32.mrf.mxu0
      %v4256 = vadd.f32 0.0, %v4255
      %v4257 = vpop.f32.mrf.mxu0
      %4258 = vmatprep.mubr.bf16.mxu0 0
      %4259 = vmatmul.mubr.bf16.gmra.mxu0 %v4165
      %v4260 = vpop.f32.mrf.mxu0
      %v4261 = vadd.f32 0.0, %v4260
      %v4262 = vpop.f32.mrf.mxu0
      %v4263 = vpop.f32.mrf.mxu0
      %v4264 = vadd.f32 0.0, %v4263
      %v4265 = vpop.f32.mrf.mxu0
      %4266 = vdwg.mxu0
      %v4267 = vadd.f32 %v4013, %v4205
      %v4268 = vadd.f32 %v4014, %v4208
      %v4269 = vadd.f32 %v4015, %v4213
      %v4270 = vadd.f32 %v4016, %v4216
      %v4271 = vadd.f32 %v4017, %v4221
      %v4272 = vadd.f32 %v4018, %v4224
      %v4273 = vadd.f32 %v4019, %v4229
      %v4274 = vadd.f32 %v4020, %v4232
      %v4275 = vadd.f32 %v4021, %v4237
      %v4276 = vadd.f32 %v4022, %v4240
      %v4277 = vadd.f32 %v4023, %v4245
      %v4278 = vadd.f32 %v4024, %v4248
      %v4279 = vadd.f32 %v4025, %v4253
      %v4280 = vadd.f32 %v4026, %v4256
      %v4281 = vadd.f32 %v4027, %v4261
      %v4282 = vadd.f32 %v4028, %v4264
      %s4283 = scalar_lea.vmem [#allocation2], 24
      %v4284 = vld [vmem:[%s4283] sm:$0xf]
      %v4285 = vld [vmem:[%s4283 + $0x4] sm:$0xf]
      %v4286 = vld [vmem:[%s4283 + $0xc] sm:$0xf]
      %v4287 = vld [vmem:[%s4283 + $0x10] sm:$0xf]
      %v4288 = vld [vmem:[%s4283 + $0x18] sm:$0xf]
      %v4289 = vld [vmem:[%s4283 + $0x1c] sm:$0xf]
      %v4290 = vld [vmem:[%s4283 + $0x24] sm:$0xf]
      %v4291 = vld [vmem:[%s4283 + $0x28] sm:$0xf]
      %v4292 = vld [vmem:[%s4283 + $0x30] sm:$0xf]
      %v4293 = vld [vmem:[%s4283 + $0x34] sm:$0xf]
      %v4294 = vld [vmem:[%s4283 + $0x3c] sm:$0xf]
      %v4295 = vld [vmem:[%s4283 + $0x40] sm:$0xf]
      %v4296 = vld [vmem:[%s4283 + $0x48] sm:$0xf]
      %v4297 = vld [vmem:[%s4283 + $0x4c] sm:$0xf]
      %v4298 = vld [vmem:[%s4283 + $0x54] sm:$0xf]
      %v4299 = vld [vmem:[%s4283 + $0x58] sm:$0xf]
      %s4300 = scalar_lea.vmem %s539, 24
      %v4301 = vld [vmem:[%s4300] sm:$0xf]
      %v4318 = vunpack.c.l.b16 %v4284
      %v4319 = vunpack.c.l.b16 %v4285
      %v4320 = vunpack.c.l.b16 %v4286
      %v4321 = vunpack.c.l.b16 %v4287
      %v4322 = vunpack.c.l.b16 %v4288
      %v4323 = vunpack.c.l.b16 %v4289
      %v4324 = vunpack.c.l.b16 %v4290
      %v4325 = vunpack.c.l.b16 %v4291
      %v4326 = vunpack.c.l.b16 %v4292
      %v4327 = vunpack.c.l.b16 %v4293
      %v4328 = vunpack.c.l.b16 %v4294
      %v4329 = vunpack.c.l.b16 %v4295
      %v4330 = vunpack.c.l.b16 %v4296
      %v4331 = vunpack.c.l.b16 %v4297
      %v4332 = vunpack.c.l.b16 %v4298
      %v4333 = vunpack.c.l.b16 %v4299
      %v4334 = vpack.c.b16 %v4319, %v4318
      %v4335 = vpack.c.b16 %v4321, %v4320
      %v4336 = vpack.c.b16 %v4323, %v4322
      %v4337 = vpack.c.b16 %v4325, %v4324
      %v4338 = vpack.c.b16 %v4327, %v4326
      %v4339 = vpack.c.b16 %v4329, %v4328
      %v4340 = vpack.c.b16 %v4331, %v4330
      %v4341 = vpack.c.b16 %v4333, %v4332
      %v4343 = vsel %vm2909, %v4334, 0
      %v4346 = vsel %vm2909, %v4335, 0
      %v4349 = vsel %vm2909, %v4336, 0
      %v4352 = vsel %vm2909, %v4337, 0
      %v4355 = vsel %vm2909, %v4338, 0
      %v4358 = vsel %vm2909, %v4339, 0
      %v4361 = vsel %vm2909, %v4340, 0
      %v4364 = vsel %vm2909, %v4341, 0
      %v4367 = vsel %vm2934, %v4301, 0
      %4369 = vmatprep.subr.bf16.mxu0 0
      %4370 = vmatpush1.bf16.msra.mxu0 0
      %4371 = vmatprep.subr.bf16.mxu0 0
      %4372 = vmatpush1.bf16.msra.mxu0 0
      %4373 = vmatprep.subr.bf16.mxu0 0
      %4374 = vmatpush1.bf16.msra.mxu0 0
      %4375 = vmatprep.subr.bf16.mxu0 0
      %4376 = vmatpush1.bf16.msra.mxu0 0
      %4377 = vmatprep.subr.bf16.mxu0 0
      %4378 = vmatpush1.bf16.msra.mxu0 0
      %4379 = vmatprep.subr.bf16.mxu0 0
      %4380 = vmatpush1.bf16.msra.mxu0 0
      %4381 = vmatprep.subr.bf16.mxu0 0
      %4382 = vmatpush1.bf16.msra.mxu0 0
      %4383 = vmatprep.subr.bf16.mxu0 0
      %4384 = vmatpush1.bf16.msra.mxu0 %v4367
      %4385 = vmatprep.subr.bf16.mxu0 0
      %4386 = vmatpush2.bf16.msra.mxu0 0
      %4387 = vmatprep.subr.bf16.mxu0 0
      %4388 = vmatpush2.bf16.msra.mxu0 0
      %4389 = vmatprep.subr.bf16.mxu0 0
      %4390 = vmatpush2.bf16.msra.mxu0 0
      %4391 = vmatprep.subr.bf16.mxu0 0
      %4392 = vmatpush2.bf16.msra.mxu0 0
      %4393 = vmatprep.subr.bf16.mxu0 0
      %4394 = vmatpush2.bf16.msra.mxu0 0
      %4395 = vmatprep.subr.bf16.mxu0 0
      %4396 = vmatpush2.bf16.msra.mxu0 0
      %4397 = vmatprep.subr.bf16.mxu0 0
      %4398 = vmatpush2.bf16.msra.mxu0 0
      %4399 = vmatprep.subr.bf16.mxu0 0
      %4400 = vmatpush2.bf16.msra.mxu0 0
      %4401 = vmatprep.mubr.bf16.mxu0 0
      %4402 = vmatmul.mubr.bf16.gmra.mxu0 %v4343
      %v4403 = vpop.f32.mrf.mxu0
      %v4404 = vadd.f32 0.0, %v4403
      %v4405 = vpop.f32.mrf.mxu0
      %v4406 = vpop.f32.mrf.mxu0
      %v4407 = vadd.f32 0.0, %v4406
      %v4408 = vpop.f32.mrf.mxu0
      %4409 = vmatprep.mubr.bf16.mxu0 0
      %4410 = vmatmul.mubr.bf16.gmra.mxu0 %v4346
      %v4411 = vpop.f32.mrf.mxu0
      %v4412 = vadd.f32 0.0, %v4411
      %v4413 = vpop.f32.mrf.mxu0
      %v4414 = vpop.f32.mrf.mxu0
      %v4415 = vadd.f32 0.0, %v4414
      %v4416 = vpop.f32.mrf.mxu0
      %4417 = vmatprep.mubr.bf16.mxu0 0
      %4418 = vmatmul.mubr.bf16.gmra.mxu0 %v4349
      %v4419 = vpop.f32.mrf.mxu0
      %v4420 = vadd.f32 0.0, %v4419
      %v4421 = vpop.f32.mrf.mxu0
      %v4422 = vpop.f32.mrf.mxu0
      %v4423 = vadd.f32 0.0, %v4422
      %v4424 = vpop.f32.mrf.mxu0
      %4425 = vmatprep.mubr.bf16.mxu0 0
      %4426 = vmatmul.mubr.bf16.gmra.mxu0 %v4352
      %v4427 = vpop.f32.mrf.mxu0
      %v4428 = vadd.f32 0.0, %v4427
      %v4429 = vpop.f32.mrf.mxu0
      %v4430 = vpop.f32.mrf.mxu0
      %v4431 = vadd.f32 0.0, %v4430
      %v4432 = vpop.f32.mrf.mxu0
      %4433 = vmatprep.mubr.bf16.mxu0 0
      %4434 = vmatmul.mubr.bf16.gmra.mxu0 %v4355
      %v4435 = vpop.f32.mrf.mxu0
      %v4436 = vadd.f32 0.0, %v4435
      %v4437 = vpop.f32.mrf.mxu0
      %v4438 = vpop.f32.mrf.mxu0
      %v4439 = vadd.f32 0.0, %v4438
      %v4440 = vpop.f32.mrf.mxu0
      %4441 = vmatprep.mubr.bf16.mxu0 0
      %4442 = vmatmul.mubr.bf16.gmra.mxu0 %v4358
      %v4443 = vpop.f32.mrf.mxu0
      %v4444 = vadd.f32 0.0, %v4443
      %v4445 = vpop.f32.mrf.mxu0
      %v4446 = vpop.f32.mrf.mxu0
      %v4447 = vadd.f32 0.0, %v4446
      %v4448 = vpop.f32.mrf.mxu0
      %4449 = vmatprep.mubr.bf16.mxu0 0
      %4450 = vmatmul.mubr.bf16.gmra.mxu0 %v4361
      %v4451 = vpop.f32.mrf.mxu0
      %v4452 = vadd.f32 0.0, %v4451
      %v4453 = vpop.f32.mrf.mxu0
      %v4454 = vpop.f32.mrf.mxu0
      %v4455 = vadd.f32 0.0, %v4454
      %v4456 = vpop.f32.mrf.mxu0
      %4457 = vmatprep.mubr.bf16.mxu0 0
      %4458 = vmatmul.mubr.bf16.gmra.mxu0 %v4364
      %v4459 = vpop.f32.mrf.mxu0
      %v4460 = vadd.f32 0.0, %v4459
      %v4461 = vpop.f32.mrf.mxu0
      %v4462 = vpop.f32.mrf.mxu0
      %v4463 = vadd.f32 0.0, %v4462
      %v4464 = vpop.f32.mrf.mxu0
      %4465 = vdwg.mxu0
      %v4466 = vadd.f32 %v4267, %v4404
      %v4467 = vadd.f32 %v4268, %v4407
      %v4468 = vadd.f32 %v4269, %v4412
      %v4469 = vadd.f32 %v4270, %v4415
      %v4470 = vadd.f32 %v4271, %v4420
      %v4471 = vadd.f32 %v4272, %v4423
      %v4472 = vadd.f32 %v4273, %v4428
      %v4473 = vadd.f32 %v4274, %v4431
      %v4474 = vadd.f32 %v4275, %v4436
      %v4475 = vadd.f32 %v4276, %v4439
      %v4476 = vadd.f32 %v4277, %v4444
      %v4477 = vadd.f32 %v4278, %v4447
      %v4478 = vadd.f32 %v4279, %v4452
      %v4479 = vadd.f32 %v4280, %v4455
      %v4480 = vadd.f32 %v4281, %v4460
      %v4481 = vadd.f32 %v4282, %v4463
      %v4482 = vld [vmem:[%s4283] sm:$0xf]
      %v4483 = vld [vmem:[%s4283 + $0x4] sm:$0xf]
      %v4484 = vld [vmem:[%s4283 + $0x8] sm:$0x1]
      %v4485 = vld [vmem:[%s4283 + $0xc] sm:$0xf]
      %v4486 = vld [vmem:[%s4283 + $0x10] sm:$0xf]
      %v4487 = vld [vmem:[%s4283 + $0x14] sm:$0x1]
      %v4488 = vld [vmem:[%s4283 + $0x18] sm:$0xf]
      %v4489 = vld [vmem:[%s4283 + $0x1c] sm:$0xf]
      %v4490 = vld [vmem:[%s4283 + $0x20] sm:$0x1]
      %v4491 = vld [vmem:[%s4283 + $0x24] sm:$0xf]
      %v4492 = vld [vmem:[%s4283 + $0x28] sm:$0xf]
      %v4493 = vld [vmem:[%s4283 + $0x2c] sm:$0x1]
      %v4494 = vld [vmem:[%s4283 + $0x30] sm:$0xf]
      %v4495 = vld [vmem:[%s4283 + $0x34] sm:$0xf]
      %v4496 = vld [vmem:[%s4283 + $0x38] sm:$0x1]
      %v4497 = vld [vmem:[%s4283 + $0x3c] sm:$0xf]
      %v4498 = vld [vmem:[%s4283 + $0x40] sm:$0xf]
      %v4499 = vld [vmem:[%s4283 + $0x44] sm:$0x1]
      %v4500 = vld [vmem:[%s4283 + $0x48] sm:$0xf]
      %v4501 = vld [vmem:[%s4283 + $0x4c] sm:$0xf]
      %v4502 = vld [vmem:[%s4283 + $0x50] sm:$0x1]
      %v4503 = vld [vmem:[%s4283 + $0x54] sm:$0xf]
      %v4504 = vld [vmem:[%s4283 + $0x58] sm:$0xf]
      %v4505 = vld [vmem:[%s4283 + $0x5c] sm:$0x1]
      %v4507 = vshrl.u32 %v4482, 16
      %v4509 = vrot.slane %v4507, 4
      %v4510 = vshll.u32 %v4482, 16
      %v4512 = vrot.slane %v4510, 5
      %v4513 = vor.u32 %v4509, %v4512
      %v4514 = vrot.slane %v4513, 4
      %v4516 = vshll.u32 %v4483, 16
      %v4518 = vrot.slane %v4516, 5
      %v4519 = vsel %vm2690, %v4514, %v4518
      %v4520 = vshrl.u32 %v4483, 16
      %v4522 = vrot.slane %v4520, 4
      %v4523 = vor.u32 %v4522, %v4518
      %v4524 = vrot.slane %v4523, 4
      %v4526 = vshll.u32 %v4484, 16
      %v4528 = vrot.slane %v4526, 5
      %v4529 = vsel %vm2690, %v4524, %v4528
      %v4531 = vshrl.u32 %v4485, 16
      %v4533 = vrot.slane %v4531, 4
      %v4534 = vshll.u32 %v4485, 16
      %v4536 = vrot.slane %v4534, 5
      %v4537 = vor.u32 %v4533, %v4536
      %v4538 = vrot.slane %v4537, 4
      %v4540 = vshll.u32 %v4486, 16
      %v4542 = vrot.slane %v4540, 5
      %v4543 = vsel %vm2690, %v4538, %v4542
      %v4544 = vshrl.u32 %v4486, 16
      %v4546 = vrot.slane %v4544, 4
      %v4547 = vor.u32 %v4546, %v4542
      %v4548 = vrot.slane %v4547, 4
      %v4550 = vshll.u32 %v4487, 16
      %v4552 = vrot.slane %v4550, 5
      %v4553 = vsel %vm2690, %v4548, %v4552
      %v4555 = vshrl.u32 %v4488, 16
      %v4557 = vrot.slane %v4555, 4
      %v4558 = vshll.u32 %v4488, 16
      %v4560 = vrot.slane %v4558, 5
      %v4561 = vor.u32 %v4557, %v4560
      %v4562 = vrot.slane %v4561, 4
      %v4564 = vshll.u32 %v4489, 16
      %v4566 = vrot.slane %v4564, 5
      %v4567 = vsel %vm2690, %v4562, %v4566
      %v4568 = vshrl.u32 %v4489, 16
      %v4570 = vrot.slane %v4568, 4
      %v4571 = vor.u32 %v4570, %v4566
      %v4572 = vrot.slane %v4571, 4
      %v4574 = vshll.u32 %v4490, 16
      %v4576 = vrot.slane %v4574, 5
      %v4577 = vsel %vm2690, %v4572, %v4576
      %v4579 = vshrl.u32 %v4491, 16
      %v4581 = vrot.slane %v4579, 4
      %v4582 = vshll.u32 %v4491, 16
      %v4584 = vrot.slane %v4582, 5
      %v4585 = vor.u32 %v4581, %v4584
      %v4586 = vrot.slane %v4585, 4
      %v4588 = vshll.u32 %v4492, 16
      %v4590 = vrot.slane %v4588, 5
      %v4591 = vsel %vm2690, %v4586, %v4590
      %v4592 = vshrl.u32 %v4492, 16
      %v4594 = vrot.slane %v4592, 4
      %v4595 = vor.u32 %v4594, %v4590
      %v4596 = vrot.slane %v4595, 4
      %v4598 = vshll.u32 %v4493, 16
      %v4600 = vrot.slane %v4598, 5
      %v4601 = vsel %vm2690, %v4596, %v4600
      %v4603 = vshrl.u32 %v4494, 16
      %v4605 = vrot.slane %v4603, 4
      %v4606 = vshll.u32 %v4494, 16
      %v4608 = vrot.slane %v4606, 5
      %v4609 = vor.u32 %v4605, %v4608
      %v4610 = vrot.slane %v4609, 4
      %v4612 = vshll.u32 %v4495, 16
      %v4614 = vrot.slane %v4612, 5
      %v4615 = vsel %vm2690, %v4610, %v4614
      %v4616 = vshrl.u32 %v4495, 16
      %v4618 = vrot.slane %v4616, 4
      %v4619 = vor.u32 %v4618, %v4614
      %v4620 = vrot.slane %v4619, 4
      %v4622 = vshll.u32 %v4496, 16
      %v4624 = vrot.slane %v4622, 5
      %v4625 = vsel %vm2690, %v4620, %v4624
      %v4627 = vshrl.u32 %v4497, 16
      %v4629 = vrot.slane %v4627, 4
      %v4630 = vshll.u32 %v4497, 16
      %v4632 = vrot.slane %v4630, 5
      %v4633 = vor.u32 %v4629, %v4632
      %v4634 = vrot.slane %v4633, 4
      %v4636 = vshll.u32 %v4498, 16
      %v4638 = vrot.slane %v4636, 5
      %v4639 = vsel %vm2690, %v4634, %v4638
      %v4640 = vshrl.u32 %v4498, 16
      %v4642 = vrot.slane %v4640, 4
      %v4643 = vor.u32 %v4642, %v4638
      %v4644 = vrot.slane %v4643, 4
      %v4646 = vshll.u32 %v4499, 16
      %v4648 = vrot.slane %v4646, 5
      %v4649 = vsel %vm2690, %v4644, %v4648
      %v4651 = vshrl.u32 %v4500, 16
      %v4653 = vrot.slane %v4651, 4
      %v4654 = vshll.u32 %v4500, 16
      %v4656 = vrot.slane %v4654, 5
      %v4657 = vor.u32 %v4653, %v4656
      %v4658 = vrot.slane %v4657, 4
      %v4660 = vshll.u32 %v4501, 16
      %v4662 = vrot.slane %v4660, 5
      %v4663 = vsel %vm2690, %v4658, %v4662
      %v4664 = vshrl.u32 %v4501, 16
      %v4666 = vrot.slane %v4664, 4
      %v4667 = vor.u32 %v4666, %v4662
      %v4668 = vrot.slane %v4667, 4
      %v4670 = vshll.u32 %v4502, 16
      %v4672 = vrot.slane %v4670, 5
      %v4673 = vsel %vm2690, %v4668, %v4672
      %v4675 = vshrl.u32 %v4503, 16
      %v4677 = vrot.slane %v4675, 4
      %v4678 = vshll.u32 %v4503, 16
      %v4680 = vrot.slane %v4678, 5
      %v4681 = vor.u32 %v4677, %v4680
      %v4682 = vrot.slane %v4681, 4
      %v4684 = vshll.u32 %v4504, 16
      %v4686 = vrot.slane %v4684, 5
      %v4687 = vsel %vm2690, %v4682, %v4686
      %v4688 = vshrl.u32 %v4504, 16
      %v4690 = vrot.slane %v4688, 4
      %v4691 = vor.u32 %v4690, %v4686
      %v4692 = vrot.slane %v4691, 4
      %v4694 = vshll.u32 %v4505, 16
      %v4696 = vrot.slane %v4694, 5
      %v4697 = vsel %vm2690, %v4692, %v4696
      %s4698 = scalar_lea.vmem %s539, 28
      %v4699 = vld [vmem:[%s4698] sm:$0xf]
      %v4700 = vunpack.c.l.b16 %v4519
      %v4701 = vunpack.c.l.b16 %v4529
      %v4702 = vunpack.c.l.b16 %v4543
      %v4703 = vunpack.c.l.b16 %v4553
      %v4704 = vunpack.c.l.b16 %v4567
      %v4705 = vunpack.c.l.b16 %v4577
      %v4706 = vunpack.c.l.b16 %v4591
      %v4707 = vunpack.c.l.b16 %v4601
      %v4708 = vunpack.c.l.b16 %v4615
      %v4709 = vunpack.c.l.b16 %v4625
      %v4710 = vunpack.c.l.b16 %v4639
      %v4711 = vunpack.c.l.b16 %v4649
      %v4712 = vunpack.c.l.b16 %v4663
      %v4713 = vunpack.c.l.b16 %v4673
      %v4714 = vunpack.c.l.b16 %v4687
      %v4715 = vunpack.c.l.b16 %v4697
      %v4716 = vpack.c.b16 %v4701, %v4700
      %v4717 = vpack.c.b16 %v4703, %v4702
      %v4718 = vpack.c.b16 %v4705, %v4704
      %v4719 = vpack.c.b16 %v4707, %v4706
      %v4720 = vpack.c.b16 %v4709, %v4708
      %v4721 = vpack.c.b16 %v4711, %v4710
      %v4722 = vpack.c.b16 %v4713, %v4712
      %v4723 = vpack.c.b16 %v4715, %v4714
      %v4725 = vsel %vm2909, %v4716, 0
      %v4728 = vsel %vm2909, %v4717, 0
      %v4731 = vsel %vm2909, %v4718, 0
      %v4734 = vsel %vm2909, %v4719, 0
      %v4737 = vsel %vm2909, %v4720, 0
      %v4740 = vsel %vm2909, %v4721, 0
      %v4743 = vsel %vm2909, %v4722, 0
      %v4746 = vsel %vm2909, %v4723, 0
      %v4749 = vsel %vm2934, %v4699, 0
      %4751 = vmatprep.subr.bf16.mxu0 0
      %4752 = vmatpush1.bf16.msra.mxu0 0
      %4753 = vmatprep.subr.bf16.mxu0 0
      %4754 = vmatpush1.bf16.msra.mxu0 0
      %4755 = vmatprep.subr.bf16.mxu0 0
      %4756 = vmatpush1.bf16.msra.mxu0 0
      %4757 = vmatprep.subr.bf16.mxu0 0
      %4758 = vmatpush1.bf16.msra.mxu0 0
      %4759 = vmatprep.subr.bf16.mxu0 0
      %4760 = vmatpush1.bf16.msra.mxu0 0
      %4761 = vmatprep.subr.bf16.mxu0 0
      %4762 = vmatpush1.bf16.msra.mxu0 0
      %4763 = vmatprep.subr.bf16.mxu0 0
      %4764 = vmatpush1.bf16.msra.mxu0 0
      %4765 = vmatprep.subr.bf16.mxu0 0
      %4766 = vmatpush1.bf16.msra.mxu0 %v4749
      %4767 = vmatprep.subr.bf16.mxu0 0
      %4768 = vmatpush2.bf16.msra.mxu0 0
      %4769 = vmatprep.subr.bf16.mxu0 0
      %4770 = vmatpush2.bf16.msra.mxu0 0
      %4771 = vmatprep.subr.bf16.mxu0 0
      %4772 = vmatpush2.bf16.msra.mxu0 0
      %4773 = vmatprep.subr.bf16.mxu0 0
      %4774 = vmatpush2.bf16.msra.mxu0 0
      %4775 = vmatprep.subr.bf16.mxu0 0
      %4776 = vmatpush2.bf16.msra.mxu0 0
      %4777 = vmatprep.subr.bf16.mxu0 0
      %4778 = vmatpush2.bf16.msra.mxu0 0
      %4779 = vmatprep.subr.bf16.mxu0 0
      %4780 = vmatpush2.bf16.msra.mxu0 0
      %4781 = vmatprep.subr.bf16.mxu0 0
      %4782 = vmatpush2.bf16.msra.mxu0 0
      %4783 = vmatprep.mubr.bf16.mxu0 0
      %4784 = vmatmul.mubr.bf16.gmra.mxu0 %v4725
      %v4785 = vpop.f32.mrf.mxu0
      %v4786 = vadd.f32 0.0, %v4785
      %v4787 = vpop.f32.mrf.mxu0
      %v4788 = vpop.f32.mrf.mxu0
      %v4789 = vadd.f32 0.0, %v4788
      %v4790 = vpop.f32.mrf.mxu0
      %4791 = vmatprep.mubr.bf16.mxu0 0
      %4792 = vmatmul.mubr.bf16.gmra.mxu0 %v4728
      %v4793 = vpop.f32.mrf.mxu0
      %v4794 = vadd.f32 0.0, %v4793
      %v4795 = vpop.f32.mrf.mxu0
      %v4796 = vpop.f32.mrf.mxu0
      %v4797 = vadd.f32 0.0, %v4796
      %v4798 = vpop.f32.mrf.mxu0
      %4799 = vmatprep.mubr.bf16.mxu0 0
      %4800 = vmatmul.mubr.bf16.gmra.mxu0 %v4731
      %v4801 = vpop.f32.mrf.mxu0
      %v4802 = vadd.f32 0.0, %v4801
      %v4803 = vpop.f32.mrf.mxu0
      %v4804 = vpop.f32.mrf.mxu0
      %v4805 = vadd.f32 0.0, %v4804
      %v4806 = vpop.f32.mrf.mxu0
      %4807 = vmatprep.mubr.bf16.mxu0 0
      %4808 = vmatmul.mubr.bf16.gmra.mxu0 %v4734
      %v4809 = vpop.f32.mrf.mxu0
      %v4810 = vadd.f32 0.0, %v4809
      %v4811 = vpop.f32.mrf.mxu0
      %v4812 = vpop.f32.mrf.mxu0
      %v4813 = vadd.f32 0.0, %v4812
      %v4814 = vpop.f32.mrf.mxu0
      %4815 = vmatprep.mubr.bf16.mxu0 0
      %4816 = vmatmul.mubr.bf16.gmra.mxu0 %v4737
      %v4817 = vpop.f32.mrf.mxu0
      %v4818 = vadd.f32 0.0, %v4817
      %v4819 = vpop.f32.mrf.mxu0
      %v4820 = vpop.f32.mrf.mxu0
      %v4821 = vadd.f32 0.0, %v4820
      %v4822 = vpop.f32.mrf.mxu0
      %4823 = vmatprep.mubr.bf16.mxu0 0
      %4824 = vmatmul.mubr.bf16.gmra.mxu0 %v4740
      %v4825 = vpop.f32.mrf.mxu0
      %v4826 = vadd.f32 0.0, %v4825
      %v4827 = vpop.f32.mrf.mxu0
      %v4828 = vpop.f32.mrf.mxu0
      %v4829 = vadd.f32 0.0, %v4828
      %v4830 = vpop.f32.mrf.mxu0
      %4831 = vmatprep.mubr.bf16.mxu0 0
      %4832 = vmatmul.mubr.bf16.gmra.mxu0 %v4743
      %v4833 = vpop.f32.mrf.mxu0
      %v4834 = vadd.f32 0.0, %v4833
      %v4835 = vpop.f32.mrf.mxu0
      %v4836 = vpop.f32.mrf.mxu0
      %v4837 = vadd.f32 0.0, %v4836
      %v4838 = vpop.f32.mrf.mxu0
      %4839 = vmatprep.mubr.bf16.mxu0 0
      %4840 = vmatmul.mubr.bf16.gmra.mxu0 %v4746
      %v4841 = vpop.f32.mrf.mxu0
      %v4842 = vadd.f32 0.0, %v4841
      %v4843 = vpop.f32.mrf.mxu0
      %v4844 = vpop.f32.mrf.mxu0
      %v4845 = vadd.f32 0.0, %v4844
      %v4846 = vpop.f32.mrf.mxu0
      %4847 = vdwg.mxu0
      %v4848 = vadd.f32 %v4466, %v4786
      %v4849 = vadd.f32 %v4467, %v4789
      %v4850 = vadd.f32 %v4468, %v4794
      %v4851 = vadd.f32 %v4469, %v4797
      %v4852 = vadd.f32 %v4470, %v4802
      %v4853 = vadd.f32 %v4471, %v4805
      %v4854 = vadd.f32 %v4472, %v4810
      %v4855 = vadd.f32 %v4473, %v4813
      %v4856 = vadd.f32 %v4474, %v4818
      %v4857 = vadd.f32 %v4475, %v4821
      %v4858 = vadd.f32 %v4476, %v4826
      %v4859 = vadd.f32 %v4477, %v4829
      %v4860 = vadd.f32 %v4478, %v4834
      %v4861 = vadd.f32 %v4479, %v4837
      %v4862 = vadd.f32 %v4480, %v4842
      %v4863 = vadd.f32 %v4481, %v4845
      %v4864 = vld [vmem:[%s4283] sm:$0xe]
      %v4865 = vld [vmem:[%s4283 + $0xc] sm:$0xe]
      %v4866 = vld [vmem:[%s4283 + $0x18] sm:$0xe]
      %v4867 = vld [vmem:[%s4283 + $0x24] sm:$0xe]
      %v4868 = vld [vmem:[%s4283 + $0x30] sm:$0xe]
      %v4869 = vld [vmem:[%s4283 + $0x3c] sm:$0xe]
      %v4870 = vld [vmem:[%s4283 + $0x48] sm:$0xe]
      %v4871 = vld [vmem:[%s4283 + $0x54] sm:$0xe]
      %v4896 = vrot.slane %v4864, 5
      %v4897 = vrot.slane %v4896, 4
      %v4898 = vrot.slane %v4483, 5
      %v4899 = vsel %vm3225, %v4897, %v4898
      %v4900 = vrot.slane %v4898, 4
      %v4901 = vrot.slane %v4484, 5
      %v4902 = vsel %vm3225, %v4900, %v4901
      %v4903 = vrot.slane %v4865, 5
      %v4904 = vrot.slane %v4903, 4
      %v4905 = vrot.slane %v4486, 5
      %v4906 = vsel %vm3225, %v4904, %v4905
      %v4907 = vrot.slane %v4905, 4
      %v4908 = vrot.slane %v4487, 5
      %v4909 = vsel %vm3225, %v4907, %v4908
      %v4910 = vrot.slane %v4866, 5
      %v4911 = vrot.slane %v4910, 4
      %v4912 = vrot.slane %v4489, 5
      %v4913 = vsel %vm3225, %v4911, %v4912
      %v4914 = vrot.slane %v4912, 4
      %v4915 = vrot.slane %v4490, 5
      %v4916 = vsel %vm3225, %v4914, %v4915
      %v4917 = vrot.slane %v4867, 5
      %v4918 = vrot.slane %v4917, 4
      %v4919 = vrot.slane %v4492, 5
      %v4920 = vsel %vm3225, %v4918, %v4919
      %v4921 = vrot.slane %v4919, 4
      %v4922 = vrot.slane %v4493, 5
      %v4923 = vsel %vm3225, %v4921, %v4922
      %v4924 = vrot.slane %v4868, 5
      %v4925 = vrot.slane %v4924, 4
      %v4926 = vrot.slane %v4495, 5
      %v4927 = vsel %vm3225, %v4925, %v4926
      %v4928 = vrot.slane %v4926, 4
      %v4929 = vrot.slane %v4496, 5
      %v4930 = vsel %vm3225, %v4928, %v4929
      %v4931 = vrot.slane %v4869, 5
      %v4932 = vrot.slane %v4931, 4
      %v4933 = vrot.slane %v4498, 5
      %v4934 = vsel %vm3225, %v4932, %v4933
      %v4935 = vrot.slane %v4933, 4
      %v4936 = vrot.slane %v4499, 5
      %v4937 = vsel %vm3225, %v4935, %v4936
      %v4938 = vrot.slane %v4870, 5
      %v4939 = vrot.slane %v4938, 4
      %v4940 = vrot.slane %v4501, 5
      %v4941 = vsel %vm3225, %v4939, %v4940
      %v4942 = vrot.slane %v4940, 4
      %v4943 = vrot.slane %v4502, 5
      %v4944 = vsel %vm3225, %v4942, %v4943
      %v4945 = vrot.slane %v4871, 5
      %v4946 = vrot.slane %v4945, 4
      %v4947 = vrot.slane %v4504, 5
      %v4948 = vsel %vm3225, %v4946, %v4947
      %v4949 = vrot.slane %v4947, 4
      %v4950 = vrot.slane %v4505, 5
      %v4951 = vsel %vm3225, %v4949, %v4950
      %s4952 = scalar_lea.vmem %s539, 32
      %v4953 = vld [vmem:[%s4952] sm:$0xf]
      %v4954 = vunpack.c.l.b16 %v4899
      %v4955 = vunpack.c.l.b16 %v4902
      %v4956 = vunpack.c.l.b16 %v4906
      %v4957 = vunpack.c.l.b16 %v4909
      %v4958 = vunpack.c.l.b16 %v4913
      %v4959 = vunpack.c.l.b16 %v4916
      %v4960 = vunpack.c.l.b16 %v4920
      %v4961 = vunpack.c.l.b16 %v4923
      %v4962 = vunpack.c.l.b16 %v4927
      %v4963 = vunpack.c.l.b16 %v4930
      %v4964 = vunpack.c.l.b16 %v4934
      %v4965 = vunpack.c.l.b16 %v4937
      %v4966 = vunpack.c.l.b16 %v4941
      %v4967 = vunpack.c.l.b16 %v4944
      %v4968 = vunpack.c.l.b16 %v4948
      %v4969 = vunpack.c.l.b16 %v4951
      %v4970 = vpack.c.b16 %v4955, %v4954
      %v4971 = vpack.c.b16 %v4957, %v4956
      %v4972 = vpack.c.b16 %v4959, %v4958
      %v4973 = vpack.c.b16 %v4961, %v4960
      %v4974 = vpack.c.b16 %v4963, %v4962
      %v4975 = vpack.c.b16 %v4965, %v4964
      %v4976 = vpack.c.b16 %v4967, %v4966
      %v4977 = vpack.c.b16 %v4969, %v4968
      %v4979 = vsel %vm2909, %v4970, 0
      %v4982 = vsel %vm2909, %v4971, 0
      %v4985 = vsel %vm2909, %v4972, 0
      %v4988 = vsel %vm2909, %v4973, 0
      %v4991 = vsel %vm2909, %v4974, 0
      %v4994 = vsel %vm2909, %v4975, 0
      %v4997 = vsel %vm2909, %v4976, 0
      %v5000 = vsel %vm2909, %v4977, 0
      %v5003 = vsel %vm2934, %v4953, 0
      %5005 = vmatprep.subr.bf16.mxu0 0
      %5006 = vmatpush1.bf16.msra.mxu0 0
      %5007 = vmatprep.subr.bf16.mxu0 0
      %5008 = vmatpush1.bf16.msra.mxu0 0
      %5009 = vmatprep.subr.bf16.mxu0 0
      %5010 = vmatpush1.bf16.msra.mxu0 0
      %5011 = vmatprep.subr.bf16.mxu0 0
      %5012 = vmatpush1.bf16.msra.mxu0 0
      %5013 = vmatprep.subr.bf16.mxu0 0
      %5014 = vmatpush1.bf16.msra.mxu0 0
      %5015 = vmatprep.subr.bf16.mxu0 0
      %5016 = vmatpush1.bf16.msra.mxu0 0
      %5017 = vmatprep.subr.bf16.mxu0 0
      %5018 = vmatpush1.bf16.msra.mxu0 0
      %5019 = vmatprep.subr.bf16.mxu0 0
      %5020 = vmatpush1.bf16.msra.mxu0 %v5003
      %5021 = vmatprep.subr.bf16.mxu0 0
      %5022 = vmatpush2.bf16.msra.mxu0 0
      %5023 = vmatprep.subr.bf16.mxu0 0
      %5024 = vmatpush2.bf16.msra.mxu0 0
      %5025 = vmatprep.subr.bf16.mxu0 0
      %5026 = vmatpush2.bf16.msra.mxu0 0
      %5027 = vmatprep.subr.bf16.mxu0 0
      %5028 = vmatpush2.bf16.msra.mxu0 0
      %5029 = vmatprep.subr.bf16.mxu0 0
      %5030 = vmatpush2.bf16.msra.mxu0 0
      %5031 = vmatprep.subr.bf16.mxu0 0
      %5032 = vmatpush2.bf16.msra.mxu0 0
      %5033 = vmatprep.subr.bf16.mxu0 0
      %5034 = vmatpush2.bf16.msra.mxu0 0
      %5035 = vmatprep.subr.bf16.mxu0 0
      %5036 = vmatpush2.bf16.msra.mxu0 0
      %5037 = vmatprep.mubr.bf16.mxu0 0
      %5038 = vmatmul.mubr.bf16.gmra.mxu0 %v4979
      %v5039 = vpop.f32.mrf.mxu0
      %v5040 = vadd.f32 0.0, %v5039
      %v5041 = vpop.f32.mrf.mxu0
      %v5042 = vpop.f32.mrf.mxu0
      %v5043 = vadd.f32 0.0, %v5042
      %v5044 = vpop.f32.mrf.mxu0
      %5045 = vmatprep.mubr.bf16.mxu0 0
      %5046 = vmatmul.mubr.bf16.gmra.mxu0 %v4982
      %v5047 = vpop.f32.mrf.mxu0
      %v5048 = vadd.f32 0.0, %v5047
      %v5049 = vpop.f32.mrf.mxu0
      %v5050 = vpop.f32.mrf.mxu0
      %v5051 = vadd.f32 0.0, %v5050
      %v5052 = vpop.f32.mrf.mxu0
      %5053 = vmatprep.mubr.bf16.mxu0 0
      %5054 = vmatmul.mubr.bf16.gmra.mxu0 %v4985
      %v5055 = vpop.f32.mrf.mxu0
      %v5056 = vadd.f32 0.0, %v5055
      %v5057 = vpop.f32.mrf.mxu0
      %v5058 = vpop.f32.mrf.mxu0
      %v5059 = vadd.f32 0.0, %v5058
      %v5060 = vpop.f32.mrf.mxu0
      %5061 = vmatprep.mubr.bf16.mxu0 0
      %5062 = vmatmul.mubr.bf16.gmra.mxu0 %v4988
      %v5063 = vpop.f32.mrf.mxu0
      %v5064 = vadd.f32 0.0, %v5063
      %v5065 = vpop.f32.mrf.mxu0
      %v5066 = vpop.f32.mrf.mxu0
      %v5067 = vadd.f32 0.0, %v5066
      %v5068 = vpop.f32.mrf.mxu0
      %5069 = vmatprep.mubr.bf16.mxu0 0
      %5070 = vmatmul.mubr.bf16.gmra.mxu0 %v4991
      %v5071 = vpop.f32.mrf.mxu0
      %v5072 = vadd.f32 0.0, %v5071
      %v5073 = vpop.f32.mrf.mxu0
      %v5074 = vpop.f32.mrf.mxu0
      %v5075 = vadd.f32 0.0, %v5074
      %v5076 = vpop.f32.mrf.mxu0
      %5077 = vmatprep.mubr.bf16.mxu0 0
      %5078 = vmatmul.mubr.bf16.gmra.mxu0 %v4994
      %v5079 = vpop.f32.mrf.mxu0
      %v5080 = vadd.f32 0.0, %v5079
      %v5081 = vpop.f32.mrf.mxu0
      %v5082 = vpop.f32.mrf.mxu0
      %v5083 = vadd.f32 0.0, %v5082
      %v5084 = vpop.f32.mrf.mxu0
      %5085 = vmatprep.mubr.bf16.mxu0 0
      %5086 = vmatmul.mubr.bf16.gmra.mxu0 %v4997
      %v5087 = vpop.f32.mrf.mxu0
      %v5088 = vadd.f32 0.0, %v5087
      %v5089 = vpop.f32.mrf.mxu0
      %v5090 = vpop.f32.mrf.mxu0
      %v5091 = vadd.f32 0.0, %v5090
      %v5092 = vpop.f32.mrf.mxu0
      %5093 = vmatprep.mubr.bf16.mxu0 0
      %5094 = vmatmul.mubr.bf16.gmra.mxu0 %v5000
      %v5095 = vpop.f32.mrf.mxu0
      %v5096 = vadd.f32 0.0, %v5095
      %v5097 = vpop.f32.mrf.mxu0
      %v5098 = vpop.f32.mrf.mxu0
      %v5099 = vadd.f32 0.0, %v5098
      %v5100 = vpop.f32.mrf.mxu0
      %5101 = vdwg.mxu0
      %v5102 = vadd.f32 %v4848, %v5040
      %v5103 = vadd.f32 %v4849, %v5043
      %v5104 = vadd.f32 %v4850, %v5048
      %v5105 = vadd.f32 %v4851, %v5051
      %v5106 = vadd.f32 %v4852, %v5056
      %v5107 = vadd.f32 %v4853, %v5059
      %v5108 = vadd.f32 %v4854, %v5064
      %v5109 = vadd.f32 %v4855, %v5067
      %v5110 = vadd.f32 %v4856, %v5072
      %v5111 = vadd.f32 %v4857, %v5075
      %v5112 = vadd.f32 %v4858, %v5080
      %v5113 = vadd.f32 %v4859, %v5083
      %v5114 = vadd.f32 %v4860, %v5088
      %v5115 = vadd.f32 %v4861, %v5091
      %v5116 = vadd.f32 %v4862, %v5096
      %v5117 = vadd.f32 %v4863, %v5099
      %v5118 = vld [vmem:[%s542] sm:$0x1]
      %v5120 = vlaneseq
      %v5121 = vshrl.u32 %v5120, 7
      %v5122 = vsub.s32 0, %v5121
      %v5123 = vrot.slane %v5118, %v5122
      %v5125 = vmul.f32 %v5102, %v5123
      %v5126 = vmul.f32 %v5103, %v5123
      %v5127 = vmul.f32 %v5104, %v5123
      %v5128 = vmul.f32 %v5105, %v5123
      %v5129 = vmul.f32 %v5106, %v5123
      %v5130 = vmul.f32 %v5107, %v5123
      %v5131 = vmul.f32 %v5108, %v5123
      %v5132 = vmul.f32 %v5109, %v5123
      %v5133 = vmul.f32 %v5110, %v5123
      %v5134 = vmul.f32 %v5111, %v5123
      %v5135 = vmul.f32 %v5112, %v5123
      %v5136 = vmul.f32 %v5113, %v5123
      %v5137 = vmul.f32 %v5114, %v5123
      %v5138 = vmul.f32 %v5115, %v5123
      %v5139 = vmul.f32 %v5116, %v5123
      %v5140 = vmul.f32 %v5117, %v5123
      %v5141 = vld [vmem:[%s545] sm:$0x1]
      %v5143 = vlaneseq
      %v5144 = vshrl.u32 %v5143, 7
      %v5145 = vsub.s32 0, %v5144
      %v5146 = vrot.slane %v5141, %v5145
      %v5148 = vadd.f32 %v5125, %v5146
      %v5149 = vadd.f32 %v5126, %v5146
      %v5150 = vadd.f32 %v5127, %v5146
      %v5151 = vadd.f32 %v5128, %v5146
      %v5152 = vadd.f32 %v5129, %v5146
      %v5153 = vadd.f32 %v5130, %v5146
      %v5154 = vadd.f32 %v5131, %v5146
      %v5155 = vadd.f32 %v5132, %v5146
      %v5156 = vadd.f32 %v5133, %v5146
      %v5157 = vadd.f32 %v5134, %v5146
      %v5158 = vadd.f32 %v5135, %v5146
      %v5159 = vadd.f32 %v5136, %v5146
      %v5160 = vadd.f32 %v5137, %v5146
      %v5161 = vadd.f32 %v5138, %v5146
      %v5162 = vadd.f32 %v5139, %v5146
      %v5163 = vadd.f32 %v5140, %v5146
      %v5164 = vmax.f32 %v5148, 0.0
      %v5165 = vmax.f32 %v5149, 0.0
      %v5166 = vmax.f32 %v5150, 0.0
      %v5167 = vmax.f32 %v5151, 0.0
      %v5168 = vmax.f32 %v5152, 0.0
      %v5169 = vmax.f32 %v5153, 0.0
      %v5170 = vmax.f32 %v5154, 0.0
      %v5171 = vmax.f32 %v5155, 0.0
      %v5172 = vmax.f32 %v5156, 0.0
      %v5173 = vmax.f32 %v5157, 0.0
      %v5174 = vmax.f32 %v5158, 0.0
      %v5175 = vmax.f32 %v5159, 0.0
      %v5176 = vmax.f32 %v5160, 0.0
      %v5177 = vmax.f32 %v5161, 0.0
      %v5178 = vmax.f32 %v5162, 0.0
      %v5179 = vmax.f32 %v5163, 0.0
      %v5180 = vpack.c.bf16 %v5165, %v5164
      %v5181 = vpack.c.bf16 %v5167, %v5166
      %v5182 = vpack.c.bf16 %v5169, %v5168
      %v5183 = vpack.c.bf16 %v5171, %v5170
      %v5184 = vpack.c.bf16 %v5173, %v5172
      %v5185 = vpack.c.bf16 %v5175, %v5174
      %v5186 = vpack.c.bf16 %v5177, %v5176
      %v5187 = vpack.c.bf16 %v5179, %v5178
      %v5196 = vunpack.c.l.b16 %v5180
      %v5197 = vunpack.c.h.b16 %v5180
      %v5198 = vunpack.c.l.b16 %v5181
      %v5199 = vunpack.c.h.b16 %v5181
      %v5200 = vunpack.c.l.b16 %v5182
      %v5201 = vunpack.c.h.b16 %v5182
      %v5202 = vunpack.c.l.b16 %v5183
      %v5203 = vunpack.c.h.b16 %v5183
      %v5204 = vunpack.c.l.b16 %v5184
      %v5205 = vunpack.c.h.b16 %v5184
      %v5206 = vunpack.c.l.b16 %v5185
      %v5207 = vunpack.c.h.b16 %v5185
      %v5208 = vunpack.c.l.b16 %v5186
      %v5209 = vunpack.c.h.b16 %v5186
      %v5210 = vunpack.c.l.b16 %v5187
      %v5211 = vunpack.c.h.b16 %v5187
      %v5212 = vpack.c.b16 %v5196, %v5196
      %v5213 = vpack.c.b16 %v5197, %v5197
      %v5214 = vpack.c.b16 %v5198, %v5198
      %v5215 = vpack.c.b16 %v5199, %v5199
      %v5216 = vpack.c.b16 %v5200, %v5200
      %v5217 = vpack.c.b16 %v5201, %v5201
      %v5218 = vpack.c.b16 %v5202, %v5202
      %v5219 = vpack.c.b16 %v5203, %v5203
      %v5220 = vpack.c.b16 %v5204, %v5204
      %v5221 = vpack.c.b16 %v5205, %v5205
      %v5222 = vpack.c.b16 %v5206, %v5206
      %v5223 = vpack.c.b16 %v5207, %v5207
      %v5224 = vpack.c.b16 %v5208, %v5208
      %v5225 = vpack.c.b16 %v5209, %v5209
      %v5226 = vpack.c.b16 %v5210, %v5210
      %v5227 = vpack.c.b16 %v5211, %v5211
      %vm5244 = vcmask 60416
      %5245 = vst.msk [vmem:[%s557] sm:$0xf] %vm5244, %v5212
      %5246 = vst.msk [vmem:[%s557 + $0x4] sm:$0xf] %vm5244, %v5213
      %5247 = vst.msk [vmem:[%s557 + $0x8] sm:$0xf] %vm5244, %v5214
      %5248 = vst.msk [vmem:[%s557 + $0xc] sm:$0xf] %vm5244, %v5215
      %5249 = vst.msk [vmem:[%s557 + $0x10] sm:$0xf] %vm5244, %v5216
      %5250 = vst.msk [vmem:[%s557 + $0x14] sm:$0xf] %vm5244, %v5217
      %5251 = vst.msk [vmem:[%s557 + $0x18] sm:$0xf] %vm5244, %v5218
      %5252 = vst.msk [vmem:[%s557 + $0x1c] sm:$0xf] %vm5244, %v5219
      %5253 = vst.msk [vmem:[%s557 + $0x20] sm:$0xf] %vm5244, %v5220
      %5254 = vst.msk [vmem:[%s557 + $0x24] sm:$0xf] %vm5244, %v5221
      %5255 = vst.msk [vmem:[%s557 + $0x28] sm:$0xf] %vm5244, %v5222
      %5256 = vst.msk [vmem:[%s557 + $0x2c] sm:$0xf] %vm5244, %v5223
      %5257 = vst.msk [vmem:[%s557 + $0x30] sm:$0xf] %vm5244, %v5224
      %5258 = vst.msk [vmem:[%s557 + $0x34] sm:$0xf] %vm5244, %v5225
      %5259 = vst.msk [vmem:[%s557 + $0x38] sm:$0xf] %vm5244, %v5226
      %5260 = vst.msk [vmem:[%s557 + $0x3c] sm:$0xf] %vm5244, %v5227
      %p5261 = scmp.lt.s32.totalorder %s25, 1
      %s5262 = scalar_select %p5261, %s25, 1
      %p5263 = scmp.lt.s32.totalorder %s26, 1
      %s5264 = scalar_select %p5263, %s26, 1
      %p5265 = scmp.lt.s32.totalorder %s27, 0
      %s5266 = scalar_select %p5265, %s27, 0
      %s5267 = smul.addr %s5264, 16
      %s5268 = sadd.s32 %s5266, %s5267
      %s5269 = smul.addr %s5262, 32
      %s5270 = sadd.s32 %s5268, %s5269
      %s5271 = smul.addr %s5270, 4
      %s5272 = scalar_lea.vmem %s9, %s5271
      // Predicated region
      $region61: #{conv_block_forward_nhwc.1} parent=55 // pred_check
        %p5273 = pneg %p302
      $region62: #{conv_block_forward_nhwc.1} parent=55 // pred_check_branch
        %5275 = sbr.rel (%p5273) target = $region64
      $region63: #{conv_block_forward_nhwc.1} parent=55 // pred_region
        _
      $region64: #{conv_block_forward_nhwc.1} parent=55 // pred_fallthru
        _
    $region56: #{conv_block_forward_nhwc.1} parent=5 // pred_fallthru
      _
    %p5276 = scmp.le.s32.totalorder 2, %s15
    // Predicated region
    $region65: #{conv_block_forward_nhwc.1} parent=5 // pred_check
      %p5277 = pneg %p5276
    $region66: #{conv_block_forward_nhwc.1} parent=5 // pred_check_branch
      %5279 = sbr.rel (%p5277) target = $region68
    $region67: #{conv_block_forward_nhwc.1} parent=5 // pred_region
      %s5280 = ssub.s32 %s15, 2
      // Predicated region
      $region69: #{conv_block_forward_nhwc.1} parent=67 // pred_check
        %p5281 = pneg %p308
      $region70: #{conv_block_forward_nhwc.1} parent=67 // pred_check_branch
        %5283 = sbr.rel (%p5281) target = $region72
      $region71: #{conv_block_forward_nhwc.1} parent=67 // pred_region
        %p5284 = scmp.lt.s32.totalorder %s28, 1
        %s5285 = scalar_select %p5284, %s28, 1
        %p5286 = scmp.lt.s32.totalorder %s29, 1
        %s5287 = scalar_select %p5286, %s29, 1
        %p5288 = scmp.lt.s32.totalorder %s30, 0
        %s5289 = scalar_select %p5288, %s30, 0
        %s5290 = smul.addr %s5287, 16
        %s5291 = sadd.s32 %s5289, %s5290
        %s5292 = smul.addr %s5285, 32
        %s5293 = sadd.s32 %s5291, %s5292
        %s5294 = smul.addr %s5293, 4
        %s5295 = scalar_lea.vmem %s9, %s5294
      $region72: #{conv_block_forward_nhwc.1} parent=67 // pred_fallthru
        _
    $region68: #{conv_block_forward_nhwc.1} parent=5 // pred_fallthru
      _
  $region6: #{conv_block_forward_nhwc.1} parent=0 // loop_footer
    %s19 = sadd.s32 1, %s15
  $region7: #{conv_block_forward_nhwc.1} parent=0 // loop_footer_branch
    %14 = sbr.rel target = $region3
  $region8: #{conv_block_forward_nhwc.1} parent=0 // loop_exit
    _

</llo_original>
